<compile_context>
chip_gen: v7x
topology: tpu7x:2x2x1
jax: 0.10.0
libtpu: 0.0.40
codegen_flags: <defaults>
</compile_context>

<pallas_src>
import functools
import math

import jax
import jax.numpy as jnp
from jax.experimental import pallas as pl
from jax.experimental.pallas import tpu as pltpu

# ---- small BERT-like config (bert-base scaled down) ----
VOCAB = 100
HIDDEN = 32
LAYERS = 2
HEADS = 2
HEAD_DIM = HIDDEN // HEADS
FFN = 64
MAX_POS = 16
NUM_LABELS = 3
LN_EPS = 1e-12
OUT_PAD = 128       # lane-dense padded width of the classifier output slab


# ---------------- fused Pallas kernel (one grid step = one sequence) ----------------

def _bert_fused_kernel(
    x_ref, mask_ref,
    emb_g_ref, emb_b_ref,
    wqkv_ref, bqkv_ref, wo_ref, bo_ref,
    ln1_g_ref, ln1_b_ref,
    w1_ref, b1_ref, w2_ref, b2_ref,
    ln2_g_ref, ln2_b_ref,
    cls_w_ref, cls_b_ref,
    out_ref,
):
    x = x_ref[0]                     # (S, H)  summed embeddings for this sequence
    mask_b = mask_ref[0]             # (1, S)  additive attention-mask bias

    def ln(v, g, b):
        mu = jnp.mean(v, axis=-1, keepdims=True)
        var = jnp.mean(jnp.square(v - mu), axis=-1, keepdims=True)
        return (v - mu) * jax.lax.rsqrt(var + LN_EPS) * g + b

    # Embedding LayerNorm.
    x = ln(x, emb_g_ref[...], emb_b_ref[...])

    # Encoder layers (static unroll; everything stays VMEM-resident).
    for l in range(LAYERS):
        # Fused Q/K/V projection: one (S,H) @ (H,3H) MXU pass.
        qkv = jnp.dot(x, wqkv_ref[l], preferred_element_type=jnp.float32) + bqkv_ref[l]
        q = qkv[:, :HIDDEN]          # 1/sqrt(head_dim) already folded into the Q weights
        k = qkv[:, HIDDEN:2 * HIDDEN]
        v = qkv[:, 2 * HIDDEN:]

        wo_l = wo_ref[l]             # (H, H)
        attn_out = bo_ref[l]         # (1, H) bias, broadcasts over S
        for h in range(HEADS):       # static per-head loop; heads merged via sum-of-dots
            sl = slice(h * HEAD_DIM, (h + 1) * HEAD_DIM)
            qh, kh, vh = q[:, sl], k[:, sl], v[:, sl]
            s = jnp.dot(qh, kh.T, preferred_element_type=jnp.float32) + mask_b   # (S, S)
            s = s - jnp.max(s, axis=-1, keepdims=True)
            p = jnp.exp(s)
            p = p / jnp.sum(p, axis=-1, keepdims=True)
            ctx_h = jnp.dot(p, vh, preferred_element_type=jnp.float32)           # (S, Dh)
            # concat(ctx_h) @ wo  ==  sum_h ctx_h @ wo[h*Dh:(h+1)*Dh, :]
            attn_out = attn_out + jnp.dot(ctx_h, wo_l[sl, :],
                                          preferred_element_type=jnp.float32)

        x = ln(x + attn_out, ln1_g_ref[l], ln1_b_ref[l])      # post-LN residual

        hdn = jnp.dot(x, w1_ref[l], preferred_element_type=jnp.float32) + b1_ref[l]
        # TODO(synk): HF BERT uses exact erf-GELU; tanh approximation kept for TPU-safe lowering.
        hdn = jax.nn.gelu(hdn, approximate=True)
        ffn = jnp.dot(hdn, w2_ref[l], preferred_element_type=jnp.float32) + b2_ref[l]
        x = ln(x + ffn, ln2_g_ref[l], ln2_b_ref[l])

    # Classifier head on the CLS token, written as a lane-dense padded slab.
    cls = x[0:1, :]                                            # (1, H)
    logits = jnp.dot(cls, cls_w_ref[...],
                     preferred_element_type=jnp.float32) + cls_b_ref[...]         # (1, 128)
    out_ref[0] = jnp.broadcast_to(logits, out_ref.shape[1:]).astype(out_ref.dtype)


# ---------------- parameter init (deterministic, synthetic, pre-stacked) ----------------

def init_params(key):
    keys = list(jax.random.split(key, 12))
    it = iter(keys)

    def nrm(shape, scale=0.02):
        return scale * jax.random.normal(next(it), shape, dtype=jnp.float32)

    attn_scale = 1.0 / math.sqrt(HEAD_DIM)

    wq = nrm((LAYERS, HIDDEN, HIDDEN))
    wk = nrm((LAYERS, HIDDEN, HIDDEN))
    wv = nrm((LAYERS, HIDDEN, HIDDEN))
    # Fuse Q/K/V into one (H, 3H) weight; fold 1/sqrt(Dh) into the Q projection.
    wqkv = jnp.concatenate([wq * attn_scale, wk, wv], axis=-1)        # (L, H, 3H)
    bqkv = jnp.zeros((LAYERS, 1, 3 * HIDDEN), jnp.float32)            # (scale fold: zero bias => no-op)

    cls_w = nrm((HIDDEN, NUM_LABELS))
    cls_b = jnp.zeros((NUM_LABELS,), jnp.float32)
    # Pad the classifier head to a 128-lane-dense output; sliced back in JAX.
    cls_w_pad = jnp.zeros((HIDDEN, OUT_PAD), jnp.float32).at[:, :NUM_LABELS].set(cls_w)
    cls_b_pad = jnp.zeros((1, OUT_PAD), jnp.float32).at[0, :NUM_LABELS].set(cls_b)

    params = dict(
        word_emb=nrm((VOCAB, HIDDEN)),
        pos_emb=nrm((MAX_POS, HIDDEN)),
        type_emb=nrm((2, HIDDEN)),
        emb_ln_g=jnp.ones((1, HIDDEN), jnp.float32),
        emb_ln_b=jnp.zeros((1, HIDDEN), jnp.float32),
        wqkv=wqkv, bqkv=bqkv,
        wo=nrm((LAYERS, HIDDEN, HIDDEN)),
        bo=jnp.zeros((LAYERS, 1, HIDDEN), jnp.float32),
        ln1_g=jnp.ones((LAYERS, 1, HIDDEN), jnp.float32),
        ln1_b=jnp.zeros((LAYERS, 1, HIDDEN), jnp.float32),
        w1=nrm((LAYERS, HIDDEN, FFN)),
        b1=jnp.zeros((LAYERS, 1, FFN), jnp.float32),
        w2=nrm((LAYERS, FFN, HIDDEN)),
        b2=jnp.zeros((LAYERS, 1, HIDDEN), jnp.float32),
        ln2_g=jnp.ones((LAYERS, 1, HIDDEN), jnp.float32),
        ln2_b=jnp.zeros((LAYERS, 1, HIDDEN), jnp.float32),
        cls_w_pad=cls_w_pad,
        cls_b_pad=cls_b_pad,
    )
    return params


# ---------------- forward pass ----------------

def bert_classifier_forward(params, input_ids, attention_mask):
    B, S = input_ids.shape

    # Embeddings: word + position + token-type(0).  Gather stays in plain JAX glue.
    pos_ids = jnp.arange(S)
    x = (jnp.take(params["word_emb"], input_ids, axis=0)
         + params["pos_emb"][pos_ids][None, :, :]
         + params["type_emb"][0][None, None, :])                       # (B, S, H)

    # HF-style extended attention mask: (1 - mask) * -10000, built once.
    mask_bias = ((1.0 - attention_mask.astype(jnp.float32)) * -10000.0)[:, None, :]  # (B, 1, S)

    seq_map = lambda i: (i, 0, 0)
    w3_map = lambda i: (0, 0, 0)
    w2_map = lambda i: (0, 0)

    out = pl.pallas_call(
        _bert_fused_kernel,
        grid=(B,),
        in_specs=[
            pl.BlockSpec((1, S, HIDDEN), seq_map),                 # x (per sequence)
            pl.BlockSpec((1, 1, S), seq_map),                      # mask bias
            pl.BlockSpec((1, HIDDEN), w2_map),                     # emb LN gamma
            pl.BlockSpec((1, HIDDEN), w2_map),                     # emb LN beta
            pl.BlockSpec((LAYERS, HIDDEN, 3 * HIDDEN), w3_map),    # fused QKV weight
            pl.BlockSpec((LAYERS, 1, 3 * HIDDEN), w3_map),         # fused QKV bias
            pl.BlockSpec((LAYERS, HIDDEN, HIDDEN), w3_map),        # attention out weight
            pl.BlockSpec((LAYERS, 1, HIDDEN), w3_map),             # attention out bias
            pl.BlockSpec((LAYERS, 1, HIDDEN), w3_map),             # LN1 gamma
            pl.BlockSpec((LAYERS, 1, HIDDEN), w3_map),             # LN1 beta
            pl.BlockSpec((LAYERS, HIDDEN, FFN), w3_map),           # FFN w1
            pl.BlockSpec((LAYERS, 1, FFN), w3_map),                # FFN b1
            pl.BlockSpec((LAYERS, FFN, HIDDEN), w3_map),           # FFN w2
            pl.BlockSpec((LAYERS, 1, HIDDEN), w3_map),             # FFN b2
            pl.BlockSpec((LAYERS, 1, HIDDEN), w3_map),             # LN2 gamma
            pl.BlockSpec((LAYERS, 1, HIDDEN), w3_map),             # LN2 beta
            pl.BlockSpec((HIDDEN, OUT_PAD), w2_map),               # padded classifier weight
            pl.BlockSpec((1, OUT_PAD), w2_map),                    # padded classifier bias
        ],
        out_specs=pl.BlockSpec((1, S, OUT_PAD), seq_map),
        out_shape=jax.ShapeDtypeStruct((B, S, OUT_PAD), jnp.float32),
        compiler_params=pltpu.CompilerParams(dimension_semantics=("parallel",)),
    )(x, mask_bias,
      params["emb_ln_g"], params["emb_ln_b"],
      params["wqkv"], params["bqkv"], params["wo"], params["bo"],
      params["ln1_g"], params["ln1_b"],
      params["w1"], params["b1"], params["w2"], params["b2"],
      params["ln2_g"], params["ln2_b"],
      params["cls_w_pad"], params["cls_b_pad"])

    # nn.Dropout(0.3): identity at inference.  Slice the lane-padded logits slab.
    return out[:, 0, :NUM_LABELS]                                   # (B, NUM_LABELS)


# ---------------- pure-JAX reference (for a quick numerical sanity check) ----------------

def reference_forward(params, input_ids, attention_mask):
    B, S = input_ids.shape
    hp = jax.lax.Precision.HIGHEST
    x = (jnp.take(params["word_emb"], input_ids, axis=0)
         + params["pos_emb"][:S][None, :, :]
         + params["type_emb"][0][None, None, :])

    def ln(v, g, b):
        mu = jnp.mean(v, axis=-1, keepdims=True)
        var = jnp.mean(jnp.square(v - mu), axis=-1, keepdims=True)
        return (v - mu) * jax.lax.rsqrt(var + LN_EPS) * g + b

    x = ln(x, params["emb_ln_g"][0], params["emb_ln_b"][0])
    mask_bias = (1.0 - attention_mask.astype(jnp.float32)) * -10000.0

    for l in range(LAYERS):
        qkv = jnp.einsum("bsh,hd->bsd", x, params["wqkv"][l], precision=hp) + params["bqkv"][l]
        q = qkv[..., :HIDDEN].reshape(B, S, HEADS, HEAD_DIM)
        k = qkv[..., HIDDEN:2 * HIDDEN].reshape(B, S, HEADS, HEAD_DIM)
        v = qkv[..., 2 * HIDDEN:].reshape(B, S, HEADS, HEAD_DIM)
        s = jnp.einsum("bqhd,bkhd->bhqk", q, k, precision=hp) + mask_bias[:, None, None, :]
        p = jax.nn.softmax(s, axis=-1)
        ctx = jnp.einsum("bhqk,bkhd->bqhd", p, v, precision=hp).reshape(B, S, HIDDEN)
        attn_out = jnp.einsum("bsh,hd->bsd", ctx, params["wo"][l], precision=hp) + params["bo"][l]
        x = ln(x + attn_out, params["ln1_g"][l], params["ln1_b"][l])
        hdn = jax.nn.gelu(
            jnp.einsum("bsh,hf->bsf", x, params["w1"][l], precision=hp) + params["b1"][l],
            approximate=True)
        ffn = jnp.einsum("bsf,fh->bsh", hdn, params["w2"][l], precision=hp) + params["b2"][l]
        x = ln(x + ffn, params["ln2_g"][l], params["ln2_b"][l])

    cls = x[:, 0, :]
    logits = jnp.dot(cls, params["cls_w_pad"], precision=hp) + params["cls_b_pad"][0]
    return logits[:, :NUM_LABELS]


if __name__ == "__main__":
    B, S = 2, 8
    key = jax.random.PRNGKey(0)
    k_ids, k_params = jax.random.split(key)

    input_ids = jax.random.randint(k_ids, (B, S), 0, VOCAB, dtype=jnp.int32)
    attention_mask = jnp.ones((B, S), dtype=jnp.int32).at[1, 6:].set(0)  # second seq padded

    params = init_params(k_params)

    fwd = jax.jit(bert_classifier_forward)
    logits = jax.block_until_ready(fwd(params, input_ids, attention_mask))

    assert logits.shape == (B, NUM_LABELS)
    assert logits.dtype == jnp.float32

    ref = reference_forward(params, input_ids, attention_mask)
    assert jnp.allclose(logits, ref, atol=2e-4, rtol=2e-3), (
        "max abs diff vs reference: %e" % float(jnp.max(jnp.abs(logits - ref))))

    print("KERNEL_OK")
</pallas_src>

<mosaic_0001>
module attributes {stable_mosaic.version = 11 : i64} {
  func.func @_bert_fused_kernel(%arg0: i32, %arg1: memref<1x8x32xf32, #tpu.memory_space<vmem>>, %arg2: memref<1x1x8xf32, #tpu.memory_space<vmem>>, %arg3: memref<1x32xf32, #tpu.memory_space<vmem>>, %arg4: memref<1x32xf32, #tpu.memory_space<vmem>>, %arg5: memref<2x32x96xf32, #tpu.memory_space<vmem>>, %arg6: memref<2x1x96xf32, #tpu.memory_space<vmem>>, %arg7: memref<2x32x32xf32, #tpu.memory_space<vmem>>, %arg8: memref<2x1x32xf32, #tpu.memory_space<vmem>>, %arg9: memref<2x1x32xf32, #tpu.memory_space<vmem>>, %arg10: memref<2x1x32xf32, #tpu.memory_space<vmem>>, %arg11: memref<2x32x64xf32, #tpu.memory_space<vmem>>, %arg12: memref<2x1x64xf32, #tpu.memory_space<vmem>>, %arg13: memref<2x64x32xf32, #tpu.memory_space<vmem>>, %arg14: memref<2x1x32xf32, #tpu.memory_space<vmem>>, %arg15: memref<2x1x32xf32, #tpu.memory_space<vmem>>, %arg16: memref<2x1x32xf32, #tpu.memory_space<vmem>>, %arg17: memref<32x128xf32, #tpu.memory_space<vmem>>, %arg18: memref<1x128xf32, #tpu.memory_space<vmem>>, %arg19: memref<1x8x128xf32, #tpu.memory_space<vmem>>) attributes {dimension_semantics = [#tpu.dimension_semantics<parallel>], iteration_bounds = array<i64: 2>, scalar_prefetch = 0 : i64, scratch_operands = 0 : i64, tpu.core_type = #tpu.core_type<tc>, window_params = [{transform_indices = @transform_0, window_bounds = array<i64: 1, 8, 32>}, {transform_indices = @transform_1, window_bounds = array<i64: 1, 1, 8>}, {pipeline_mode = #tpu.pipeline_mode<synchronous>, transform_indices = @transform_2, window_bounds = array<i64: 1, 32>}, {pipeline_mode = #tpu.pipeline_mode<synchronous>, transform_indices = @transform_3, window_bounds = array<i64: 1, 32>}, {pipeline_mode = #tpu.pipeline_mode<synchronous>, transform_indices = @transform_4, window_bounds = array<i64: 2, 32, 96>}, {pipeline_mode = #tpu.pipeline_mode<synchronous>, transform_indices = @transform_5, window_bounds = array<i64: 2, 1, 96>}, {pipeline_mode = #tpu.pipeline_mode<synchronous>, transform_indices = @transform_6, window_bounds = array<i64: 2, 32, 32>}, {pipeline_mode = #tpu.pipeline_mode<synchronous>, transform_indices = @transform_7, window_bounds = array<i64: 2, 1, 32>}, {pipeline_mode = #tpu.pipeline_mode<synchronous>, transform_indices = @transform_8, window_bounds = array<i64: 2, 1, 32>}, {pipeline_mode = #tpu.pipeline_mode<synchronous>, transform_indices = @transform_9, window_bounds = array<i64: 2, 1, 32>}, {pipeline_mode = #tpu.pipeline_mode<synchronous>, transform_indices = @transform_10, window_bounds = array<i64: 2, 32, 64>}, {pipeline_mode = #tpu.pipeline_mode<synchronous>, transform_indices = @transform_11, window_bounds = array<i64: 2, 1, 64>}, {pipeline_mode = #tpu.pipeline_mode<synchronous>, transform_indices = @transform_12, window_bounds = array<i64: 2, 64, 32>}, {pipeline_mode = #tpu.pipeline_mode<synchronous>, transform_indices = @transform_13, window_bounds = array<i64: 2, 1, 32>}, {pipeline_mode = #tpu.pipeline_mode<synchronous>, transform_indices = @transform_14, window_bounds = array<i64: 2, 1, 32>}, {pipeline_mode = #tpu.pipeline_mode<synchronous>, transform_indices = @transform_15, window_bounds = array<i64: 2, 1, 32>}, {pipeline_mode = #tpu.pipeline_mode<synchronous>, transform_indices = @transform_16, window_bounds = array<i64: 32, 128>}, {pipeline_mode = #tpu.pipeline_mode<synchronous>, transform_indices = @transform_17, window_bounds = array<i64: 1, 128>}, {transform_indices = @transform_18, window_bounds = array<i64: 1, 8, 128>}]} {
    %c0 = arith.constant 0 : index
    %c0_0 = arith.constant 0 : index
    %c0_1 = arith.constant 0 : index
    %0 = vector.load %arg1[%c0, %c0_0, %c0_1] : memref<1x8x32xf32, #tpu.memory_space<vmem>>, vector<1x8x32xf32>
    %1 = vector.shape_cast %0 : vector<1x8x32xf32> to vector<8x32xf32>
    %c0_2 = arith.constant 0 : index
    %c0_3 = arith.constant 0 : index
    %c0_4 = arith.constant 0 : index
    %2 = vector.load %arg2[%c0_2, %c0_3, %c0_4] : memref<1x1x8xf32, #tpu.memory_space<vmem>>, vector<1x1x8xf32>
    %3 = vector.shape_cast %2 : vector<1x1x8xf32> to vector<1x8xf32>
    %c0_5 = arith.constant 0 : index
    %c0_6 = arith.constant 0 : index
    %4 = vector.load %arg3[%c0_5, %c0_6] : memref<1x32xf32, #tpu.memory_space<vmem>>, vector<1x32xf32>
    %c0_7 = arith.constant 0 : index
    %c0_8 = arith.constant 0 : index
    %5 = vector.load %arg4[%c0_7, %c0_8] : memref<1x32xf32, #tpu.memory_space<vmem>>, vector<1x32xf32>
    %cst = arith.constant dense<0.000000e+00> : vector<8xf32>
    %6 = vector.multi_reduction <add>, %1, %cst [1] : vector<8x32xf32> to vector<8xf32>
    %7 = vector.shape_cast %6 : vector<8xf32> to vector<8x1xf32>
    %cst_9 = arith.constant 3.200000e+01 : f32
    %8 = vector.broadcast %cst_9 : f32 to vector<8x1xf32>
    %9 = arith.divf %7, %8 : vector<8x1xf32>
    %10 = vector.broadcast %9 : vector<8x1xf32> to vector<8x32xf32>
    %11 = arith.subf %1, %10 : vector<8x32xf32>
    %12 = arith.mulf %11, %11 : vector<8x32xf32>
    %cst_10 = arith.constant dense<0.000000e+00> : vector<8xf32>
    %13 = vector.multi_reduction <add>, %12, %cst_10 [1] : vector<8x32xf32> to vector<8xf32>
    %14 = vector.shape_cast %13 : vector<8xf32> to vector<8x1xf32>
    %cst_11 = arith.constant 3.200000e+01 : f32
    %15 = vector.broadcast %cst_11 : f32 to vector<8x1xf32>
    %16 = arith.divf %14, %15 : vector<8x1xf32>
    %17 = vector.broadcast %9 : vector<8x1xf32> to vector<8x32xf32>
    %18 = arith.subf %1, %17 : vector<8x32xf32>
    %cst_12 = arith.constant 9.99999996E-13 : f32
    %19 = vector.broadcast %cst_12 : f32 to vector<8x1xf32>
    %20 = arith.addf %16, %19 : vector<8x1xf32>
    %21 = math.rsqrt %20 : vector<8x1xf32>
    %22 = vector.broadcast %21 : vector<8x1xf32> to vector<8x32xf32>
    %23 = arith.mulf %18, %22 : vector<8x32xf32>
    %24 = vector.broadcast %4 : vector<1x32xf32> to vector<8x32xf32>
    %25 = arith.mulf %23, %24 : vector<8x32xf32>
    %26 = vector.broadcast %5 : vector<1x32xf32> to vector<8x32xf32>
    %27 = arith.addf %25, %26 : vector<8x32xf32>
    %c0_13 = arith.constant 0 : index
    %c0_14 = arith.constant 0 : index
    %c0_15 = arith.constant 0 : index
    %28 = vector.load %arg5[%c0_13, %c0_14, %c0_15] : memref<2x32x96xf32, #tpu.memory_space<vmem>>, vector<1x32x96xf32>
    %29 = vector.shape_cast %28 : vector<1x32x96xf32> to vector<32x96xf32>
    %cst_16 = arith.constant dense<0.000000e+00> : vector<8x96xf32>
    %30 = tpu.matmul %27, %29, %cst_16 {dimension_numbers = #tpu.dot_dimension_numbers<[1], [0], [0], [1], [0, 0, 1, 1], [], []>} : vector<8x32xf32>, vector<32x96xf32>, vector<8x96xf32> -> vector<8x96xf32>
    %c0_17 = arith.constant 0 : index
    %c0_18 = arith.constant 0 : index
    %c0_19 = arith.constant 0 : index
    %31 = vector.load %arg6[%c0_17, %c0_18, %c0_19] : memref<2x1x96xf32, #tpu.memory_space<vmem>>, vector<1x1x96xf32>
    %32 = vector.shape_cast %31 : vector<1x1x96xf32> to vector<1x96xf32>
    %33 = vector.broadcast %32 : vector<1x96xf32> to vector<8x96xf32>
    %34 = arith.addf %30, %33 : vector<8x96xf32>
    %35 = vector.extract_strided_slice %34 {offsets = [0, 0], sizes = [8, 32], strides = [1, 1]} : vector<8x96xf32> to vector<8x32xf32>
    %36 = vector.extract_strided_slice %34 {offsets = [0, 32], sizes = [8, 32], strides = [1, 1]} : vector<8x96xf32> to vector<8x32xf32>
    %37 = vector.extract_strided_slice %34 {offsets = [0, 64], sizes = [8, 32], strides = [1, 1]} : vector<8x96xf32> to vector<8x32xf32>
    %c0_20 = arith.constant 0 : index
    %c0_21 = arith.constant 0 : index
    %c0_22 = arith.constant 0 : index
    %38 = vector.load %arg7[%c0_20, %c0_21, %c0_22] : memref<2x32x32xf32, #tpu.memory_space<vmem>>, vector<1x32x32xf32>
    %39 = vector.shape_cast %38 : vector<1x32x32xf32> to vector<32x32xf32>
    %c0_23 = arith.constant 0 : index
    %c0_24 = arith.constant 0 : index
    %c0_25 = arith.constant 0 : index
    %40 = vector.load %arg8[%c0_23, %c0_24, %c0_25] : memref<2x1x32xf32, #tpu.memory_space<vmem>>, vector<1x1x32xf32>
    %41 = vector.shape_cast %40 : vector<1x1x32xf32> to vector<1x32xf32>
    %42 = vector.extract_strided_slice %35 {offsets = [0, 0], sizes = [8, 16], strides = [1, 1]} : vector<8x32xf32> to vector<8x16xf32>
    %43 = vector.extract_strided_slice %36 {offsets = [0, 0], sizes = [8, 16], strides = [1, 1]} : vector<8x32xf32> to vector<8x16xf32>
    %44 = vector.extract_strided_slice %37 {offsets = [0, 0], sizes = [8, 16], strides = [1, 1]} : vector<8x32xf32> to vector<8x16xf32>
    %45 = tpu.transpose %43, [1, 0] : vector<8x16xf32> -> vector<16x8xf32>
    %cst_26 = arith.constant dense<0.000000e+00> : vector<8x8xf32>
    %46 = tpu.matmul %42, %45, %cst_26 {dimension_numbers = #tpu.dot_dimension_numbers<[1], [0], [0], [1], [0, 0, 1, 1], [], []>} : vector<8x16xf32>, vector<16x8xf32>, vector<8x8xf32> -> vector<8x8xf32>
    %47 = vector.broadcast %3 : vector<1x8xf32> to vector<8x8xf32>
    %48 = arith.addf %46, %47 : vector<8x8xf32>
    %cst_27 = arith.constant dense<0xFF800000> : vector<8xf32>
    %49 = vector.multi_reduction <maximumf>, %48, %cst_27 [1] : vector<8x8xf32> to vector<8xf32>
    %50 = vector.shape_cast %49 : vector<8xf32> to vector<8x1xf32>
    %51 = vector.broadcast %50 : vector<8x1xf32> to vector<8x8xf32>
    %52 = arith.subf %48, %51 : vector<8x8xf32>
    %53 = math.exp %52 : vector<8x8xf32>
    %cst_28 = arith.constant dense<0.000000e+00> : vector<8xf32>
    %54 = vector.multi_reduction <add>, %53, %cst_28 [1] : vector<8x8xf32> to vector<8xf32>
    %55 = vector.shape_cast %54 : vector<8xf32> to vector<8x1xf32>
    %56 = vector.broadcast %55 : vector<8x1xf32> to vector<8x8xf32>
    %57 = arith.divf %53, %56 : vector<8x8xf32>
    %cst_29 = arith.constant dense<0.000000e+00> : vector<8x16xf32>
    %58 = tpu.matmul %57, %44, %cst_29 {dimension_numbers = #tpu.dot_dimension_numbers<[1], [0], [0], [1], [0, 0, 1, 1], [], []>} : vector<8x8xf32>, vector<8x16xf32>, vector<8x16xf32> -> vector<8x16xf32>
    %59 = vector.extract_strided_slice %39 {offsets = [0, 0], sizes = [16, 32], strides = [1, 1]} : vector<32x32xf32> to vector<16x32xf32>
    %cst_30 = arith.constant dense<0.000000e+00> : vector<8x32xf32>
    %60 = tpu.matmul %58, %59, %cst_30 {dimension_numbers = #tpu.dot_dimension_numbers<[1], [0], [0], [1], [0, 0, 1, 1], [], []>} : vector<8x16xf32>, vector<16x32xf32>, vector<8x32xf32> -> vector<8x32xf32>
    %61 = vector.broadcast %41 : vector<1x32xf32> to vector<8x32xf32>
    %62 = arith.addf %61, %60 : vector<8x32xf32>
    %63 = vector.extract_strided_slice %35 {offsets = [0, 16], sizes = [8, 16], strides = [1, 1]} : vector<8x32xf32> to vector<8x16xf32>
    %64 = vector.extract_strided_slice %36 {offsets = [0, 16], sizes = [8, 16], strides = [1, 1]} : vector<8x32xf32> to vector<8x16xf32>
    %65 = vector.extract_strided_slice %37 {offsets = [0, 16], sizes = [8, 16], strides = [1, 1]} : vector<8x32xf32> to vector<8x16xf32>
    %66 = tpu.transpose %64, [1, 0] : vector<8x16xf32> -> vector<16x8xf32>
    %cst_31 = arith.constant dense<0.000000e+00> : vector<8x8xf32>
    %67 = tpu.matmul %63, %66, %cst_31 {dimension_numbers = #tpu.dot_dimension_numbers<[1], [0], [0], [1], [0, 0, 1, 1], [], []>} : vector<8x16xf32>, vector<16x8xf32>, vector<8x8xf32> -> vector<8x8xf32>
    %68 = vector.broadcast %3 : vector<1x8xf32> to vector<8x8xf32>
    %69 = arith.addf %67, %68 : vector<8x8xf32>
    %cst_32 = arith.constant dense<0xFF800000> : vector<8xf32>
    %70 = vector.multi_reduction <maximumf>, %69, %cst_32 [1] : vector<8x8xf32> to vector<8xf32>
    %71 = vector.shape_cast %70 : vector<8xf32> to vector<8x1xf32>
    %72 = vector.broadcast %71 : vector<8x1xf32> to vector<8x8xf32>
    %73 = arith.subf %69, %72 : vector<8x8xf32>
    %74 = math.exp %73 : vector<8x8xf32>
    %cst_33 = arith.constant dense<0.000000e+00> : vector<8xf32>
    %75 = vector.multi_reduction <add>, %74, %cst_33 [1] : vector<8x8xf32> to vector<8xf32>
    %76 = vector.shape_cast %75 : vector<8xf32> to vector<8x1xf32>
    %77 = vector.broadcast %76 : vector<8x1xf32> to vector<8x8xf32>
    %78 = arith.divf %74, %77 : vector<8x8xf32>
    %cst_34 = arith.constant dense<0.000000e+00> : vector<8x16xf32>
    %79 = tpu.matmul %78, %65, %cst_34 {dimension_numbers = #tpu.dot_dimension_numbers<[1], [0], [0], [1], [0, 0, 1, 1], [], []>} : vector<8x8xf32>, vector<8x16xf32>, vector<8x16xf32> -> vector<8x16xf32>
    %80 = vector.extract_strided_slice %39 {offsets = [16, 0], sizes = [16, 32], strides = [1, 1]} : vector<32x32xf32> to vector<16x32xf32>
    %cst_35 = arith.constant dense<0.000000e+00> : vector<8x32xf32>
    %81 = tpu.matmul %79, %80, %cst_35 {dimension_numbers = #tpu.dot_dimension_numbers<[1], [0], [0], [1], [0, 0, 1, 1], [], []>} : vector<8x16xf32>, vector<16x32xf32>, vector<8x32xf32> -> vector<8x32xf32>
    %82 = arith.addf %62, %81 : vector<8x32xf32>
    %83 = arith.addf %27, %82 : vector<8x32xf32>
    %c0_36 = arith.constant 0 : index
    %c0_37 = arith.constant 0 : index
    %c0_38 = arith.constant 0 : index
    %84 = vector.load %arg9[%c0_36, %c0_37, %c0_38] : memref<2x1x32xf32, #tpu.memory_space<vmem>>, vector<1x1x32xf32>
    %85 = vector.shape_cast %84 : vector<1x1x32xf32> to vector<1x32xf32>
    %c0_39 = arith.constant 0 : index
    %c0_40 = arith.constant 0 : index
    %c0_41 = arith.constant 0 : index
    %86 = vector.load %arg10[%c0_39, %c0_40, %c0_41] : memref<2x1x32xf32, #tpu.memory_space<vmem>>, vector<1x1x32xf32>
    %87 = vector.shape_cast %86 : vector<1x1x32xf32> to vector<1x32xf32>
    %cst_42 = arith.constant dense<0.000000e+00> : vector<8xf32>
    %88 = vector.multi_reduction <add>, %83, %cst_42 [1] : vector<8x32xf32> to vector<8xf32>
    %89 = vector.shape_cast %88 : vector<8xf32> to vector<8x1xf32>
    %cst_43 = arith.constant 3.200000e+01 : f32
    %90 = vector.broadcast %cst_43 : f32 to vector<8x1xf32>
    %91 = arith.divf %89, %90 : vector<8x1xf32>
    %92 = vector.broadcast %91 : vector<8x1xf32> to vector<8x32xf32>
    %93 = arith.subf %83, %92 : vector<8x32xf32>
    %94 = arith.mulf %93, %93 : vector<8x32xf32>
    %cst_44 = arith.constant dense<0.000000e+00> : vector<8xf32>
    %95 = vector.multi_reduction <add>, %94, %cst_44 [1] : vector<8x32xf32> to vector<8xf32>
    %96 = vector.shape_cast %95 : vector<8xf32> to vector<8x1xf32>
    %cst_45 = arith.constant 3.200000e+01 : f32
    %97 = vector.broadcast %cst_45 : f32 to vector<8x1xf32>
    %98 = arith.divf %96, %97 : vector<8x1xf32>
    %99 = vector.broadcast %91 : vector<8x1xf32> to vector<8x32xf32>
    %100 = arith.subf %83, %99 : vector<8x32xf32>
    %cst_46 = arith.constant 9.99999996E-13 : f32
    %101 = vector.broadcast %cst_46 : f32 to vector<8x1xf32>
    %102 = arith.addf %98, %101 : vector<8x1xf32>
    %103 = math.rsqrt %102 : vector<8x1xf32>
    %104 = vector.broadcast %103 : vector<8x1xf32> to vector<8x32xf32>
    %105 = arith.mulf %100, %104 : vector<8x32xf32>
    %106 = vector.broadcast %85 : vector<1x32xf32> to vector<8x32xf32>
    %107 = arith.mulf %105, %106 : vector<8x32xf32>
    %108 = vector.broadcast %87 : vector<1x32xf32> to vector<8x32xf32>
    %109 = arith.addf %107, %108 : vector<8x32xf32>
    %c0_47 = arith.constant 0 : index
    %c0_48 = arith.constant 0 : index
    %c0_49 = arith.constant 0 : index
    %110 = vector.load %arg11[%c0_47, %c0_48, %c0_49] : memref<2x32x64xf32, #tpu.memory_space<vmem>>, vector<1x32x64xf32>
    %111 = vector.shape_cast %110 : vector<1x32x64xf32> to vector<32x64xf32>
    %cst_50 = arith.constant dense<0.000000e+00> : vector<8x64xf32>
    %112 = tpu.matmul %109, %111, %cst_50 {dimension_numbers = #tpu.dot_dimension_numbers<[1], [0], [0], [1], [0, 0, 1, 1], [], []>} : vector<8x32xf32>, vector<32x64xf32>, vector<8x64xf32> -> vector<8x64xf32>
    %c0_51 = arith.constant 0 : index
    %c0_52 = arith.constant 0 : index
    %c0_53 = arith.constant 0 : index
    %113 = vector.load %arg12[%c0_51, %c0_52, %c0_53] : memref<2x1x64xf32, #tpu.memory_space<vmem>>, vector<1x1x64xf32>
    %114 = vector.shape_cast %113 : vector<1x1x64xf32> to vector<1x64xf32>
    %115 = vector.broadcast %114 : vector<1x64xf32> to vector<8x64xf32>
    %116 = arith.addf %112, %115 : vector<8x64xf32>
    %117 = arith.mulf %116, %116 : vector<8x64xf32>
    %118 = arith.mulf %116, %117 : vector<8x64xf32>
    %cst_54 = arith.constant 4.471500e-02 : f32
    %119 = vector.broadcast %cst_54 : f32 to vector<8x64xf32>
    %120 = arith.mulf %119, %118 : vector<8x64xf32>
    %121 = arith.addf %116, %120 : vector<8x64xf32>
    %cst_55 = arith.constant 0.797884583 : f32
    %122 = vector.broadcast %cst_55 : f32 to vector<8x64xf32>
    %123 = arith.mulf %122, %121 : vector<8x64xf32>
    %124 = math.tanh %123 : vector<8x64xf32>
    %cst_56 = arith.constant 1.000000e+00 : f32
    %125 = vector.broadcast %cst_56 : f32 to vector<8x64xf32>
    %126 = arith.addf %125, %124 : vector<8x64xf32>
    %cst_57 = arith.constant 5.000000e-01 : f32
    %127 = vector.broadcast %cst_57 : f32 to vector<8x64xf32>
    %128 = arith.mulf %127, %126 : vector<8x64xf32>
    %129 = arith.mulf %116, %128 : vector<8x64xf32>
    %c0_58 = arith.constant 0 : index
    %c0_59 = arith.constant 0 : index
    %c0_60 = arith.constant 0 : index
    %130 = vector.load %arg13[%c0_58, %c0_59, %c0_60] : memref<2x64x32xf32, #tpu.memory_space<vmem>>, vector<1x64x32xf32>
    %131 = vector.shape_cast %130 : vector<1x64x32xf32> to vector<64x32xf32>
    %cst_61 = arith.constant dense<0.000000e+00> : vector<8x32xf32>
    %132 = tpu.matmul %129, %131, %cst_61 {dimension_numbers = #tpu.dot_dimension_numbers<[1], [0], [0], [1], [0, 0, 1, 1], [], []>} : vector<8x64xf32>, vector<64x32xf32>, vector<8x32xf32> -> vector<8x32xf32>
    %c0_62 = arith.constant 0 : index
    %c0_63 = arith.constant 0 : index
    %c0_64 = arith.constant 0 : index
    %133 = vector.load %arg14[%c0_62, %c0_63, %c0_64] : memref<2x1x32xf32, #tpu.memory_space<vmem>>, vector<1x1x32xf32>
    %134 = vector.shape_cast %133 : vector<1x1x32xf32> to vector<1x32xf32>
    %135 = vector.broadcast %134 : vector<1x32xf32> to vector<8x32xf32>
    %136 = arith.addf %132, %135 : vector<8x32xf32>
    %137 = arith.addf %109, %136 : vector<8x32xf32>
    %c0_65 = arith.constant 0 : index
    %c0_66 = arith.constant 0 : index
    %c0_67 = arith.constant 0 : index
    %138 = vector.load %arg15[%c0_65, %c0_66, %c0_67] : memref<2x1x32xf32, #tpu.memory_space<vmem>>, vector<1x1x32xf32>
    %139 = vector.shape_cast %138 : vector<1x1x32xf32> to vector<1x32xf32>
    %c0_68 = arith.constant 0 : index
    %c0_69 = arith.constant 0 : index
    %c0_70 = arith.constant 0 : index
    %140 = vector.load %arg16[%c0_68, %c0_69, %c0_70] : memref<2x1x32xf32, #tpu.memory_space<vmem>>, vector<1x1x32xf32>
    %141 = vector.shape_cast %140 : vector<1x1x32xf32> to vector<1x32xf32>
    %cst_71 = arith.constant dense<0.000000e+00> : vector<8xf32>
    %142 = vector.multi_reduction <add>, %137, %cst_71 [1] : vector<8x32xf32> to vector<8xf32>
    %143 = vector.shape_cast %142 : vector<8xf32> to vector<8x1xf32>
    %cst_72 = arith.constant 3.200000e+01 : f32
    %144 = vector.broadcast %cst_72 : f32 to vector<8x1xf32>
    %145 = arith.divf %143, %144 : vector<8x1xf32>
    %146 = vector.broadcast %145 : vector<8x1xf32> to vector<8x32xf32>
    %147 = arith.subf %137, %146 : vector<8x32xf32>
    %148 = arith.mulf %147, %147 : vector<8x32xf32>
    %cst_73 = arith.constant dense<0.000000e+00> : vector<8xf32>
    %149 = vector.multi_reduction <add>, %148, %cst_73 [1] : vector<8x32xf32> to vector<8xf32>
    %150 = vector.shape_cast %149 : vector<8xf32> to vector<8x1xf32>
    %cst_74 = arith.constant 3.200000e+01 : f32
    %151 = vector.broadcast %cst_74 : f32 to vector<8x1xf32>
    %152 = arith.divf %150, %151 : vector<8x1xf32>
    %153 = vector.broadcast %145 : vector<8x1xf32> to vector<8x32xf32>
    %154 = arith.subf %137, %153 : vector<8x32xf32>
    %cst_75 = arith.constant 9.99999996E-13 : f32
    %155 = vector.broadcast %cst_75 : f32 to vector<8x1xf32>
    %156 = arith.addf %152, %155 : vector<8x1xf32>
    %157 = math.rsqrt %156 : vector<8x1xf32>
    %158 = vector.broadcast %157 : vector<8x1xf32> to vector<8x32xf32>
    %159 = arith.mulf %154, %158 : vector<8x32xf32>
    %160 = vector.broadcast %139 : vector<1x32xf32> to vector<8x32xf32>
    %161 = arith.mulf %159, %160 : vector<8x32xf32>
    %162 = vector.broadcast %141 : vector<1x32xf32> to vector<8x32xf32>
    %163 = arith.addf %161, %162 : vector<8x32xf32>
    %c1 = arith.constant 1 : index
    %c0_76 = arith.constant 0 : index
    %c0_77 = arith.constant 0 : index
    %164 = vector.load %arg5[%c1, %c0_76, %c0_77] : memref<2x32x96xf32, #tpu.memory_space<vmem>>, vector<1x32x96xf32>
    %165 = vector.shape_cast %164 : vector<1x32x96xf32> to vector<32x96xf32>
    %cst_78 = arith.constant dense<0.000000e+00> : vector<8x96xf32>
    %166 = tpu.matmul %163, %165, %cst_78 {dimension_numbers = #tpu.dot_dimension_numbers<[1], [0], [0], [1], [0, 0, 1, 1], [], []>} : vector<8x32xf32>, vector<32x96xf32>, vector<8x96xf32> -> vector<8x96xf32>
    %c1_79 = arith.constant 1 : index
    %c0_80 = arith.constant 0 : index
    %c0_81 = arith.constant 0 : index
    %167 = vector.load %arg6[%c1_79, %c0_80, %c0_81] : memref<2x1x96xf32, #tpu.memory_space<vmem>>, vector<1x1x96xf32>
    %168 = vector.shape_cast %167 : vector<1x1x96xf32> to vector<1x96xf32>
    %169 = vector.broadcast %168 : vector<1x96xf32> to vector<8x96xf32>
    %170 = arith.addf %166, %169 : vector<8x96xf32>
    %171 = vector.extract_strided_slice %170 {offsets = [0, 0], sizes = [8, 32], strides = [1, 1]} : vector<8x96xf32> to vector<8x32xf32>
    %172 = vector.extract_strided_slice %170 {offsets = [0, 32], sizes = [8, 32], strides = [1, 1]} : vector<8x96xf32> to vector<8x32xf32>
    %173 = vector.extract_strided_slice %170 {offsets = [0, 64], sizes = [8, 32], strides = [1, 1]} : vector<8x96xf32> to vector<8x32xf32>
    %c1_82 = arith.constant 1 : index
    %c0_83 = arith.constant 0 : index
    %c0_84 = arith.constant 0 : index
    %174 = vector.load %arg7[%c1_82, %c0_83, %c0_84] : memref<2x32x32xf32, #tpu.memory_space<vmem>>, vector<1x32x32xf32>
    %175 = vector.shape_cast %174 : vector<1x32x32xf32> to vector<32x32xf32>
    %c1_85 = arith.constant 1 : index
    %c0_86 = arith.constant 0 : index
    %c0_87 = arith.constant 0 : index
    %176 = vector.load %arg8[%c1_85, %c0_86, %c0_87] : memref<2x1x32xf32, #tpu.memory_space<vmem>>, vector<1x1x32xf32>
    %177 = vector.shape_cast %176 : vector<1x1x32xf32> to vector<1x32xf32>
    %178 = vector.extract_strided_slice %171 {offsets = [0, 0], sizes = [8, 16], strides = [1, 1]} : vector<8x32xf32> to vector<8x16xf32>
    %179 = vector.extract_strided_slice %172 {offsets = [0, 0], sizes = [8, 16], strides = [1, 1]} : vector<8x32xf32> to vector<8x16xf32>
    %180 = vector.extract_strided_slice %173 {offsets = [0, 0], sizes = [8, 16], strides = [1, 1]} : vector<8x32xf32> to vector<8x16xf32>
    %181 = tpu.transpose %179, [1, 0] : vector<8x16xf32> -> vector<16x8xf32>
    %cst_88 = arith.constant dense<0.000000e+00> : vector<8x8xf32>
    %182 = tpu.matmul %178, %181, %cst_88 {dimension_numbers = #tpu.dot_dimension_numbers<[1], [0], [0], [1], [0, 0, 1, 1], [], []>} : vector<8x16xf32>, vector<16x8xf32>, vector<8x8xf32> -> vector<8x8xf32>
    %183 = vector.broadcast %3 : vector<1x8xf32> to vector<8x8xf32>
    %184 = arith.addf %182, %183 : vector<8x8xf32>
    %cst_89 = arith.constant dense<0xFF800000> : vector<8xf32>
    %185 = vector.multi_reduction <maximumf>, %184, %cst_89 [1] : vector<8x8xf32> to vector<8xf32>
    %186 = vector.shape_cast %185 : vector<8xf32> to vector<8x1xf32>
    %187 = vector.broadcast %186 : vector<8x1xf32> to vector<8x8xf32>
    %188 = arith.subf %184, %187 : vector<8x8xf32>
    %189 = math.exp %188 : vector<8x8xf32>
    %cst_90 = arith.constant dense<0.000000e+00> : vector<8xf32>
    %190 = vector.multi_reduction <add>, %189, %cst_90 [1] : vector<8x8xf32> to vector<8xf32>
    %191 = vector.shape_cast %190 : vector<8xf32> to vector<8x1xf32>
    %192 = vector.broadcast %191 : vector<8x1xf32> to vector<8x8xf32>
    %193 = arith.divf %189, %192 : vector<8x8xf32>
    %cst_91 = arith.constant dense<0.000000e+00> : vector<8x16xf32>
    %194 = tpu.matmul %193, %180, %cst_91 {dimension_numbers = #tpu.dot_dimension_numbers<[1], [0], [0], [1], [0, 0, 1, 1], [], []>} : vector<8x8xf32>, vector<8x16xf32>, vector<8x16xf32> -> vector<8x16xf32>
    %195 = vector.extract_strided_slice %175 {offsets = [0, 0], sizes = [16, 32], strides = [1, 1]} : vector<32x32xf32> to vector<16x32xf32>
    %cst_92 = arith.constant dense<0.000000e+00> : vector<8x32xf32>
    %196 = tpu.matmul %194, %195, %cst_92 {dimension_numbers = #tpu.dot_dimension_numbers<[1], [0], [0], [1], [0, 0, 1, 1], [], []>} : vector<8x16xf32>, vector<16x32xf32>, vector<8x32xf32> -> vector<8x32xf32>
    %197 = vector.broadcast %177 : vector<1x32xf32> to vector<8x32xf32>
    %198 = arith.addf %197, %196 : vector<8x32xf32>
    %199 = vector.extract_strided_slice %171 {offsets = [0, 16], sizes = [8, 16], strides = [1, 1]} : vector<8x32xf32> to vector<8x16xf32>
    %200 = vector.extract_strided_slice %172 {offsets = [0, 16], sizes = [8, 16], strides = [1, 1]} : vector<8x32xf32> to vector<8x16xf32>
    %201 = vector.extract_strided_slice %173 {offsets = [0, 16], sizes = [8, 16], strides = [1, 1]} : vector<8x32xf32> to vector<8x16xf32>
    %202 = tpu.transpose %200, [1, 0] : vector<8x16xf32> -> vector<16x8xf32>
    %cst_93 = arith.constant dense<0.000000e+00> : vector<8x8xf32>
    %203 = tpu.matmul %199, %202, %cst_93 {dimension_numbers = #tpu.dot_dimension_numbers<[1], [0], [0], [1], [0, 0, 1, 1], [], []>} : vector<8x16xf32>, vector<16x8xf32>, vector<8x8xf32> -> vector<8x8xf32>
    %204 = vector.broadcast %3 : vector<1x8xf32> to vector<8x8xf32>
    %205 = arith.addf %203, %204 : vector<8x8xf32>
    %cst_94 = arith.constant dense<0xFF800000> : vector<8xf32>
    %206 = vector.multi_reduction <maximumf>, %205, %cst_94 [1] : vector<8x8xf32> to vector<8xf32>
    %207 = vector.shape_cast %206 : vector<8xf32> to vector<8x1xf32>
    %208 = vector.broadcast %207 : vector<8x1xf32> to vector<8x8xf32>
    %209 = arith.subf %205, %208 : vector<8x8xf32>
    %210 = math.exp %209 : vector<8x8xf32>
    %cst_95 = arith.constant dense<0.000000e+00> : vector<8xf32>
    %211 = vector.multi_reduction <add>, %210, %cst_95 [1] : vector<8x8xf32> to vector<8xf32>
    %212 = vector.shape_cast %211 : vector<8xf32> to vector<8x1xf32>
    %213 = vector.broadcast %212 : vector<8x1xf32> to vector<8x8xf32>
    %214 = arith.divf %210, %213 : vector<8x8xf32>
    %cst_96 = arith.constant dense<0.000000e+00> : vector<8x16xf32>
    %215 = tpu.matmul %214, %201, %cst_96 {dimension_numbers = #tpu.dot_dimension_numbers<[1], [0], [0], [1], [0, 0, 1, 1], [], []>} : vector<8x8xf32>, vector<8x16xf32>, vector<8x16xf32> -> vector<8x16xf32>
    %216 = vector.extract_strided_slice %175 {offsets = [16, 0], sizes = [16, 32], strides = [1, 1]} : vector<32x32xf32> to vector<16x32xf32>
    %cst_97 = arith.constant dense<0.000000e+00> : vector<8x32xf32>
    %217 = tpu.matmul %215, %216, %cst_97 {dimension_numbers = #tpu.dot_dimension_numbers<[1], [0], [0], [1], [0, 0, 1, 1], [], []>} : vector<8x16xf32>, vector<16x32xf32>, vector<8x32xf32> -> vector<8x32xf32>
    %218 = arith.addf %198, %217 : vector<8x32xf32>
    %219 = arith.addf %163, %218 : vector<8x32xf32>
    %c1_98 = arith.constant 1 : index
    %c0_99 = arith.constant 0 : index
    %c0_100 = arith.constant 0 : index
    %220 = vector.load %arg9[%c1_98, %c0_99, %c0_100] : memref<2x1x32xf32, #tpu.memory_space<vmem>>, vector<1x1x32xf32>
    %221 = vector.shape_cast %220 : vector<1x1x32xf32> to vector<1x32xf32>
    %c1_101 = arith.constant 1 : index
    %c0_102 = arith.constant 0 : index
    %c0_103 = arith.constant 0 : index
    %222 = vector.load %arg10[%c1_101, %c0_102, %c0_103] : memref<2x1x32xf32, #tpu.memory_space<vmem>>, vector<1x1x32xf32>
    %223 = vector.shape_cast %222 : vector<1x1x32xf32> to vector<1x32xf32>
    %cst_104 = arith.constant dense<0.000000e+00> : vector<8xf32>
    %224 = vector.multi_reduction <add>, %219, %cst_104 [1] : vector<8x32xf32> to vector<8xf32>
    %225 = vector.shape_cast %224 : vector<8xf32> to vector<8x1xf32>
    %cst_105 = arith.constant 3.200000e+01 : f32
    %226 = vector.broadcast %cst_105 : f32 to vector<8x1xf32>
    %227 = arith.divf %225, %226 : vector<8x1xf32>
    %228 = vector.broadcast %227 : vector<8x1xf32> to vector<8x32xf32>
    %229 = arith.subf %219, %228 : vector<8x32xf32>
    %230 = arith.mulf %229, %229 : vector<8x32xf32>
    %cst_106 = arith.constant dense<0.000000e+00> : vector<8xf32>
    %231 = vector.multi_reduction <add>, %230, %cst_106 [1] : vector<8x32xf32> to vector<8xf32>
    %232 = vector.shape_cast %231 : vector<8xf32> to vector<8x1xf32>
    %cst_107 = arith.constant 3.200000e+01 : f32
    %233 = vector.broadcast %cst_107 : f32 to vector<8x1xf32>
    %234 = arith.divf %232, %233 : vector<8x1xf32>
    %235 = vector.broadcast %227 : vector<8x1xf32> to vector<8x32xf32>
    %236 = arith.subf %219, %235 : vector<8x32xf32>
    %cst_108 = arith.constant 9.99999996E-13 : f32
    %237 = vector.broadcast %cst_108 : f32 to vector<8x1xf32>
    %238 = arith.addf %234, %237 : vector<8x1xf32>
    %239 = math.rsqrt %238 : vector<8x1xf32>
    %240 = vector.broadcast %239 : vector<8x1xf32> to vector<8x32xf32>
    %241 = arith.mulf %236, %240 : vector<8x32xf32>
    %242 = vector.broadcast %221 : vector<1x32xf32> to vector<8x32xf32>
    %243 = arith.mulf %241, %242 : vector<8x32xf32>
    %244 = vector.broadcast %223 : vector<1x32xf32> to vector<8x32xf32>
    %245 = arith.addf %243, %244 : vector<8x32xf32>
    %c1_109 = arith.constant 1 : index
    %c0_110 = arith.constant 0 : index
    %c0_111 = arith.constant 0 : index
    %246 = vector.load %arg11[%c1_109, %c0_110, %c0_111] : memref<2x32x64xf32, #tpu.memory_space<vmem>>, vector<1x32x64xf32>
    %247 = vector.shape_cast %246 : vector<1x32x64xf32> to vector<32x64xf32>
    %cst_112 = arith.constant dense<0.000000e+00> : vector<8x64xf32>
    %248 = tpu.matmul %245, %247, %cst_112 {dimension_numbers = #tpu.dot_dimension_numbers<[1], [0], [0], [1], [0, 0, 1, 1], [], []>} : vector<8x32xf32>, vector<32x64xf32>, vector<8x64xf32> -> vector<8x64xf32>
    %c1_113 = arith.constant 1 : index
    %c0_114 = arith.constant 0 : index
    %c0_115 = arith.constant 0 : index
    %249 = vector.load %arg12[%c1_113, %c0_114, %c0_115] : memref<2x1x64xf32, #tpu.memory_space<vmem>>, vector<1x1x64xf32>
    %250 = vector.shape_cast %249 : vector<1x1x64xf32> to vector<1x64xf32>
    %251 = vector.broadcast %250 : vector<1x64xf32> to vector<8x64xf32>
    %252 = arith.addf %248, %251 : vector<8x64xf32>
    %253 = arith.mulf %252, %252 : vector<8x64xf32>
    %254 = arith.mulf %252, %253 : vector<8x64xf32>
    %cst_116 = arith.constant 4.471500e-02 : f32
    %255 = vector.broadcast %cst_116 : f32 to vector<8x64xf32>
    %256 = arith.mulf %255, %254 : vector<8x64xf32>
    %257 = arith.addf %252, %256 : vector<8x64xf32>
    %cst_117 = arith.constant 0.797884583 : f32
    %258 = vector.broadcast %cst_117 : f32 to vector<8x64xf32>
    %259 = arith.mulf %258, %257 : vector<8x64xf32>
    %260 = math.tanh %259 : vector<8x64xf32>
    %cst_118 = arith.constant 1.000000e+00 : f32
    %261 = vector.broadcast %cst_118 : f32 to vector<8x64xf32>
    %262 = arith.addf %261, %260 : vector<8x64xf32>
    %cst_119 = arith.constant 5.000000e-01 : f32
    %263 = vector.broadcast %cst_119 : f32 to vector<8x64xf32>
    %264 = arith.mulf %263, %262 : vector<8x64xf32>
    %265 = arith.mulf %252, %264 : vector<8x64xf32>
    %c1_120 = arith.constant 1 : index
    %c0_121 = arith.constant 0 : index
    %c0_122 = arith.constant 0 : index
    %266 = vector.load %arg13[%c1_120, %c0_121, %c0_122] : memref<2x64x32xf32, #tpu.memory_space<vmem>>, vector<1x64x32xf32>
    %267 = vector.shape_cast %266 : vector<1x64x32xf32> to vector<64x32xf32>
    %cst_123 = arith.constant dense<0.000000e+00> : vector<8x32xf32>
    %268 = tpu.matmul %265, %267, %cst_123 {dimension_numbers = #tpu.dot_dimension_numbers<[1], [0], [0], [1], [0, 0, 1, 1], [], []>} : vector<8x64xf32>, vector<64x32xf32>, vector<8x32xf32> -> vector<8x32xf32>
    %c1_124 = arith.constant 1 : index
    %c0_125 = arith.constant 0 : index
    %c0_126 = arith.constant 0 : index
    %269 = vector.load %arg14[%c1_124, %c0_125, %c0_126] : memref<2x1x32xf32, #tpu.memory_space<vmem>>, vector<1x1x32xf32>
    %270 = vector.shape_cast %269 : vector<1x1x32xf32> to vector<1x32xf32>
    %271 = vector.broadcast %270 : vector<1x32xf32> to vector<8x32xf32>
    %272 = arith.addf %268, %271 : vector<8x32xf32>
    %273 = arith.addf %245, %272 : vector<8x32xf32>
    %c1_127 = arith.constant 1 : index
    %c0_128 = arith.constant 0 : index
    %c0_129 = arith.constant 0 : index
    %274 = vector.load %arg15[%c1_127, %c0_128, %c0_129] : memref<2x1x32xf32, #tpu.memory_space<vmem>>, vector<1x1x32xf32>
    %275 = vector.shape_cast %274 : vector<1x1x32xf32> to vector<1x32xf32>
    %c1_130 = arith.constant 1 : index
    %c0_131 = arith.constant 0 : index
    %c0_132 = arith.constant 0 : index
    %276 = vector.load %arg16[%c1_130, %c0_131, %c0_132] : memref<2x1x32xf32, #tpu.memory_space<vmem>>, vector<1x1x32xf32>
    %277 = vector.shape_cast %276 : vector<1x1x32xf32> to vector<1x32xf32>
    %cst_133 = arith.constant dense<0.000000e+00> : vector<8xf32>
    %278 = vector.multi_reduction <add>, %273, %cst_133 [1] : vector<8x32xf32> to vector<8xf32>
    %279 = vector.shape_cast %278 : vector<8xf32> to vector<8x1xf32>
    %cst_134 = arith.constant 3.200000e+01 : f32
    %280 = vector.broadcast %cst_134 : f32 to vector<8x1xf32>
    %281 = arith.divf %279, %280 : vector<8x1xf32>
    %282 = vector.broadcast %281 : vector<8x1xf32> to vector<8x32xf32>
    %283 = arith.subf %273, %282 : vector<8x32xf32>
    %284 = arith.mulf %283, %283 : vector<8x32xf32>
    %cst_135 = arith.constant dense<0.000000e+00> : vector<8xf32>
    %285 = vector.multi_reduction <add>, %284, %cst_135 [1] : vector<8x32xf32> to vector<8xf32>
    %286 = vector.shape_cast %285 : vector<8xf32> to vector<8x1xf32>
    %cst_136 = arith.constant 3.200000e+01 : f32
    %287 = vector.broadcast %cst_136 : f32 to vector<8x1xf32>
    %288 = arith.divf %286, %287 : vector<8x1xf32>
    %289 = vector.broadcast %281 : vector<8x1xf32> to vector<8x32xf32>
    %290 = arith.subf %273, %289 : vector<8x32xf32>
    %cst_137 = arith.constant 9.99999996E-13 : f32
    %291 = vector.broadcast %cst_137 : f32 to vector<8x1xf32>
    %292 = arith.addf %288, %291 : vector<8x1xf32>
    %293 = math.rsqrt %292 : vector<8x1xf32>
    %294 = vector.broadcast %293 : vector<8x1xf32> to vector<8x32xf32>
    %295 = arith.mulf %290, %294 : vector<8x32xf32>
    %296 = vector.broadcast %275 : vector<1x32xf32> to vector<8x32xf32>
    %297 = arith.mulf %295, %296 : vector<8x32xf32>
    %298 = vector.broadcast %277 : vector<1x32xf32> to vector<8x32xf32>
    %299 = arith.addf %297, %298 : vector<8x32xf32>
    %300 = vector.extract_strided_slice %299 {offsets = [0, 0], sizes = [1, 32], strides = [1, 1]} : vector<8x32xf32> to vector<1x32xf32>
    %c0_138 = arith.constant 0 : index
    %c0_139 = arith.constant 0 : index
    %301 = vector.load %arg17[%c0_138, %c0_139] : memref<32x128xf32, #tpu.memory_space<vmem>>, vector<32x128xf32>
    %cst_140 = arith.constant dense<0.000000e+00> : vector<1x128xf32>
    %302 = tpu.matmul %300, %301, %cst_140 {dimension_numbers = #tpu.dot_dimension_numbers<[1], [0], [0], [1], [0, 0, 1, 1], [], []>} : vector<1x32xf32>, vector<32x128xf32>, vector<1x128xf32> -> vector<1x128xf32>
    %c0_141 = arith.constant 0 : index
    %c0_142 = arith.constant 0 : index
    %303 = vector.load %arg18[%c0_141, %c0_142] : memref<1x128xf32, #tpu.memory_space<vmem>>, vector<1x128xf32>
    %304 = arith.addf %302, %303 : vector<1x128xf32>
    %305 = vector.shape_cast %304 : vector<1x128xf32> to vector<1x128xf32>
    %306 = vector.broadcast %305 : vector<1x128xf32> to vector<8x128xf32>
    %c0_143 = arith.constant 0 : index
    %c0_144 = arith.constant 0 : index
    %c0_145 = arith.constant 0 : index
    %307 = vector.load %arg19[%c0_143, %c0_144, %c0_145] : memref<1x8x128xf32, #tpu.memory_space<vmem>>, vector<1x8x128xf32>
    %308 = vector.shape_cast %307 : vector<1x8x128xf32> to vector<8x128xf32>
    %309 = vector.shape_cast %306 : vector<8x128xf32> to vector<1x8x128xf32>
    tpu.vector_store %arg19[%c0_143, %c0_144, %c0_145], %309 {strides = array<i32>} : memref<1x8x128xf32, #tpu.memory_space<vmem>>, vector<1x8x128xf32>,
    return
  }
  func.func @transform_0(%arg0: i32) -> (i32, i32, i32) {
    %c0_i32 = arith.constant 0 : i32
    %c0_i32_0 = arith.constant 0 : i32
    %c0_i32_1 = arith.constant 0 : i32
    return %arg0, %c0_i32, %c0_i32_0 : i32, i32, i32
  }
  func.func @transform_1(%arg0: i32) -> (i32, i32, i32) {
    %c0_i32 = arith.constant 0 : i32
    %c0_i32_0 = arith.constant 0 : i32
    %c0_i32_1 = arith.constant 0 : i32
    return %arg0, %c0_i32, %c0_i32_0 : i32, i32, i32
  }
  func.func @transform_2(%arg0: i32) -> (i32, i32) {
    %c0_i32 = arith.constant 0 : i32
    %c0_i32_0 = arith.constant 0 : i32
    %c0_i32_1 = arith.constant 0 : i32
    return %c0_i32, %c0_i32_0 : i32, i32
  }
  func.func @transform_3(%arg0: i32) -> (i32, i32) {
    %c0_i32 = arith.constant 0 : i32
    %c0_i32_0 = arith.constant 0 : i32
    %c0_i32_1 = arith.constant 0 : i32
    return %c0_i32, %c0_i32_0 : i32, i32
  }
  func.func @transform_4(%arg0: i32) -> (i32, i32, i32) {
    %c0_i32 = arith.constant 0 : i32
    %c0_i32_0 = arith.constant 0 : i32
    %c0_i32_1 = arith.constant 0 : i32
    %c0_i32_2 = arith.constant 0 : i32
    return %c0_i32, %c0_i32_0, %c0_i32_1 : i32, i32, i32
  }
  func.func @transform_5(%arg0: i32) -> (i32, i32, i32) {
    %c0_i32 = arith.constant 0 : i32
    %c0_i32_0 = arith.constant 0 : i32
    %c0_i32_1 = arith.constant 0 : i32
    %c0_i32_2 = arith.constant 0 : i32
    return %c0_i32, %c0_i32_0, %c0_i32_1 : i32, i32, i32
  }
  func.func @transform_6(%arg0: i32) -> (i32, i32, i32) {
    %c0_i32 = arith.constant 0 : i32
    %c0_i32_0 = arith.constant 0 : i32
    %c0_i32_1 = arith.constant 0 : i32
    %c0_i32_2 = arith.constant 0 : i32
    return %c0_i32, %c0_i32_0, %c0_i32_1 : i32, i32, i32
  }
  func.func @transform_7(%arg0: i32) -> (i32, i32, i32) {
    %c0_i32 = arith.constant 0 : i32
    %c0_i32_0 = arith.constant 0 : i32
    %c0_i32_1 = arith.constant 0 : i32
    %c0_i32_2 = arith.constant 0 : i32
    return %c0_i32, %c0_i32_0, %c0_i32_1 : i32, i32, i32
  }
  func.func @transform_8(%arg0: i32) -> (i32, i32, i32) {
    %c0_i32 = arith.constant 0 : i32
    %c0_i32_0 = arith.constant 0 : i32
    %c0_i32_1 = arith.constant 0 : i32
    %c0_i32_2 = arith.constant 0 : i32
    return %c0_i32, %c0_i32_0, %c0_i32_1 : i32, i32, i32
  }
  func.func @transform_9(%arg0: i32) -> (i32, i32, i32) {
    %c0_i32 = arith.constant 0 : i32
    %c0_i32_0 = arith.constant 0 : i32
    %c0_i32_1 = arith.constant 0 : i32
    %c0_i32_2 = arith.constant 0 : i32
    return %c0_i32, %c0_i32_0, %c0_i32_1 : i32, i32, i32
  }
  func.func @transform_10(%arg0: i32) -> (i32, i32, i32) {
    %c0_i32 = arith.constant 0 : i32
    %c0_i32_0 = arith.constant 0 : i32
    %c0_i32_1 = arith.constant 0 : i32
    %c0_i32_2 = arith.constant 0 : i32
    return %c0_i32, %c0_i32_0, %c0_i32_1 : i32, i32, i32
  }
  func.func @transform_11(%arg0: i32) -> (i32, i32, i32) {
    %c0_i32 = arith.constant 0 : i32
    %c0_i32_0 = arith.constant 0 : i32
    %c0_i32_1 = arith.constant 0 : i32
    %c0_i32_2 = arith.constant 0 : i32
    return %c0_i32, %c0_i32_0, %c0_i32_1 : i32, i32, i32
  }
  func.func @transform_12(%arg0: i32) -> (i32, i32, i32) {
    %c0_i32 = arith.constant 0 : i32
    %c0_i32_0 = arith.constant 0 : i32
    %c0_i32_1 = arith.constant 0 : i32
    %c0_i32_2 = arith.constant 0 : i32
    return %c0_i32, %c0_i32_0, %c0_i32_1 : i32, i32, i32
  }
  func.func @transform_13(%arg0: i32) -> (i32, i32, i32) {
    %c0_i32 = arith.constant 0 : i32
    %c0_i32_0 = arith.constant 0 : i32
    %c0_i32_1 = arith.constant 0 : i32
    %c0_i32_2 = arith.constant 0 : i32
    return %c0_i32, %c0_i32_0, %c0_i32_1 : i32, i32, i32
  }
  func.func @transform_14(%arg0: i32) -> (i32, i32, i32) {
    %c0_i32 = arith.constant 0 : i32
    %c0_i32_0 = arith.constant 0 : i32
    %c0_i32_1 = arith.constant 0 : i32
    %c0_i32_2 = arith.constant 0 : i32
    return %c0_i32, %c0_i32_0, %c0_i32_1 : i32, i32, i32
  }
  func.func @transform_15(%arg0: i32) -> (i32, i32, i32) {
    %c0_i32 = arith.constant 0 : i32
    %c0_i32_0 = arith.constant 0 : i32
    %c0_i32_1 = arith.constant 0 : i32
    %c0_i32_2 = arith.constant 0 : i32
    return %c0_i32, %c0_i32_0, %c0_i32_1 : i32, i32, i32
  }
  func.func @transform_16(%arg0: i32) -> (i32, i32) {
    %c0_i32 = arith.constant 0 : i32
    %c0_i32_0 = arith.constant 0 : i32
    %c0_i32_1 = arith.constant 0 : i32
    return %c0_i32, %c0_i32_0 : i32, i32
  }
  func.func @transform_17(%arg0: i32) -> (i32, i32) {
    %c0_i32 = arith.constant 0 : i32
    %c0_i32_0 = arith.constant 0 : i32
    %c0_i32_1 = arith.constant 0 : i32
    return %c0_i32, %c0_i32_0 : i32, i32
  }
  func.func @transform_18(%arg0: i32) -> (i32, i32, i32) {
    %c0_i32 = arith.constant 0 : i32
    %c0_i32_0 = arith.constant 0 : i32
    %c0_i32_1 = arith.constant 0 : i32
    return %arg0, %c0_i32, %c0_i32_0 : i32, i32, i32
  }
}

</mosaic_0001>

<llo_original>
// kernel: bert_classifier_forward.1
$region0: #{bert_classifier_forward.1}
  #allocation0 [shape = 'u32[]', space=smem, size = 0x4, offset = 0x4, fixed_abs, tag = 'smem constant byte address 0x4 - core index']
  #allocation1 [shape = 'u32[144,128]{1,0:T(1,128)}', space=vmem, size = 0x12000, scoped, tag = 'internal scratch']
  %s0 = inlined_call_operand.vmem [shape: f32[2,8,32], index: 0, kind: input, shape index: {}]
  %s1 = inlined_call_operand.vmem [shape: f32[2,1,8], index: 1, kind: input, shape index: {}]
  %s2 = inlined_call_operand.vmem [shape: f32[1,32], index: 2, kind: input, shape index: {}]
  %s3 = inlined_call_operand.vmem [shape: f32[1,32], index: 3, kind: input, shape index: {}]
  %s4 = inlined_call_operand.vmem [shape: f32[2,32,96], index: 4, kind: input, shape index: {}]
  %s5 = inlined_call_operand.vmem [shape: f32[2,1,96], index: 5, kind: input, shape index: {}]
  %s6 = inlined_call_operand.vmem [shape: f32[2,32,32], index: 6, kind: input, shape index: {}]
  %s7 = inlined_call_operand.vmem [shape: f32[2,1,32], index: 7, kind: input, shape index: {}]
  %s8 = inlined_call_operand.vmem [shape: f32[2,1,32], index: 8, kind: input, shape index: {}]
  %s9 = inlined_call_operand.vmem [shape: f32[2,1,32], index: 9, kind: input, shape index: {}]
  %s10 = inlined_call_operand.vmem [shape: f32[2,32,64], index: 10, kind: input, shape index: {}]
  %s11 = inlined_call_operand.vmem [shape: f32[2,1,64], index: 11, kind: input, shape index: {}]
  %s12 = inlined_call_operand.vmem [shape: f32[2,64,32], index: 12, kind: input, shape index: {}]
  %s13 = inlined_call_operand.vmem [shape: f32[2,1,32], index: 13, kind: input, shape index: {}]
  %s14 = inlined_call_operand.vmem [shape: f32[2,1,32], index: 14, kind: input, shape index: {}]
  %s15 = inlined_call_operand.vmem [shape: f32[2,1,32], index: 15, kind: input, shape index: {}]
  %s16 = inlined_call_operand.vmem [shape: f32[32,128], index: 16, kind: input, shape index: {}]
  %s17 = inlined_call_operand.vmem [shape: f32[1,128], index: 17, kind: input, shape index: {}]
  %s18 = inlined_call_operand.vmem [shape: f32[2,8,128], index: 18, kind: output, shape index: {}]
  %s19 = sld [smem:[#allocation0]]
  $region105: #{bert_classifier_forward.1} parent=0
    _
  %s21 = ssub.s32 1, %s19
  %s22 = scalar_select 0, %s21, %s19
  loop: start=0, step=1, limit=4
  $region2: #{bert_classifier_forward.1} parent=0 // loop_pre_header
    _
  $region3: #{bert_classifier_forward.1} parent=0 // loop_header
    %s24 = sphi 0, %s28
    %p25 = scmp.ge.s32.totalorder %s24, 4
    %s34 = sphi 0, %s36
    %s37 = sphi 0, %s34
    %s38 = sphi 0, %s37
    %s54 = sphi 0, %s38
    %s60 = sphi 0, %s62
    %s63 = sphi 0, %s60
    %s64 = sphi 0, %s63
    %s80 = sphi 0, %s64
    %s84 = sphi 0, %s84
    %s86 = sphi 0, %s84
    %s87 = sphi 0, %s86
    %s101 = sphi 0, %s87
    %s105 = sphi 0, %s105
    %s107 = sphi 0, %s105
    %s108 = sphi 0, %s107
    %s122 = sphi 0, %s108
    %s126 = sphi 0, %s126
    %s128 = sphi 0, %s126
    %s129 = sphi 0, %s128
    %s143 = sphi 0, %s129
    %s147 = sphi 0, %s147
    %s149 = sphi 0, %s147
    %s150 = sphi 0, %s149
    %s164 = sphi 0, %s150
    %s168 = sphi 0, %s168
    %s170 = sphi 0, %s168
    %s171 = sphi 0, %s170
    %s185 = sphi 0, %s171
    %s189 = sphi 0, %s189
    %s191 = sphi 0, %s189
    %s192 = sphi 0, %s191
    %s206 = sphi 0, %s192
    %s210 = sphi 0, %s210
    %s212 = sphi 0, %s210
    %s213 = sphi 0, %s212
    %s227 = sphi 0, %s213
    %s231 = sphi 0, %s231
    %s233 = sphi 0, %s231
    %s234 = sphi 0, %s233
    %s248 = sphi 0, %s234
    %s252 = sphi 0, %s252
    %s254 = sphi 0, %s252
    %s255 = sphi 0, %s254
    %s269 = sphi 0, %s255
    %s273 = sphi 0, %s273
    %s275 = sphi 0, %s273
    %s276 = sphi 0, %s275
    %s290 = sphi 0, %s276
    %s294 = sphi 0, %s294
    %s296 = sphi 0, %s294
    %s297 = sphi 0, %s296
    %s311 = sphi 0, %s297
    %s315 = sphi 0, %s315
    %s317 = sphi 0, %s315
    %s318 = sphi 0, %s317
    %s332 = sphi 0, %s318
    %s336 = sphi 0, %s336
    %s338 = sphi 0, %s336
    %s339 = sphi 0, %s338
    %s353 = sphi 0, %s339
    %s357 = sphi 0, %s357
    %s359 = sphi 0, %s357
    %s360 = sphi 0, %s359
    %s374 = sphi 0, %s360
    %s378 = sphi 0, %s378
    %s380 = sphi 0, %s378
    %s381 = sphi 0, %s380
    %s395 = sphi 0, %s381
    %s399 = sphi 0, %s399
    %s401 = sphi 0, %s399
    %s402 = sphi 0, %s401
    %s416 = sphi 0, %s402
    %s422 = sphi 0, %s424
    %s425 = sphi 0, %s422
    %s426 = sphi 0, %s425
    %s442 = sphi 0, %s426
  $region4: #{bert_classifier_forward.1} parent=0 // loop_header_branch
    %27 = sbr.rel (%p25) target = $region8
  $region5: #{bert_classifier_forward.1} parent=0 // loop_body
    %s29 = ssub.s32 %s24, 1
    %s30 = ssub.s32 %s24, 2
    %s31 = sadd.s32 %s24, 1
    %s32 = ssub.s32 %s24, %s31
    %p33 = scmp.eq.s32.totalorder %s32, 0
    %s35 = sadd.s32 %s34, 1
    %s36 = scalar_select %p33, %s34, %s35
    %p39 = pneg %p33
    %p40 = scmp.eq.s32.totalorder %s24, 1
    %p41 = por %p39, %p40
    %p42 = scmp.ne.s32.totalorder %s34, %s37
    %p43 = scmp.eq.s32.totalorder %s24, 0
    %p44 = por %p42, %p43
    %p45 = scmp.ne.s32.totalorder %s34, %s37
    %p46 = scmp.eq.s32.totalorder %s29, 1
    %p47 = por %p45, %p46
    %p48 = scmp.ne.s32.totalorder %s37, %s38
    %p49 = scmp.eq.s32.totalorder %s29, 0
    %p50 = por %p48, %p49
    %p51 = scmp.ne.s32.totalorder %s37, %s38
    %p52 = scmp.eq.s32.totalorder %s30, 1
    %p53 = por %p51, %p52
    %p55 = scmp.ne.s32.totalorder %s38, %s54
    %p56 = scmp.eq.s32.totalorder %s30, 0
    %p57 = por %p55, %p56
    %s58 = ssub.s32 %s24, %s31
    %p59 = scmp.eq.s32.totalorder %s58, 0
    %s61 = sadd.s32 %s60, 1
    %s62 = scalar_select %p59, %s60, %s61
    %p65 = pneg %p59
    %p66 = scmp.eq.s32.totalorder %s24, 1
    %p67 = por %p65, %p66
    %p68 = scmp.ne.s32.totalorder %s60, %s63
    %p69 = scmp.eq.s32.totalorder %s24, 0
    %p70 = por %p68, %p69
    %p71 = scmp.ne.s32.totalorder %s60, %s63
    %p72 = scmp.eq.s32.totalorder %s29, 1
    %p73 = por %p71, %p72
    %p74 = scmp.ne.s32.totalorder %s63, %s64
    %p75 = scmp.eq.s32.totalorder %s29, 0
    %p76 = por %p74, %p75
    %p77 = scmp.ne.s32.totalorder %s63, %s64
    %p78 = scmp.eq.s32.totalorder %s30, 1
    %p79 = por %p77, %p78
    %p81 = scmp.ne.s32.totalorder %s64, %s80
    %p82 = scmp.eq.s32.totalorder %s30, 0
    %p83 = por %p81, %p82
    %s85 = sadd.s32 %s84, 1
    %p88 = scmp.eq.s32.totalorder %s24, 1
    %p89 = scmp.ne.s32.totalorder %s84, %s86
    %p90 = scmp.eq.s32.totalorder %s24, 0
    %p91 = por %p89, %p90
    %p92 = scmp.ne.s32.totalorder %s84, %s86
    %p93 = scmp.eq.s32.totalorder %s29, 1
    %p94 = por %p92, %p93
    %p95 = scmp.ne.s32.totalorder %s86, %s87
    %p96 = scmp.eq.s32.totalorder %s29, 0
    %p97 = por %p95, %p96
    %p98 = scmp.ne.s32.totalorder %s86, %s87
    %p99 = scmp.eq.s32.totalorder %s30, 1
    %p100 = por %p98, %p99
    %p102 = scmp.ne.s32.totalorder %s87, %s101
    %p103 = scmp.eq.s32.totalorder %s30, 0
    %p104 = por %p102, %p103
    %s106 = sadd.s32 %s105, 1
    %p109 = scmp.eq.s32.totalorder %s24, 1
    %p110 = scmp.ne.s32.totalorder %s105, %s107
    %p111 = scmp.eq.s32.totalorder %s24, 0
    %p112 = por %p110, %p111
    %p113 = scmp.ne.s32.totalorder %s105, %s107
    %p114 = scmp.eq.s32.totalorder %s29, 1
    %p115 = por %p113, %p114
    %p116 = scmp.ne.s32.totalorder %s107, %s108
    %p117 = scmp.eq.s32.totalorder %s29, 0
    %p118 = por %p116, %p117
    %p119 = scmp.ne.s32.totalorder %s107, %s108
    %p120 = scmp.eq.s32.totalorder %s30, 1
    %p121 = por %p119, %p120
    %p123 = scmp.ne.s32.totalorder %s108, %s122
    %p124 = scmp.eq.s32.totalorder %s30, 0
    %p125 = por %p123, %p124
    %s127 = sadd.s32 %s126, 1
    %p130 = scmp.eq.s32.totalorder %s24, 1
    %p131 = scmp.ne.s32.totalorder %s126, %s128
    %p132 = scmp.eq.s32.totalorder %s24, 0
    %p133 = por %p131, %p132
    %p134 = scmp.ne.s32.totalorder %s126, %s128
    %p135 = scmp.eq.s32.totalorder %s29, 1
    %p136 = por %p134, %p135
    %p137 = scmp.ne.s32.totalorder %s128, %s129
    %p138 = scmp.eq.s32.totalorder %s29, 0
    %p139 = por %p137, %p138
    %p140 = scmp.ne.s32.totalorder %s128, %s129
    %p141 = scmp.eq.s32.totalorder %s30, 1
    %p142 = por %p140, %p141
    %p144 = scmp.ne.s32.totalorder %s129, %s143
    %p145 = scmp.eq.s32.totalorder %s30, 0
    %p146 = por %p144, %p145
    %s148 = sadd.s32 %s147, 1
    %p151 = scmp.eq.s32.totalorder %s24, 1
    %p152 = scmp.ne.s32.totalorder %s147, %s149
    %p153 = scmp.eq.s32.totalorder %s24, 0
    %p154 = por %p152, %p153
    %p155 = scmp.ne.s32.totalorder %s147, %s149
    %p156 = scmp.eq.s32.totalorder %s29, 1
    %p157 = por %p155, %p156
    %p158 = scmp.ne.s32.totalorder %s149, %s150
    %p159 = scmp.eq.s32.totalorder %s29, 0
    %p160 = por %p158, %p159
    %p161 = scmp.ne.s32.totalorder %s149, %s150
    %p162 = scmp.eq.s32.totalorder %s30, 1
    %p163 = por %p161, %p162
    %p165 = scmp.ne.s32.totalorder %s150, %s164
    %p166 = scmp.eq.s32.totalorder %s30, 0
    %p167 = por %p165, %p166
    %s169 = sadd.s32 %s168, 1
    %p172 = scmp.eq.s32.totalorder %s24, 1
    %p173 = scmp.ne.s32.totalorder %s168, %s170
    %p174 = scmp.eq.s32.totalorder %s24, 0
    %p175 = por %p173, %p174
    %p176 = scmp.ne.s32.totalorder %s168, %s170
    %p177 = scmp.eq.s32.totalorder %s29, 1
    %p178 = por %p176, %p177
    %p179 = scmp.ne.s32.totalorder %s170, %s171
    %p180 = scmp.eq.s32.totalorder %s29, 0
    %p181 = por %p179, %p180
    %p182 = scmp.ne.s32.totalorder %s170, %s171
    %p183 = scmp.eq.s32.totalorder %s30, 1
    %p184 = por %p182, %p183
    %p186 = scmp.ne.s32.totalorder %s171, %s185
    %p187 = scmp.eq.s32.totalorder %s30, 0
    %p188 = por %p186, %p187
    %s190 = sadd.s32 %s189, 1
    %p193 = scmp.eq.s32.totalorder %s24, 1
    %p194 = scmp.ne.s32.totalorder %s189, %s191
    %p195 = scmp.eq.s32.totalorder %s24, 0
    %p196 = por %p194, %p195
    %p197 = scmp.ne.s32.totalorder %s189, %s191
    %p198 = scmp.eq.s32.totalorder %s29, 1
    %p199 = por %p197, %p198
    %p200 = scmp.ne.s32.totalorder %s191, %s192
    %p201 = scmp.eq.s32.totalorder %s29, 0
    %p202 = por %p200, %p201
    %p203 = scmp.ne.s32.totalorder %s191, %s192
    %p204 = scmp.eq.s32.totalorder %s30, 1
    %p205 = por %p203, %p204
    %p207 = scmp.ne.s32.totalorder %s192, %s206
    %p208 = scmp.eq.s32.totalorder %s30, 0
    %p209 = por %p207, %p208
    %s211 = sadd.s32 %s210, 1
    %p214 = scmp.eq.s32.totalorder %s24, 1
    %p215 = scmp.ne.s32.totalorder %s210, %s212
    %p216 = scmp.eq.s32.totalorder %s24, 0
    %p217 = por %p215, %p216
    %p218 = scmp.ne.s32.totalorder %s210, %s212
    %p219 = scmp.eq.s32.totalorder %s29, 1
    %p220 = por %p218, %p219
    %p221 = scmp.ne.s32.totalorder %s212, %s213
    %p222 = scmp.eq.s32.totalorder %s29, 0
    %p223 = por %p221, %p222
    %p224 = scmp.ne.s32.totalorder %s212, %s213
    %p225 = scmp.eq.s32.totalorder %s30, 1
    %p226 = por %p224, %p225
    %p228 = scmp.ne.s32.totalorder %s213, %s227
    %p229 = scmp.eq.s32.totalorder %s30, 0
    %p230 = por %p228, %p229
    %s232 = sadd.s32 %s231, 1
    %p235 = scmp.eq.s32.totalorder %s24, 1
    %p236 = scmp.ne.s32.totalorder %s231, %s233
    %p237 = scmp.eq.s32.totalorder %s24, 0
    %p238 = por %p236, %p237
    %p239 = scmp.ne.s32.totalorder %s231, %s233
    %p240 = scmp.eq.s32.totalorder %s29, 1
    %p241 = por %p239, %p240
    %p242 = scmp.ne.s32.totalorder %s233, %s234
    %p243 = scmp.eq.s32.totalorder %s29, 0
    %p244 = por %p242, %p243
    %p245 = scmp.ne.s32.totalorder %s233, %s234
    %p246 = scmp.eq.s32.totalorder %s30, 1
    %p247 = por %p245, %p246
    %p249 = scmp.ne.s32.totalorder %s234, %s248
    %p250 = scmp.eq.s32.totalorder %s30, 0
    %p251 = por %p249, %p250
    %s253 = sadd.s32 %s252, 1
    %p256 = scmp.eq.s32.totalorder %s24, 1
    %p257 = scmp.ne.s32.totalorder %s252, %s254
    %p258 = scmp.eq.s32.totalorder %s24, 0
    %p259 = por %p257, %p258
    %p260 = scmp.ne.s32.totalorder %s252, %s254
    %p261 = scmp.eq.s32.totalorder %s29, 1
    %p262 = por %p260, %p261
    %p263 = scmp.ne.s32.totalorder %s254, %s255
    %p264 = scmp.eq.s32.totalorder %s29, 0
    %p265 = por %p263, %p264
    %p266 = scmp.ne.s32.totalorder %s254, %s255
    %p267 = scmp.eq.s32.totalorder %s30, 1
    %p268 = por %p266, %p267
    %p270 = scmp.ne.s32.totalorder %s255, %s269
    %p271 = scmp.eq.s32.totalorder %s30, 0
    %p272 = por %p270, %p271
    %s274 = sadd.s32 %s273, 1
    %p277 = scmp.eq.s32.totalorder %s24, 1
    %p278 = scmp.ne.s32.totalorder %s273, %s275
    %p279 = scmp.eq.s32.totalorder %s24, 0
    %p280 = por %p278, %p279
    %p281 = scmp.ne.s32.totalorder %s273, %s275
    %p282 = scmp.eq.s32.totalorder %s29, 1
    %p283 = por %p281, %p282
    %p284 = scmp.ne.s32.totalorder %s275, %s276
    %p285 = scmp.eq.s32.totalorder %s29, 0
    %p286 = por %p284, %p285
    %p287 = scmp.ne.s32.totalorder %s275, %s276
    %p288 = scmp.eq.s32.totalorder %s30, 1
    %p289 = por %p287, %p288
    %p291 = scmp.ne.s32.totalorder %s276, %s290
    %p292 = scmp.eq.s32.totalorder %s30, 0
    %p293 = por %p291, %p292
    %s295 = sadd.s32 %s294, 1
    %p298 = scmp.eq.s32.totalorder %s24, 1
    %p299 = scmp.ne.s32.totalorder %s294, %s296
    %p300 = scmp.eq.s32.totalorder %s24, 0
    %p301 = por %p299, %p300
    %p302 = scmp.ne.s32.totalorder %s294, %s296
    %p303 = scmp.eq.s32.totalorder %s29, 1
    %p304 = por %p302, %p303
    %p305 = scmp.ne.s32.totalorder %s296, %s297
    %p306 = scmp.eq.s32.totalorder %s29, 0
    %p307 = por %p305, %p306
    %p308 = scmp.ne.s32.totalorder %s296, %s297
    %p309 = scmp.eq.s32.totalorder %s30, 1
    %p310 = por %p308, %p309
    %p312 = scmp.ne.s32.totalorder %s297, %s311
    %p313 = scmp.eq.s32.totalorder %s30, 0
    %p314 = por %p312, %p313
    %s316 = sadd.s32 %s315, 1
    %p319 = scmp.eq.s32.totalorder %s24, 1
    %p320 = scmp.ne.s32.totalorder %s315, %s317
    %p321 = scmp.eq.s32.totalorder %s24, 0
    %p322 = por %p320, %p321
    %p323 = scmp.ne.s32.totalorder %s315, %s317
    %p324 = scmp.eq.s32.totalorder %s29, 1
    %p325 = por %p323, %p324
    %p326 = scmp.ne.s32.totalorder %s317, %s318
    %p327 = scmp.eq.s32.totalorder %s29, 0
    %p328 = por %p326, %p327
    %p329 = scmp.ne.s32.totalorder %s317, %s318
    %p330 = scmp.eq.s32.totalorder %s30, 1
    %p331 = por %p329, %p330
    %p333 = scmp.ne.s32.totalorder %s318, %s332
    %p334 = scmp.eq.s32.totalorder %s30, 0
    %p335 = por %p333, %p334
    %s337 = sadd.s32 %s336, 1
    %p340 = scmp.eq.s32.totalorder %s24, 1
    %p341 = scmp.ne.s32.totalorder %s336, %s338
    %p342 = scmp.eq.s32.totalorder %s24, 0
    %p343 = por %p341, %p342
    %p344 = scmp.ne.s32.totalorder %s336, %s338
    %p345 = scmp.eq.s32.totalorder %s29, 1
    %p346 = por %p344, %p345
    %p347 = scmp.ne.s32.totalorder %s338, %s339
    %p348 = scmp.eq.s32.totalorder %s29, 0
    %p349 = por %p347, %p348
    %p350 = scmp.ne.s32.totalorder %s338, %s339
    %p351 = scmp.eq.s32.totalorder %s30, 1
    %p352 = por %p350, %p351
    %p354 = scmp.ne.s32.totalorder %s339, %s353
    %p355 = scmp.eq.s32.totalorder %s30, 0
    %p356 = por %p354, %p355
    %s358 = sadd.s32 %s357, 1
    %p361 = scmp.eq.s32.totalorder %s24, 1
    %p362 = scmp.ne.s32.totalorder %s357, %s359
    %p363 = scmp.eq.s32.totalorder %s24, 0
    %p364 = por %p362, %p363
    %p365 = scmp.ne.s32.totalorder %s357, %s359
    %p366 = scmp.eq.s32.totalorder %s29, 1
    %p367 = por %p365, %p366
    %p368 = scmp.ne.s32.totalorder %s359, %s360
    %p369 = scmp.eq.s32.totalorder %s29, 0
    %p370 = por %p368, %p369
    %p371 = scmp.ne.s32.totalorder %s359, %s360
    %p372 = scmp.eq.s32.totalorder %s30, 1
    %p373 = por %p371, %p372
    %p375 = scmp.ne.s32.totalorder %s360, %s374
    %p376 = scmp.eq.s32.totalorder %s30, 0
    %p377 = por %p375, %p376
    %s379 = sadd.s32 %s378, 1
    %p382 = scmp.eq.s32.totalorder %s24, 1
    %p383 = scmp.ne.s32.totalorder %s378, %s380
    %p384 = scmp.eq.s32.totalorder %s24, 0
    %p385 = por %p383, %p384
    %p386 = scmp.ne.s32.totalorder %s378, %s380
    %p387 = scmp.eq.s32.totalorder %s29, 1
    %p388 = por %p386, %p387
    %p389 = scmp.ne.s32.totalorder %s380, %s381
    %p390 = scmp.eq.s32.totalorder %s29, 0
    %p391 = por %p389, %p390
    %p392 = scmp.ne.s32.totalorder %s380, %s381
    %p393 = scmp.eq.s32.totalorder %s30, 1
    %p394 = por %p392, %p393
    %p396 = scmp.ne.s32.totalorder %s381, %s395
    %p397 = scmp.eq.s32.totalorder %s30, 0
    %p398 = por %p396, %p397
    %s400 = sadd.s32 %s399, 1
    %p403 = scmp.eq.s32.totalorder %s24, 1
    %p404 = scmp.ne.s32.totalorder %s399, %s401
    %p405 = scmp.eq.s32.totalorder %s24, 0
    %p406 = por %p404, %p405
    %p407 = scmp.ne.s32.totalorder %s399, %s401
    %p408 = scmp.eq.s32.totalorder %s29, 1
    %p409 = por %p407, %p408
    %p410 = scmp.ne.s32.totalorder %s401, %s402
    %p411 = scmp.eq.s32.totalorder %s29, 0
    %p412 = por %p410, %p411
    %p413 = scmp.ne.s32.totalorder %s401, %s402
    %p414 = scmp.eq.s32.totalorder %s30, 1
    %p415 = por %p413, %p414
    %p417 = scmp.ne.s32.totalorder %s402, %s416
    %p418 = scmp.eq.s32.totalorder %s30, 0
    %p419 = por %p417, %p418
    %s420 = ssub.s32 %s24, %s31
    %p421 = scmp.eq.s32.totalorder %s420, 0
    %s423 = sadd.s32 %s422, 1
    %s424 = scalar_select %p421, %s422, %s423
    %p427 = pneg %p421
    %p428 = scmp.eq.s32.totalorder %s24, 1
    %p429 = por %p427, %p428
    %p430 = scmp.ne.s32.totalorder %s422, %s425
    %p431 = scmp.eq.s32.totalorder %s24, 0
    %p432 = por %p430, %p431
    %p433 = scmp.ne.s32.totalorder %s422, %s425
    %p434 = scmp.eq.s32.totalorder %s29, 1
    %p435 = por %p433, %p434
    %p436 = scmp.ne.s32.totalorder %s425, %s426
    %p437 = scmp.eq.s32.totalorder %s29, 0
    %p438 = por %p436, %p437
    %p439 = scmp.ne.s32.totalorder %s425, %s426
    %p440 = scmp.eq.s32.totalorder %s30, 1
    %p441 = por %p439, %p440
    %p443 = scmp.ne.s32.totalorder %s426, %s442
    %p444 = scmp.eq.s32.totalorder %s30, 0
    %p445 = por %p443, %p444
    %p446 = scmp.le.s32.totalorder 1, %s24
    %p447 = scmp.lt.s32.totalorder %s24, 3
    %p448 = pnand %p446, %p447
    %p449 = pneg %p448
    // Predicated region
    $region9: #{bert_classifier_forward.1} parent=5 // pred_check
      _
    $region10: #{bert_classifier_forward.1} parent=5 // pred_check_branch
      %451 = sbr.rel (%p448) target = $region12
    $region11: #{bert_classifier_forward.1} parent=5 // pred_region
      %s452 = ssub.s32 %s24, 1
      // Predicated region
      $region13: #{bert_classifier_forward.1} parent=11 // pred_check
        %p453 = pneg %p97
      $region14: #{bert_classifier_forward.1} parent=11 // pred_check_branch
        %455 = sbr.rel (%p453) target = $region16
      $region15: #{bert_classifier_forward.1} parent=11 // pred_region
        _
      $region16: #{bert_classifier_forward.1} parent=11 // pred_fallthru
        _
      // Predicated region
      $region17: #{bert_classifier_forward.1} parent=11 // pred_check
        %p456 = pneg %p118
      $region18: #{bert_classifier_forward.1} parent=11 // pred_check_branch
        %458 = sbr.rel (%p456) target = $region20
      $region19: #{bert_classifier_forward.1} parent=11 // pred_region
        _
      $region20: #{bert_classifier_forward.1} parent=11 // pred_fallthru
        _
      // Predicated region
      $region21: #{bert_classifier_forward.1} parent=11 // pred_check
        %p459 = pneg %p139
      $region22: #{bert_classifier_forward.1} parent=11 // pred_check_branch
        %461 = sbr.rel (%p459) target = $region24
      $region23: #{bert_classifier_forward.1} parent=11 // pred_region
        _
      $region24: #{bert_classifier_forward.1} parent=11 // pred_fallthru
        _
      // Predicated region
      $region25: #{bert_classifier_forward.1} parent=11 // pred_check
        %p462 = pneg %p160
      $region26: #{bert_classifier_forward.1} parent=11 // pred_check_branch
        %464 = sbr.rel (%p462) target = $region28
      $region27: #{bert_classifier_forward.1} parent=11 // pred_region
        _
      $region28: #{bert_classifier_forward.1} parent=11 // pred_fallthru
        _
      // Predicated region
      $region29: #{bert_classifier_forward.1} parent=11 // pred_check
        %p465 = pneg %p181
      $region30: #{bert_classifier_forward.1} parent=11 // pred_check_branch
        %467 = sbr.rel (%p465) target = $region32
      $region31: #{bert_classifier_forward.1} parent=11 // pred_region
        _
      $region32: #{bert_classifier_forward.1} parent=11 // pred_fallthru
        _
      // Predicated region
      $region33: #{bert_classifier_forward.1} parent=11 // pred_check
        %p468 = pneg %p202
      $region34: #{bert_classifier_forward.1} parent=11 // pred_check_branch
        %470 = sbr.rel (%p468) target = $region36
      $region35: #{bert_classifier_forward.1} parent=11 // pred_region
        _
      $region36: #{bert_classifier_forward.1} parent=11 // pred_fallthru
        _
      // Predicated region
      $region37: #{bert_classifier_forward.1} parent=11 // pred_check
        %p471 = pneg %p223
      $region38: #{bert_classifier_forward.1} parent=11 // pred_check_branch
        %473 = sbr.rel (%p471) target = $region40
      $region39: #{bert_classifier_forward.1} parent=11 // pred_region
        _
      $region40: #{bert_classifier_forward.1} parent=11 // pred_fallthru
        _
      // Predicated region
      $region41: #{bert_classifier_forward.1} parent=11 // pred_check
        %p474 = pneg %p244
      $region42: #{bert_classifier_forward.1} parent=11 // pred_check_branch
        %476 = sbr.rel (%p474) target = $region44
      $region43: #{bert_classifier_forward.1} parent=11 // pred_region
        _
      $region44: #{bert_classifier_forward.1} parent=11 // pred_fallthru
        _
      // Predicated region
      $region45: #{bert_classifier_forward.1} parent=11 // pred_check
        %p477 = pneg %p265
      $region46: #{bert_classifier_forward.1} parent=11 // pred_check_branch
        %479 = sbr.rel (%p477) target = $region48
      $region47: #{bert_classifier_forward.1} parent=11 // pred_region
        _
      $region48: #{bert_classifier_forward.1} parent=11 // pred_fallthru
        _
      // Predicated region
      $region49: #{bert_classifier_forward.1} parent=11 // pred_check
        %p480 = pneg %p286
      $region50: #{bert_classifier_forward.1} parent=11 // pred_check_branch
        %482 = sbr.rel (%p480) target = $region52
      $region51: #{bert_classifier_forward.1} parent=11 // pred_region
        _
      $region52: #{bert_classifier_forward.1} parent=11 // pred_fallthru
        _
      // Predicated region
      $region53: #{bert_classifier_forward.1} parent=11 // pred_check
        %p483 = pneg %p307
      $region54: #{bert_classifier_forward.1} parent=11 // pred_check_branch
        %485 = sbr.rel (%p483) target = $region56
      $region55: #{bert_classifier_forward.1} parent=11 // pred_region
        _
      $region56: #{bert_classifier_forward.1} parent=11 // pred_fallthru
        _
      // Predicated region
      $region57: #{bert_classifier_forward.1} parent=11 // pred_check
        %p486 = pneg %p328
      $region58: #{bert_classifier_forward.1} parent=11 // pred_check_branch
        %488 = sbr.rel (%p486) target = $region60
      $region59: #{bert_classifier_forward.1} parent=11 // pred_region
        _
      $region60: #{bert_classifier_forward.1} parent=11 // pred_fallthru
        _
      // Predicated region
      $region61: #{bert_classifier_forward.1} parent=11 // pred_check
        %p489 = pneg %p349
      $region62: #{bert_classifier_forward.1} parent=11 // pred_check_branch
        %491 = sbr.rel (%p489) target = $region64
      $region63: #{bert_classifier_forward.1} parent=11 // pred_region
        _
      $region64: #{bert_classifier_forward.1} parent=11 // pred_fallthru
        _
      // Predicated region
      $region65: #{bert_classifier_forward.1} parent=11 // pred_check
        %p492 = pneg %p370
      $region66: #{bert_classifier_forward.1} parent=11 // pred_check_branch
        %494 = sbr.rel (%p492) target = $region68
      $region67: #{bert_classifier_forward.1} parent=11 // pred_region
        _
      $region68: #{bert_classifier_forward.1} parent=11 // pred_fallthru
        _
      // Predicated region
      $region69: #{bert_classifier_forward.1} parent=11 // pred_check
        %p495 = pneg %p391
      $region70: #{bert_classifier_forward.1} parent=11 // pred_check_branch
        %497 = sbr.rel (%p495) target = $region72
      $region71: #{bert_classifier_forward.1} parent=11 // pred_region
        _
      $region72: #{bert_classifier_forward.1} parent=11 // pred_fallthru
        _
      // Predicated region
      $region73: #{bert_classifier_forward.1} parent=11 // pred_check
        %p498 = pneg %p412
      $region74: #{bert_classifier_forward.1} parent=11 // pred_check_branch
        %500 = sbr.rel (%p498) target = $region76
      $region75: #{bert_classifier_forward.1} parent=11 // pred_region
        _
      $region76: #{bert_classifier_forward.1} parent=11 // pred_fallthru
        _
    $region12: #{bert_classifier_forward.1} parent=5 // pred_fallthru
      _
    %p501 = scmp.lt.s32.totalorder %s24, 2
    // Predicated region
    $region77: #{bert_classifier_forward.1} parent=5 // pred_check
      %p502 = pneg %p501
    $region78: #{bert_classifier_forward.1} parent=5 // pred_check_branch
      %504 = sbr.rel (%p502) target = $region80
    $region79: #{bert_classifier_forward.1} parent=5 // pred_region
      // Predicated region
      $region81: #{bert_classifier_forward.1} parent=79 // pred_check
        %p505 = pneg %p44
      $region82: #{bert_classifier_forward.1} parent=79 // pred_check_branch
        %507 = sbr.rel (%p505) target = $region84
      $region83: #{bert_classifier_forward.1} parent=79 // pred_region
        %p508 = scmp.lt.s32.totalorder %s24, 1
        %s509 = scalar_select %p508, %s24, 1
        %s510 = smul.addr %s509, 8
        %s511 = scalar_lea.vmem %s0, %s510
      $region84: #{bert_classifier_forward.1} parent=79 // pred_fallthru
        _
      // Predicated region
      $region85: #{bert_classifier_forward.1} parent=79 // pred_check
        %p512 = pneg %p70
      $region86: #{bert_classifier_forward.1} parent=79 // pred_check_branch
        %514 = sbr.rel (%p512) target = $region88
      $region87: #{bert_classifier_forward.1} parent=79 // pred_region
        %p515 = scmp.lt.s32.totalorder %s24, 1
        %s516 = scalar_select %p515, %s24, 1
        %s517 = scalar_lea.vmem %s1, %s516
      $region88: #{bert_classifier_forward.1} parent=79 // pred_fallthru
        _
    $region80: #{bert_classifier_forward.1} parent=5 // pred_fallthru
      _
    %p518 = scmp.le.s32.totalorder 1, %s24
    %p519 = scmp.lt.s32.totalorder %s24, 3
    %p520 = pnand %p518, %p519
    %p521 = pneg %p520
    // Predicated region
    $region89: #{bert_classifier_forward.1} parent=5 // pred_check
      _
    $region90: #{bert_classifier_forward.1} parent=5 // pred_check_branch
      %523 = sbr.rel (%p520) target = $region92
    $region91: #{bert_classifier_forward.1} parent=5 // pred_region
      %s524 = ssub.s32 %s24, 1
      %p525 = scmp.lt.s32.totalorder %s29, 1
      %s526 = scalar_select %p525, %s29, 1
      %s527 = smul.addr %s526, 8
      %s528 = scalar_lea.vmem %s0, %s527
      %p529 = pneg %p50
      %p530 = pneg %p47
      %p531 = scmp.lt.s32.totalorder %s29, 1
      %s532 = scalar_select %p531, %s29, 1
      %s533 = scalar_lea.vmem %s1, %s532
      %p534 = pneg %p76
      %p535 = pneg %p73
      %p536 = pneg %p97
      %p537 = pneg %p94
      %p538 = pneg %p118
      %p539 = pneg %p115
      %p540 = pneg %p139
      %p541 = pneg %p136
      %p542 = pneg %p160
      %p543 = pneg %p157
      %p544 = pneg %p181
      %p545 = pneg %p178
      %p546 = pneg %p202
      %p547 = pneg %p199
      %p548 = pneg %p223
      %p549 = pneg %p220
      %p550 = pneg %p244
      %p551 = pneg %p241
      %p552 = pneg %p265
      %p553 = pneg %p262
      %p554 = pneg %p286
      %p555 = pneg %p283
      %p556 = pneg %p307
      %p557 = pneg %p304
      %p558 = pneg %p328
      %p559 = pneg %p325
      %p560 = pneg %p349
      %p561 = pneg %p346
      %p562 = pneg %p370
      %p563 = pneg %p367
      %p564 = pneg %p391
      %p565 = pneg %p388
      %p566 = pneg %p412
      %p567 = pneg %p409
      %p568 = pneg %p438
      %p569 = pneg %p435
      %p570 = scmp.lt.s32.totalorder %s29, 1
      %s571 = scalar_select %p570, %s29, 1
      %s572 = smul.addr %s571, 8
      %s573 = scalar_lea.vmem %s18, %s572
      %p574 = scmp.lt.s32.totalorder %s29, 1
      %s575 = scalar_select %p574, %s29, 1
      %s576 = smul.addr %s575, 8
      %s577 = scalar_lea.vmem %s0, %s576
      %p578 = scmp.lt.s32.totalorder %s29, 1
      %s579 = scalar_select %p578, %s29, 1
      %s580 = scalar_lea.vmem %s1, %s579
      %p581 = scmp.lt.s32.totalorder %s29, 1
      %s582 = scalar_select %p581, %s29, 1
      %s583 = smul.addr %s582, 8
      %s584 = scalar_lea.vmem %s18, %s583
      %v585 = vld [vmem:[%s577] sm:$0xff]
      %v586 = vld [vmem:[%s580] sm:$0x1]
      %v587 = vld [vmem:[%s2] sm:$0x1]
      %v588 = vld [vmem:[%s3] sm:$0x1]
      %vm589 = vcmask 261120
      %v590 = vsel %vm589, %v585, 0.0
      %591 = vadd.xlane.f32.xlu0 %v590
      %v592 = vpop.xlane.xlu0 %591
      %v593 = vrcp.pop 32.0
      %v594 = vmul.f32 %v592, %v593
      %v595 = vsub.f32 %v585, %v594
      %v596 = vmul.f32 %v595, %v595
      %v597 = vsel %vm589, %v596, 0.0
      %598 = vadd.xlane.f32.xlu0 %v597
      %v599 = vpop.xlane.xlu0 %598
      %v600 = vmul.f32 %v599, %v593
      %v601 = vadd.f32 %v600, 1e-12
      %v602 = vrsqrt.pop %v601
      %v603 = vmul.f32 %v595, %v602
      %v605 = vlaneseq
      %v606 = vshrl.u32 %v605, 7
      %v607 = vsub.s32 0, %v606
      %v608 = vrot.slane %v587, %v607
      %v610 = vmul.f32 %v603, %v608
      %v612 = vlaneseq
      %v613 = vshrl.u32 %v612, 7
      %v614 = vsub.s32 0, %v613
      %v615 = vrot.slane %v588, %v614
      %v617 = vadd.f32 %v610, %v615
      %v618 = vld [vmem:[%s4] sm:$0xff]
      %v619 = vld [vmem:[%s4 + $0x8] sm:$0xff]
      %v620 = vld [vmem:[%s4 + $0x10] sm:$0xff]
      %v621 = vld [vmem:[%s4 + $0x18] sm:$0xff]
      %v622 = vld [vmem:[%s5] sm:$0x1]
      %v624 = vlaneseq
      %v625 = vshrl.u32 %v624, 7
      %v626 = vsub.s32 0, %v625
      %v627 = vrot.slane %v622, %v626
      %v630 = vsel %vm589, %v617, 0
      %632 = vmatprep.subr.mxu0 0.0
      %633 = vmatpush1.msra.mxu0 %v618
      %634 = vmatprep.subr.mxu0 0.0
      %635 = vmatpush1.msra.mxu0 %v619
      %636 = vmatprep.subr.mxu0 0.0
      %637 = vmatpush1.msra.mxu0 %v620
      %638 = vmatprep.subr.mxu0 0.0
      %639 = vmatpush1.msra.mxu0 %v621
      %640 = vmatprep.subr.mxu0 0.0
      %641 = vmatpush1.msra.mxu0 0.0
      %642 = vmatprep.subr.mxu0 0.0
      %643 = vmatpush1.msra.mxu0 0.0
      %644 = vmatprep.subr.mxu0 0.0
      %645 = vmatpush1.msra.mxu0 0.0
      %646 = vmatprep.subr.mxu0 0.0
      %647 = vmatpush1.msra.mxu0 0.0
      %648 = vmatprep.subr.mxu0 0.0
      %649 = vmatpush1.msra.mxu0 0.0
      %650 = vmatprep.subr.mxu0 0.0
      %651 = vmatpush1.msra.mxu0 0.0
      %652 = vmatprep.subr.mxu0 0.0
      %653 = vmatpush1.msra.mxu0 0.0
      %654 = vmatprep.subr.mxu0 0.0
      %655 = vmatpush1.msra.mxu0 0.0
      %656 = vmatprep.subr.mxu0 0.0
      %657 = vmatpush1.msra.mxu0 0.0
      %658 = vmatprep.subr.mxu0 0.0
      %659 = vmatpush1.msra.mxu0 0.0
      %660 = vmatprep.subr.mxu0 0.0
      %661 = vmatpush1.msra.mxu0 0.0
      %662 = vmatprep.subr.mxu0 0.0
      %663 = vmatpush1.msra.mxu0 0.0
      %664 = vmatprep.subr.mxu0 0.0
      %665 = vmatpush1.msra.mxu0 0.0
      %666 = vmatprep.subr.mxu0 0.0
      %667 = vmatpush1.msra.mxu0 0.0
      %668 = vmatprep.subr.mxu0 0.0
      %669 = vmatpush1.msra.mxu0 0.0
      %670 = vmatprep.subr.mxu0 0.0
      %671 = vmatpush1.msra.mxu0 0.0
      %672 = vmatprep.subr.mxu0 0.0
      %673 = vmatpush1.msra.mxu0 0.0
      %674 = vmatprep.subr.mxu0 0.0
      %675 = vmatpush1.msra.mxu0 0.0
      %676 = vmatprep.subr.mxu0 0.0
      %677 = vmatpush1.msra.mxu0 0.0
      %678 = vmatprep.subr.mxu0 0.0
      %679 = vmatpush1.msra.mxu0 0.0
      %680 = vmatprep.subr.mxu0 0.0
      %681 = vmatpush1.msra.mxu0 0.0
      %682 = vmatprep.subr.mxu0 0.0
      %683 = vmatpush1.msra.mxu0 0.0
      %684 = vmatprep.subr.mxu0 0.0
      %685 = vmatpush1.msra.mxu0 0.0
      %686 = vmatprep.subr.mxu0 0.0
      %687 = vmatpush1.msra.mxu0 0.0
      %688 = vmatprep.subr.mxu0 0.0
      %689 = vmatpush1.msra.mxu0 0.0
      %690 = vmatprep.subr.mxu0 0.0
      %691 = vmatpush1.msra.mxu0 0.0
      %692 = vmatprep.subr.mxu0 0.0
      %693 = vmatpush1.msra.mxu0 0.0
      %694 = vmatprep.subr.mxu0 0.0
      %695 = vmatpush1.msra.mxu0 0.0
      %696 = vmatprep.mubr.f32.mxu0 0.0
      %697 = vmatmul.mubr.f32.gmra.mrb[0].mxu0 %v630
      %v698 = vpop.f32.mrb[0].mxu0
      %v699 = vadd.f32 %v627, %v698
      %v700 = vpop.f32.mrb[0].mxu0
      %701 = vdwg.mxu0
      %v702 = vld [vmem:[%s6] sm:$0xff]
      %v703 = vld [vmem:[%s6 + $0x8] sm:$0xff]
      %v704 = vld [vmem:[%s6 + $0x10] sm:$0xff]
      %v705 = vld [vmem:[%s6 + $0x18] sm:$0xff]
      %v706 = vld [vmem:[%s7] sm:$0x1]
      %v708 = vlaneseq
      %v709 = vshrl.u32 %v708, 7
      %v710 = vsub.s32 0, %v709
      %v711 = vrot.slane %v586, %v710
      %714 = vrot.lane.b32.xlu0 %v699, 96
      %v715 = vpop.permute.xlu0 %714
      %vm716 = vcmask 130048
      %v717 = vsel %vm716, %v699, 0
      %v719 = vsel %vm716, %v715, 0
      %721 = vmatprep.subr.mxu0 0.0
      %722 = vmatpush1.xpose.msra.mxu0 %v719
      %723 = vmatprep.subr.mxu0 0.0
      %724 = vmatpush1.xpose.msra.mxu0 0.0
      %725 = vmatprep.subr.mxu0 0.0
      %726 = vmatpush1.xpose.msra.mxu0 0.0
      %727 = vmatprep.subr.mxu0 0.0
      %728 = vmatpush1.xpose.msra.mxu0 0.0
      %729 = vmatprep.subr.mxu0 0.0
      %730 = vmatpush1.xpose.msra.mxu0 0.0
      %731 = vmatprep.subr.mxu0 0.0
      %732 = vmatpush1.xpose.msra.mxu0 0.0
      %733 = vmatprep.subr.mxu0 0.0
      %734 = vmatpush1.xpose.msra.mxu0 0.0
      %735 = vmatprep.subr.mxu0 0.0
      %736 = vmatpush1.xpose.msra.mxu0 0.0
      %737 = vmatprep.subr.mxu0 0.0
      %738 = vmatpush1.xpose.msra.mxu0 0.0
      %739 = vmatprep.subr.mxu0 0.0
      %740 = vmatpush1.xpose.msra.mxu0 0.0
      %741 = vmatprep.subr.mxu0 0.0
      %742 = vmatpush1.xpose.msra.mxu0 0.0
      %743 = vmatprep.subr.mxu0 0.0
      %744 = vmatpush1.xpose.msra.mxu0 0.0
      %745 = vmatprep.subr.mxu0 0.0
      %746 = vmatpush1.xpose.msra.mxu0 0.0
      %747 = vmatprep.subr.mxu0 0.0
      %748 = vmatpush1.xpose.msra.mxu0 0.0
      %749 = vmatprep.subr.mxu0 0.0
      %750 = vmatpush1.xpose.msra.mxu0 0.0
      %751 = vmatprep.subr.mxu0 0.0
      %752 = vmatpush1.xpose.msra.mxu0 0.0
      %753 = vmatprep.subr.mxu0 0.0
      %754 = vmatpush1.xpose.msra.mxu0 0.0
      %755 = vmatprep.subr.mxu0 0.0
      %756 = vmatpush1.xpose.msra.mxu0 0.0
      %757 = vmatprep.subr.mxu0 0.0
      %758 = vmatpush1.xpose.msra.mxu0 0.0
      %759 = vmatprep.subr.mxu0 0.0
      %760 = vmatpush1.xpose.msra.mxu0 0.0
      %761 = vmatprep.subr.mxu0 0.0
      %762 = vmatpush1.xpose.msra.mxu0 0.0
      %763 = vmatprep.subr.mxu0 0.0
      %764 = vmatpush1.xpose.msra.mxu0 0.0
      %765 = vmatprep.subr.mxu0 0.0
      %766 = vmatpush1.xpose.msra.mxu0 0.0
      %767 = vmatprep.subr.mxu0 0.0
      %768 = vmatpush1.xpose.msra.mxu0 0.0
      %769 = vmatprep.subr.mxu0 0.0
      %770 = vmatpush1.xpose.msra.mxu0 0.0
      %771 = vmatprep.subr.mxu0 0.0
      %772 = vmatpush1.xpose.msra.mxu0 0.0
      %773 = vmatprep.subr.mxu0 0.0
      %774 = vmatpush1.xpose.msra.mxu0 0.0
      %775 = vmatprep.subr.mxu0 0.0
      %776 = vmatpush1.xpose.msra.mxu0 0.0
      %777 = vmatprep.subr.mxu0 0.0
      %778 = vmatpush1.xpose.msra.mxu0 0.0
      %779 = vmatprep.subr.mxu0 0.0
      %780 = vmatpush1.xpose.msra.mxu0 0.0
      %781 = vmatprep.subr.mxu0 0.0
      %782 = vmatpush1.xpose.msra.mxu0 0.0
      %783 = vmatprep.subr.mxu0 0.0
      %784 = vmatpush1.xpose.msra.mxu0 0.0
      %785 = vmatprep.mubr.f32.mxu0 0.0
      %786 = vmatmul.mubr.f32.gmra.mrb[0].mxu0 %v717
      %v787 = vpop.f32.mrb[0].mxu0
      %v788 = vadd.f32 %v711, %v787
      %v789 = vpop.f32.mrb[0].mxu0
      %790 = vdwg.mxu0
      %vm791 = vcmask 64512
      %v792 = vsel %vm791, %v788, -inf
      %793 = vmax.xlane.f32.xlu0 %v792
      %v794 = vpop.xlane.xlu0 %793
      %v795 = vsub.f32 %v788, %v794
      %v796 = vmul.f32 %v795, 1.442695
      %v797 = vpow.pop %v796
      %v798 = vsel %vm791, %v797, 0.0
      %799 = vadd.xlane.f32.xlu0 %v798
      %v800 = vpop.xlane.xlu0 %799
      %v801 = vrcp.pop %v800
      %v802 = vmul.f32 %v797, %v801
      %803 = vrot.lane.b32.xlu0 %v699, 64
      %v804 = vpop.permute.xlu0 %803
      %v807 = vsel %vm791, %v802, 0
      %809 = vmatprep.subr.mxu0 0.0
      %810 = vmatpush1.msra.mxu0 %v804
      %811 = vmatprep.subr.mxu0 0.0
      %812 = vmatpush1.msra.mxu0 0.0
      %813 = vmatprep.subr.mxu0 0.0
      %814 = vmatpush1.msra.mxu0 0.0
      %815 = vmatprep.subr.mxu0 0.0
      %816 = vmatpush1.msra.mxu0 0.0
      %817 = vmatprep.subr.mxu0 0.0
      %818 = vmatpush1.msra.mxu0 0.0
      %819 = vmatprep.subr.mxu0 0.0
      %820 = vmatpush1.msra.mxu0 0.0
      %821 = vmatprep.subr.mxu0 0.0
      %822 = vmatpush1.msra.mxu0 0.0
      %823 = vmatprep.subr.mxu0 0.0
      %824 = vmatpush1.msra.mxu0 0.0
      %825 = vmatprep.subr.mxu0 0.0
      %826 = vmatpush1.msra.mxu0 0.0
      %827 = vmatprep.subr.mxu0 0.0
      %828 = vmatpush1.msra.mxu0 0.0
      %829 = vmatprep.subr.mxu0 0.0
      %830 = vmatpush1.msra.mxu0 0.0
      %831 = vmatprep.subr.mxu0 0.0
      %832 = vmatpush1.msra.mxu0 0.0
      %833 = vmatprep.subr.mxu0 0.0
      %834 = vmatpush1.msra.mxu0 0.0
      %835 = vmatprep.subr.mxu0 0.0
      %836 = vmatpush1.msra.mxu0 0.0
      %837 = vmatprep.subr.mxu0 0.0
      %838 = vmatpush1.msra.mxu0 0.0
      %839 = vmatprep.subr.mxu0 0.0
      %840 = vmatpush1.msra.mxu0 0.0
      %841 = vmatprep.subr.mxu0 0.0
      %842 = vmatpush1.msra.mxu0 0.0
      %843 = vmatprep.subr.mxu0 0.0
      %844 = vmatpush1.msra.mxu0 0.0
      %845 = vmatprep.subr.mxu0 0.0
      %846 = vmatpush1.msra.mxu0 0.0
      %847 = vmatprep.subr.mxu0 0.0
      %848 = vmatpush1.msra.mxu0 0.0
      %849 = vmatprep.subr.mxu0 0.0
      %850 = vmatpush1.msra.mxu0 0.0
      %851 = vmatprep.subr.mxu0 0.0
      %852 = vmatpush1.msra.mxu0 0.0
      %853 = vmatprep.subr.mxu0 0.0
      %854 = vmatpush1.msra.mxu0 0.0
      %855 = vmatprep.subr.mxu0 0.0
      %856 = vmatpush1.msra.mxu0 0.0
      %857 = vmatprep.subr.mxu0 0.0
      %858 = vmatpush1.msra.mxu0 0.0
      %859 = vmatprep.subr.mxu0 0.0
      %860 = vmatpush1.msra.mxu0 0.0
      %861 = vmatprep.subr.mxu0 0.0
      %862 = vmatpush1.msra.mxu0 0.0
      %863 = vmatprep.subr.mxu0 0.0
      %864 = vmatpush1.msra.mxu0 0.0
      %865 = vmatprep.subr.mxu0 0.0
      %866 = vmatpush1.msra.mxu0 0.0
      %867 = vmatprep.subr.mxu0 0.0
      %868 = vmatpush1.msra.mxu0 0.0
      %869 = vmatprep.subr.mxu0 0.0
      %870 = vmatpush1.msra.mxu0 0.0
      %871 = vmatprep.subr.mxu0 0.0
      %872 = vmatpush1.msra.mxu0 0.0
      %873 = vmatprep.mubr.f32.mxu0 0.0
      %874 = vmatmul.mubr.f32.gmra.mrb[0].mxu0 %v807
      %v875 = vpop.f32.mrb[0].mxu0
      %v876 = vadd.f32 0.0, %v875
      %v877 = vpop.f32.mrb[0].mxu0
      %878 = vdwg.mxu0
      %v880 = vsel %vm716, %v876, 0
      %882 = vmatprep.subr.mxu0 0.0
      %883 = vmatpush1.msra.mxu0 %v702
      %884 = vmatprep.subr.mxu0 0.0
      %885 = vmatpush1.msra.mxu0 %v703
      %886 = vmatprep.subr.mxu0 0.0
      %887 = vmatpush1.msra.mxu0 0.0
      %888 = vmatprep.subr.mxu0 0.0
      %889 = vmatpush1.msra.mxu0 0.0
      %890 = vmatprep.subr.mxu0 0.0
      %891 = vmatpush1.msra.mxu0 0.0
      %892 = vmatprep.subr.mxu0 0.0
      %893 = vmatpush1.msra.mxu0 0.0
      %894 = vmatprep.subr.mxu0 0.0
      %895 = vmatpush1.msra.mxu0 0.0
      %896 = vmatprep.subr.mxu0 0.0
      %897 = vmatpush1.msra.mxu0 0.0
      %898 = vmatprep.subr.mxu0 0.0
      %899 = vmatpush1.msra.mxu0 0.0
      %900 = vmatprep.subr.mxu0 0.0
      %901 = vmatpush1.msra.mxu0 0.0
      %902 = vmatprep.subr.mxu0 0.0
      %903 = vmatpush1.msra.mxu0 0.0
      %904 = vmatprep.subr.mxu0 0.0
      %905 = vmatpush1.msra.mxu0 0.0
      %906 = vmatprep.subr.mxu0 0.0
      %907 = vmatpush1.msra.mxu0 0.0
      %908 = vmatprep.subr.mxu0 0.0
      %909 = vmatpush1.msra.mxu0 0.0
      %910 = vmatprep.subr.mxu0 0.0
      %911 = vmatpush1.msra.mxu0 0.0
      %912 = vmatprep.subr.mxu0 0.0
      %913 = vmatpush1.msra.mxu0 0.0
      %914 = vmatprep.subr.mxu0 0.0
      %915 = vmatpush1.msra.mxu0 0.0
      %916 = vmatprep.subr.mxu0 0.0
      %917 = vmatpush1.msra.mxu0 0.0
      %918 = vmatprep.subr.mxu0 0.0
      %919 = vmatpush1.msra.mxu0 0.0
      %920 = vmatprep.subr.mxu0 0.0
      %921 = vmatpush1.msra.mxu0 0.0
      %922 = vmatprep.subr.mxu0 0.0
      %923 = vmatpush1.msra.mxu0 0.0
      %924 = vmatprep.subr.mxu0 0.0
      %925 = vmatpush1.msra.mxu0 0.0
      %926 = vmatprep.subr.mxu0 0.0
      %927 = vmatpush1.msra.mxu0 0.0
      %928 = vmatprep.subr.mxu0 0.0
      %929 = vmatpush1.msra.mxu0 0.0
      %930 = vmatprep.subr.mxu0 0.0
      %931 = vmatpush1.msra.mxu0 0.0
      %932 = vmatprep.subr.mxu0 0.0
      %933 = vmatpush1.msra.mxu0 0.0
      %934 = vmatprep.subr.mxu0 0.0
      %935 = vmatpush1.msra.mxu0 0.0
      %936 = vmatprep.subr.mxu0 0.0
      %937 = vmatpush1.msra.mxu0 0.0
      %938 = vmatprep.subr.mxu0 0.0
      %939 = vmatpush1.msra.mxu0 0.0
      %940 = vmatprep.subr.mxu0 0.0
      %941 = vmatpush1.msra.mxu0 0.0
      %942 = vmatprep.subr.mxu0 0.0
      %943 = vmatpush1.msra.mxu0 0.0
      %944 = vmatprep.subr.mxu0 0.0
      %945 = vmatpush1.msra.mxu0 0.0
      %946 = vmatprep.mubr.f32.mxu0 0.0
      %947 = vmatmul.mubr.f32.gmra.mrb[0].mxu0 %v880
      %v948 = vpop.f32.mrb[0].mxu0
      %v949 = vadd.f32 0.0, %v948
      %v950 = vpop.f32.mrb[0].mxu0
      %951 = vdwg.mxu0
      %v953 = vlaneseq
      %v954 = vshrl.u32 %v953, 7
      %v955 = vsub.s32 0, %v954
      %v956 = vrot.slane %v706, %v955
      %v958 = vadd.f32 %v956, %v949
      %959 = vrot.lane.b32.xlu0 %v699, 112
      %v960 = vpop.permute.xlu0 %959
      %961 = vrot.lane.b32.xlu0 %v699, 80
      %v962 = vpop.permute.xlu0 %961
      %v963 = vsel %vm716, %v960, 0
      %v965 = vsel %vm716, %v962, 0
      %967 = vmatprep.subr.mxu0 0.0
      %968 = vmatpush1.xpose.msra.mxu0 %v965
      %969 = vmatprep.subr.mxu0 0.0
      %970 = vmatpush1.xpose.msra.mxu0 0.0
      %971 = vmatprep.subr.mxu0 0.0
      %972 = vmatpush1.xpose.msra.mxu0 0.0
      %973 = vmatprep.subr.mxu0 0.0
      %974 = vmatpush1.xpose.msra.mxu0 0.0
      %975 = vmatprep.subr.mxu0 0.0
      %976 = vmatpush1.xpose.msra.mxu0 0.0
      %977 = vmatprep.subr.mxu0 0.0
      %978 = vmatpush1.xpose.msra.mxu0 0.0
      %979 = vmatprep.subr.mxu0 0.0
      %980 = vmatpush1.xpose.msra.mxu0 0.0
      %981 = vmatprep.subr.mxu0 0.0
      %982 = vmatpush1.xpose.msra.mxu0 0.0
      %983 = vmatprep.subr.mxu0 0.0
      %984 = vmatpush1.xpose.msra.mxu0 0.0
      %985 = vmatprep.subr.mxu0 0.0
      %986 = vmatpush1.xpose.msra.mxu0 0.0
      %987 = vmatprep.subr.mxu0 0.0
      %988 = vmatpush1.xpose.msra.mxu0 0.0
      %989 = vmatprep.subr.mxu0 0.0
      %990 = vmatpush1.xpose.msra.mxu0 0.0
      %991 = vmatprep.subr.mxu0 0.0
      %992 = vmatpush1.xpose.msra.mxu0 0.0
      %993 = vmatprep.subr.mxu0 0.0
      %994 = vmatpush1.xpose.msra.mxu0 0.0
      %995 = vmatprep.subr.mxu0 0.0
      %996 = vmatpush1.xpose.msra.mxu0 0.0
      %997 = vmatprep.subr.mxu0 0.0
      %998 = vmatpush1.xpose.msra.mxu0 0.0
      %999 = vmatprep.subr.mxu0 0.0
      %1000 = vmatpush1.xpose.msra.mxu0 0.0
      %1001 = vmatprep.subr.mxu0 0.0
      %1002 = vmatpush1.xpose.msra.mxu0 0.0
      %1003 = vmatprep.subr.mxu0 0.0
      %1004 = vmatpush1.xpose.msra.mxu0 0.0
      %1005 = vmatprep.subr.mxu0 0.0
      %1006 = vmatpush1.xpose.msra.mxu0 0.0
      %1007 = vmatprep.subr.mxu0 0.0
      %1008 = vmatpush1.xpose.msra.mxu0 0.0
      %1009 = vmatprep.subr.mxu0 0.0
      %1010 = vmatpush1.xpose.msra.mxu0 0.0
      %1011 = vmatprep.subr.mxu0 0.0
      %1012 = vmatpush1.xpose.msra.mxu0 0.0
      %1013 = vmatprep.subr.mxu0 0.0
      %1014 = vmatpush1.xpose.msra.mxu0 0.0
      %1015 = vmatprep.subr.mxu0 0.0
      %1016 = vmatpush1.xpose.msra.mxu0 0.0
      %1017 = vmatprep.subr.mxu0 0.0
      %1018 = vmatpush1.xpose.msra.mxu0 0.0
      %1019 = vmatprep.subr.mxu0 0.0
      %1020 = vmatpush1.xpose.msra.mxu0 0.0
      %1021 = vmatprep.subr.mxu0 0.0
      %1022 = vmatpush1.xpose.msra.mxu0 0.0
      %1023 = vmatprep.subr.mxu0 0.0
      %1024 = vmatpush1.xpose.msra.mxu0 0.0
      %1025 = vmatprep.subr.mxu0 0.0
      %1026 = vmatpush1.xpose.msra.mxu0 0.0
      %1027 = vmatprep.subr.mxu0 0.0
      %1028 = vmatpush1.xpose.msra.mxu0 0.0
      %1029 = vmatprep.subr.mxu0 0.0
      %1030 = vmatpush1.xpose.msra.mxu0 0.0
      %1031 = vmatprep.mubr.f32.mxu0 0.0
      %1032 = vmatmul.mubr.f32.gmra.mrb[0].mxu0 %v963
      %v1033 = vpop.f32.mrb[0].mxu0
      %v1034 = vadd.f32 %v711, %v1033
      %v1035 = vpop.f32.mrb[0].mxu0
      %1036 = vdwg.mxu0
      %v1037 = vsel %vm791, %v1034, -inf
      %1038 = vmax.xlane.f32.xlu0 %v1037
      %v1039 = vpop.xlane.xlu0 %1038
      %v1040 = vsub.f32 %v1034, %v1039
      %v1041 = vmul.f32 %v1040, 1.442695
      %v1042 = vpow.pop %v1041
      %v1043 = vsel %vm791, %v1042, 0.0
      %1044 = vadd.xlane.f32.xlu0 %v1043
      %v1045 = vpop.xlane.xlu0 %1044
      %v1046 = vrcp.pop %v1045
      %v1047 = vmul.f32 %v1042, %v1046
      %1048 = vrot.lane.b32.xlu0 %v699, 48
      %v1049 = vpop.permute.xlu0 %1048
      %v1052 = vsel %vm791, %v1047, 0
      %1054 = vmatprep.subr.mxu0 0.0
      %1055 = vmatpush1.msra.mxu0 %v1049
      %1056 = vmatprep.subr.mxu0 0.0
      %1057 = vmatpush1.msra.mxu0 0.0
      %1058 = vmatprep.subr.mxu0 0.0
      %1059 = vmatpush1.msra.mxu0 0.0
      %1060 = vmatprep.subr.mxu0 0.0
      %1061 = vmatpush1.msra.mxu0 0.0
      %1062 = vmatprep.subr.mxu0 0.0
      %1063 = vmatpush1.msra.mxu0 0.0
      %1064 = vmatprep.subr.mxu0 0.0
      %1065 = vmatpush1.msra.mxu0 0.0
      %1066 = vmatprep.subr.mxu0 0.0
      %1067 = vmatpush1.msra.mxu0 0.0
      %1068 = vmatprep.subr.mxu0 0.0
      %1069 = vmatpush1.msra.mxu0 0.0
      %1070 = vmatprep.subr.mxu0 0.0
      %1071 = vmatpush1.msra.mxu0 0.0
      %1072 = vmatprep.subr.mxu0 0.0
      %1073 = vmatpush1.msra.mxu0 0.0
      %1074 = vmatprep.subr.mxu0 0.0
      %1075 = vmatpush1.msra.mxu0 0.0
      %1076 = vmatprep.subr.mxu0 0.0
      %1077 = vmatpush1.msra.mxu0 0.0
      %1078 = vmatprep.subr.mxu0 0.0
      %1079 = vmatpush1.msra.mxu0 0.0
      %1080 = vmatprep.subr.mxu0 0.0
      %1081 = vmatpush1.msra.mxu0 0.0
      %1082 = vmatprep.subr.mxu0 0.0
      %1083 = vmatpush1.msra.mxu0 0.0
      %1084 = vmatprep.subr.mxu0 0.0
      %1085 = vmatpush1.msra.mxu0 0.0
      %1086 = vmatprep.subr.mxu0 0.0
      %1087 = vmatpush1.msra.mxu0 0.0
      %1088 = vmatprep.subr.mxu0 0.0
      %1089 = vmatpush1.msra.mxu0 0.0
      %1090 = vmatprep.subr.mxu0 0.0
      %1091 = vmatpush1.msra.mxu0 0.0
      %1092 = vmatprep.subr.mxu0 0.0
      %1093 = vmatpush1.msra.mxu0 0.0
      %1094 = vmatprep.subr.mxu0 0.0
      %1095 = vmatpush1.msra.mxu0 0.0
      %1096 = vmatprep.subr.mxu0 0.0
      %1097 = vmatpush1.msra.mxu0 0.0
      %1098 = vmatprep.subr.mxu0 0.0
      %1099 = vmatpush1.msra.mxu0 0.0
      %1100 = vmatprep.subr.mxu0 0.0
      %1101 = vmatpush1.msra.mxu0 0.0
      %1102 = vmatprep.subr.mxu0 0.0
      %1103 = vmatpush1.msra.mxu0 0.0
      %1104 = vmatprep.subr.mxu0 0.0
      %1105 = vmatpush1.msra.mxu0 0.0
      %1106 = vmatprep.subr.mxu0 0.0
      %1107 = vmatpush1.msra.mxu0 0.0
      %1108 = vmatprep.subr.mxu0 0.0
      %1109 = vmatpush1.msra.mxu0 0.0
      %1110 = vmatprep.subr.mxu0 0.0
      %1111 = vmatpush1.msra.mxu0 0.0
      %1112 = vmatprep.subr.mxu0 0.0
      %1113 = vmatpush1.msra.mxu0 0.0
      %1114 = vmatprep.subr.mxu0 0.0
      %1115 = vmatpush1.msra.mxu0 0.0
      %1116 = vmatprep.subr.mxu0 0.0
      %1117 = vmatpush1.msra.mxu0 0.0
      %1118 = vmatprep.mubr.f32.mxu0 0.0
      %1119 = vmatmul.mubr.f32.gmra.mrb[0].mxu0 %v1052
      %v1120 = vpop.f32.mrb[0].mxu0
      %v1121 = vadd.f32 0.0, %v1120
      %v1122 = vpop.f32.mrb[0].mxu0
      %1123 = vdwg.mxu0
      %v1125 = vsel %vm716, %v1121, 0
      %1127 = vmatprep.subr.mxu0 0.0
      %1128 = vmatpush1.msra.mxu0 %v704
      %1129 = vmatprep.subr.mxu0 0.0
      %1130 = vmatpush1.msra.mxu0 %v705
      %1131 = vmatprep.subr.mxu0 0.0
      %1132 = vmatpush1.msra.mxu0 0.0
      %1133 = vmatprep.subr.mxu0 0.0
      %1134 = vmatpush1.msra.mxu0 0.0
      %1135 = vmatprep.subr.mxu0 0.0
      %1136 = vmatpush1.msra.mxu0 0.0
      %1137 = vmatprep.subr.mxu0 0.0
      %1138 = vmatpush1.msra.mxu0 0.0
      %1139 = vmatprep.subr.mxu0 0.0
      %1140 = vmatpush1.msra.mxu0 0.0
      %1141 = vmatprep.subr.mxu0 0.0
      %1142 = vmatpush1.msra.mxu0 0.0
      %1143 = vmatprep.subr.mxu0 0.0
      %1144 = vmatpush1.msra.mxu0 0.0
      %1145 = vmatprep.subr.mxu0 0.0
      %1146 = vmatpush1.msra.mxu0 0.0
      %1147 = vmatprep.subr.mxu0 0.0
      %1148 = vmatpush1.msra.mxu0 0.0
      %1149 = vmatprep.subr.mxu0 0.0
      %1150 = vmatpush1.msra.mxu0 0.0
      %1151 = vmatprep.subr.mxu0 0.0
      %1152 = vmatpush1.msra.mxu0 0.0
      %1153 = vmatprep.subr.mxu0 0.0
      %1154 = vmatpush1.msra.mxu0 0.0
      %1155 = vmatprep.subr.mxu0 0.0
      %1156 = vmatpush1.msra.mxu0 0.0
      %1157 = vmatprep.subr.mxu0 0.0
      %1158 = vmatpush1.msra.mxu0 0.0
      %1159 = vmatprep.subr.mxu0 0.0
      %1160 = vmatpush1.msra.mxu0 0.0
      %1161 = vmatprep.subr.mxu0 0.0
      %1162 = vmatpush1.msra.mxu0 0.0
      %1163 = vmatprep.subr.mxu0 0.0
      %1164 = vmatpush1.msra.mxu0 0.0
      %1165 = vmatprep.subr.mxu0 0.0
      %1166 = vmatpush1.msra.mxu0 0.0
      %1167 = vmatprep.subr.mxu0 0.0
      %1168 = vmatpush1.msra.mxu0 0.0
      %1169 = vmatprep.subr.mxu0 0.0
      %1170 = vmatpush1.msra.mxu0 0.0
      %1171 = vmatprep.subr.mxu0 0.0
      %1172 = vmatpush1.msra.mxu0 0.0
      %1173 = vmatprep.subr.mxu0 0.0
      %1174 = vmatpush1.msra.mxu0 0.0
      %1175 = vmatprep.subr.mxu0 0.0
      %1176 = vmatpush1.msra.mxu0 0.0
      %1177 = vmatprep.subr.mxu0 0.0
      %1178 = vmatpush1.msra.mxu0 0.0
      %1179 = vmatprep.subr.mxu0 0.0
      %1180 = vmatpush1.msra.mxu0 0.0
      %1181 = vmatprep.subr.mxu0 0.0
      %1182 = vmatpush1.msra.mxu0 0.0
      %1183 = vmatprep.subr.mxu0 0.0
      %1184 = vmatpush1.msra.mxu0 0.0
      %1185 = vmatprep.subr.mxu0 0.0
      %1186 = vmatpush1.msra.mxu0 0.0
      %1187 = vmatprep.subr.mxu0 0.0
      %1188 = vmatpush1.msra.mxu0 0.0
      %1189 = vmatprep.subr.mxu0 0.0
      %1190 = vmatpush1.msra.mxu0 0.0
      %1191 = vmatprep.mubr.f32.mxu0 0.0
      %1192 = vmatmul.mubr.f32.gmra.mrb[0].mxu0 %v1125
      %v1193 = vpop.f32.mrb[0].mxu0
      %v1194 = vadd.f32 0.0, %v1193
      %v1195 = vpop.f32.mrb[0].mxu0
      %1196 = vdwg.mxu0
      %v1197 = vadd.f32 %v958, %v1194
      %v1198 = vadd.f32 %v617, %v1197
      %v1199 = vld [vmem:[%s8] sm:$0x1]
      %v1200 = vld [vmem:[%s9] sm:$0x1]
      %v1201 = vsel %vm589, %v1198, 0.0
      %1202 = vadd.xlane.f32.xlu0 %v1201
      %v1203 = vpop.xlane.xlu0 %1202
      %v1204 = vmul.f32 %v1203, %v593
      %v1205 = vsub.f32 %v1198, %v1204
      %v1206 = vmul.f32 %v1205, %v1205
      %v1207 = vsel %vm589, %v1206, 0.0
      %1208 = vadd.xlane.f32.xlu0 %v1207
      %v1209 = vpop.xlane.xlu0 %1208
      %v1210 = vmul.f32 %v1209, %v593
      %v1211 = vadd.f32 %v1210, 1e-12
      %v1212 = vrsqrt.pop %v1211
      %v1213 = vmul.f32 %v1205, %v1212
      %v1215 = vlaneseq
      %v1216 = vshrl.u32 %v1215, 7
      %v1217 = vsub.s32 0, %v1216
      %v1218 = vrot.slane %v1199, %v1217
      %v1220 = vmul.f32 %v1213, %v1218
      %v1222 = vlaneseq
      %v1223 = vshrl.u32 %v1222, 7
      %v1224 = vsub.s32 0, %v1223
      %v1225 = vrot.slane %v1200, %v1224
      %v1227 = vadd.f32 %v1220, %v1225
      %v1228 = vld [vmem:[%s10] sm:$0xff]
      %v1229 = vld [vmem:[%s10 + $0x8] sm:$0xff]
      %v1230 = vld [vmem:[%s10 + $0x10] sm:$0xff]
      %v1231 = vld [vmem:[%s10 + $0x18] sm:$0xff]
      %v1232 = vld [vmem:[%s11] sm:$0x1]
      %v1234 = vlaneseq
      %v1235 = vshrl.u32 %v1234, 7
      %v1236 = vsub.s32 0, %v1235
      %v1237 = vrot.slane %v1232, %v1236
      %v1240 = vsel %vm589, %v1227, 0
      %1242 = vmatprep.subr.mxu0 0.0
      %1243 = vmatpush1.msra.mxu0 %v1228
      %1244 = vmatprep.subr.mxu0 0.0
      %1245 = vmatpush1.msra.mxu0 %v1229
      %1246 = vmatprep.subr.mxu0 0.0
      %1247 = vmatpush1.msra.mxu0 %v1230
      %1248 = vmatprep.subr.mxu0 0.0
      %1249 = vmatpush1.msra.mxu0 %v1231
      %1250 = vmatprep.subr.mxu0 0.0
      %1251 = vmatpush1.msra.mxu0 0.0
      %1252 = vmatprep.subr.mxu0 0.0
      %1253 = vmatpush1.msra.mxu0 0.0
      %1254 = vmatprep.subr.mxu0 0.0
      %1255 = vmatpush1.msra.mxu0 0.0
      %1256 = vmatprep.subr.mxu0 0.0
      %1257 = vmatpush1.msra.mxu0 0.0
      %1258 = vmatprep.subr.mxu0 0.0
      %1259 = vmatpush1.msra.mxu0 0.0
      %1260 = vmatprep.subr.mxu0 0.0
      %1261 = vmatpush1.msra.mxu0 0.0
      %1262 = vmatprep.subr.mxu0 0.0
      %1263 = vmatpush1.msra.mxu0 0.0
      %1264 = vmatprep.subr.mxu0 0.0
      %1265 = vmatpush1.msra.mxu0 0.0
      %1266 = vmatprep.subr.mxu0 0.0
      %1267 = vmatpush1.msra.mxu0 0.0
      %1268 = vmatprep.subr.mxu0 0.0
      %1269 = vmatpush1.msra.mxu0 0.0
      %1270 = vmatprep.subr.mxu0 0.0
      %1271 = vmatpush1.msra.mxu0 0.0
      %1272 = vmatprep.subr.mxu0 0.0
      %1273 = vmatpush1.msra.mxu0 0.0
      %1274 = vmatprep.subr.mxu0 0.0
      %1275 = vmatpush1.msra.mxu0 0.0
      %1276 = vmatprep.subr.mxu0 0.0
      %1277 = vmatpush1.msra.mxu0 0.0
      %1278 = vmatprep.subr.mxu0 0.0
      %1279 = vmatpush1.msra.mxu0 0.0
      %1280 = vmatprep.subr.mxu0 0.0
      %1281 = vmatpush1.msra.mxu0 0.0
      %1282 = vmatprep.subr.mxu0 0.0
      %1283 = vmatpush1.msra.mxu0 0.0
      %1284 = vmatprep.subr.mxu0 0.0
      %1285 = vmatpush1.msra.mxu0 0.0
      %1286 = vmatprep.subr.mxu0 0.0
      %1287 = vmatpush1.msra.mxu0 0.0
      %1288 = vmatprep.subr.mxu0 0.0
      %1289 = vmatpush1.msra.mxu0 0.0
      %1290 = vmatprep.subr.mxu0 0.0
      %1291 = vmatpush1.msra.mxu0 0.0
      %1292 = vmatprep.subr.mxu0 0.0
      %1293 = vmatpush1.msra.mxu0 0.0
      %1294 = vmatprep.subr.mxu0 0.0
      %1295 = vmatpush1.msra.mxu0 0.0
      %1296 = vmatprep.subr.mxu0 0.0
      %1297 = vmatpush1.msra.mxu0 0.0
      %1298 = vmatprep.subr.mxu0 0.0
      %1299 = vmatpush1.msra.mxu0 0.0
      %1300 = vmatprep.subr.mxu0 0.0
      %1301 = vmatpush1.msra.mxu0 0.0
      %1302 = vmatprep.subr.mxu0 0.0
      %1303 = vmatpush1.msra.mxu0 0.0
      %1304 = vmatprep.subr.mxu0 0.0
      %1305 = vmatpush1.msra.mxu0 0.0
      %1306 = vmatprep.mubr.f32.mxu0 0.0
      %1307 = vmatmul.mubr.f32.gmra.mrb[0].mxu0 %v1240
      %v1308 = vpop.f32.mrb[0].mxu0
      %v1309 = vadd.f32 %v1237, %v1308
      %v1310 = vpop.f32.mrb[0].mxu0
      %1311 = vdwg.mxu0
      %v1312 = vmul.f32 %v1309, %v1309
      %v1313 = vmul.f32 %v1309, %v1312
      %v1314 = vmul.f32 %v1313, 0.044715
      %v1315 = vadd.f32 %v1309, %v1314
      %v1316 = vmul.f32 %v1315, 0.7978846
      %v1317 = vtanh.pop %v1316
      %v1318 = vadd.f32 %v1317, 1.0
      %v1319 = vmul.f32 %v1318, 0.5
      %v1320 = vmul.f32 %v1309, %v1319
      %v1321 = vld [vmem:[%s12] sm:$0xff]
      %v1322 = vld [vmem:[%s12 + $0x8] sm:$0xff]
      %v1323 = vld [vmem:[%s12 + $0x10] sm:$0xff]
      %v1324 = vld [vmem:[%s12 + $0x18] sm:$0xff]
      %v1325 = vld [vmem:[%s12 + $0x20] sm:$0xff]
      %v1326 = vld [vmem:[%s12 + $0x28] sm:$0xff]
      %v1327 = vld [vmem:[%s12 + $0x30] sm:$0xff]
      %v1328 = vld [vmem:[%s12 + $0x38] sm:$0xff]
      %v1329 = vld [vmem:[%s13] sm:$0x1]
      %v1331 = vlaneseq
      %v1332 = vshrl.u32 %v1331, 7
      %v1333 = vsub.s32 0, %v1332
      %v1334 = vrot.slane %v1329, %v1333
      %vm1336 = vcmask 523264
      %v1338 = vsel %vm1336, %v1320, 0
      %1340 = vmatprep.subr.mxu0 0.0
      %1341 = vmatpush1.msra.mxu0 %v1321
      %1342 = vmatprep.subr.mxu0 0.0
      %1343 = vmatpush1.msra.mxu0 %v1322
      %1344 = vmatprep.subr.mxu0 0.0
      %1345 = vmatpush1.msra.mxu0 %v1323
      %1346 = vmatprep.subr.mxu0 0.0
      %1347 = vmatpush1.msra.mxu0 %v1324
      %1348 = vmatprep.subr.mxu0 0.0
      %1349 = vmatpush1.msra.mxu0 %v1325
      %1350 = vmatprep.subr.mxu0 0.0
      %1351 = vmatpush1.msra.mxu0 %v1326
      %1352 = vmatprep.subr.mxu0 0.0
      %1353 = vmatpush1.msra.mxu0 %v1327
      %1354 = vmatprep.subr.mxu0 0.0
      %1355 = vmatpush1.msra.mxu0 %v1328
      %1356 = vmatprep.subr.mxu0 0.0
      %1357 = vmatpush1.msra.mxu0 0.0
      %1358 = vmatprep.subr.mxu0 0.0
      %1359 = vmatpush1.msra.mxu0 0.0
      %1360 = vmatprep.subr.mxu0 0.0
      %1361 = vmatpush1.msra.mxu0 0.0
      %1362 = vmatprep.subr.mxu0 0.0
      %1363 = vmatpush1.msra.mxu0 0.0
      %1364 = vmatprep.subr.mxu0 0.0
      %1365 = vmatpush1.msra.mxu0 0.0
      %1366 = vmatprep.subr.mxu0 0.0
      %1367 = vmatpush1.msra.mxu0 0.0
      %1368 = vmatprep.subr.mxu0 0.0
      %1369 = vmatpush1.msra.mxu0 0.0
      %1370 = vmatprep.subr.mxu0 0.0
      %1371 = vmatpush1.msra.mxu0 0.0
      %1372 = vmatprep.subr.mxu0 0.0
      %1373 = vmatpush1.msra.mxu0 0.0
      %1374 = vmatprep.subr.mxu0 0.0
      %1375 = vmatpush1.msra.mxu0 0.0
      %1376 = vmatprep.subr.mxu0 0.0
      %1377 = vmatpush1.msra.mxu0 0.0
      %1378 = vmatprep.subr.mxu0 0.0
      %1379 = vmatpush1.msra.mxu0 0.0
      %1380 = vmatprep.subr.mxu0 0.0
      %1381 = vmatpush1.msra.mxu0 0.0
      %1382 = vmatprep.subr.mxu0 0.0
      %1383 = vmatpush1.msra.mxu0 0.0
      %1384 = vmatprep.subr.mxu0 0.0
      %1385 = vmatpush1.msra.mxu0 0.0
      %1386 = vmatprep.subr.mxu0 0.0
      %1387 = vmatpush1.msra.mxu0 0.0
      %1388 = vmatprep.subr.mxu0 0.0
      %1389 = vmatpush1.msra.mxu0 0.0
      %1390 = vmatprep.subr.mxu0 0.0
      %1391 = vmatpush1.msra.mxu0 0.0
      %1392 = vmatprep.subr.mxu0 0.0
      %1393 = vmatpush1.msra.mxu0 0.0
      %1394 = vmatprep.subr.mxu0 0.0
      %1395 = vmatpush1.msra.mxu0 0.0
      %1396 = vmatprep.subr.mxu0 0.0
      %1397 = vmatpush1.msra.mxu0 0.0
      %1398 = vmatprep.subr.mxu0 0.0
      %1399 = vmatpush1.msra.mxu0 0.0
      %1400 = vmatprep.subr.mxu0 0.0
      %1401 = vmatpush1.msra.mxu0 0.0
      %1402 = vmatprep.subr.mxu0 0.0
      %1403 = vmatpush1.msra.mxu0 0.0
      %1404 = vmatprep.mubr.f32.mxu0 0.0
      %1405 = vmatmul.mubr.f32.gmra.mrb[0].mxu0 %v1338
      %v1406 = vpop.f32.mrb[0].mxu0
      %v1407 = vadd.f32 %v1334, %v1406
      %v1408 = vpop.f32.mrb[0].mxu0
      %1409 = vdwg.mxu0
      %v1410 = vadd.f32 %v1227, %v1407
      %v1411 = vld [vmem:[%s14] sm:$0x1]
      %v1412 = vld [vmem:[%s15] sm:$0x1]
      %v1413 = vsel %vm589, %v1410, 0.0
      %1414 = vadd.xlane.f32.xlu0 %v1413
      %v1415 = vpop.xlane.xlu0 %1414
      %v1416 = vmul.f32 %v1415, %v593
      %v1417 = vsub.f32 %v1410, %v1416
      %v1418 = vmul.f32 %v1417, %v1417
      %v1419 = vsel %vm589, %v1418, 0.0
      %1420 = vadd.xlane.f32.xlu0 %v1419
      %v1421 = vpop.xlane.xlu0 %1420
      %v1422 = vmul.f32 %v1421, %v593
      %v1423 = vadd.f32 %v1422, 1e-12
      %v1424 = vrsqrt.pop %v1423
      %v1425 = vmul.f32 %v1417, %v1424
      %v1427 = vlaneseq
      %v1428 = vshrl.u32 %v1427, 7
      %v1429 = vsub.s32 0, %v1428
      %v1430 = vrot.slane %v1411, %v1429
      %v1432 = vmul.f32 %v1425, %v1430
      %v1434 = vlaneseq
      %v1435 = vshrl.u32 %v1434, 7
      %v1436 = vsub.s32 0, %v1435
      %v1437 = vrot.slane %v1412, %v1436
      %v1439 = vadd.f32 %v1432, %v1437
      %s1440 = scalar_lea.vmem %s4, 32
      %v1441 = vld [vmem:[%s1440] sm:$0xff]
      %v1442 = vld [vmem:[%s1440 + $0x8] sm:$0xff]
      %v1443 = vld [vmem:[%s1440 + $0x10] sm:$0xff]
      %v1444 = vld [vmem:[%s1440 + $0x18] sm:$0xff]
      %s1445 = scalar_lea.vmem %s5, 1
      %v1446 = vld [vmem:[%s1445] sm:$0x1]
      %v1448 = vlaneseq
      %v1449 = vshrl.u32 %v1448, 7
      %v1450 = vsub.s32 0, %v1449
      %v1451 = vrot.slane %v1446, %v1450
      %v1454 = vsel %vm589, %v1439, 0
      %1456 = vmatprep.subr.mxu0 0.0
      %1457 = vmatpush1.msra.mxu0 %v1441
      %1458 = vmatprep.subr.mxu0 0.0
      %1459 = vmatpush1.msra.mxu0 %v1442
      %1460 = vmatprep.subr.mxu0 0.0
      %1461 = vmatpush1.msra.mxu0 %v1443
      %1462 = vmatprep.subr.mxu0 0.0
      %1463 = vmatpush1.msra.mxu0 %v1444
      %1464 = vmatprep.subr.mxu0 0.0
      %1465 = vmatpush1.msra.mxu0 0.0
      %1466 = vmatprep.subr.mxu0 0.0
      %1467 = vmatpush1.msra.mxu0 0.0
      %1468 = vmatprep.subr.mxu0 0.0
      %1469 = vmatpush1.msra.mxu0 0.0
      %1470 = vmatprep.subr.mxu0 0.0
      %1471 = vmatpush1.msra.mxu0 0.0
      %1472 = vmatprep.subr.mxu0 0.0
      %1473 = vmatpush1.msra.mxu0 0.0
      %1474 = vmatprep.subr.mxu0 0.0
      %1475 = vmatpush1.msra.mxu0 0.0
      %1476 = vmatprep.subr.mxu0 0.0
      %1477 = vmatpush1.msra.mxu0 0.0
      %1478 = vmatprep.subr.mxu0 0.0
      %1479 = vmatpush1.msra.mxu0 0.0
      %1480 = vmatprep.subr.mxu0 0.0
      %1481 = vmatpush1.msra.mxu0 0.0
      %1482 = vmatprep.subr.mxu0 0.0
      %1483 = vmatpush1.msra.mxu0 0.0
      %1484 = vmatprep.subr.mxu0 0.0
      %1485 = vmatpush1.msra.mxu0 0.0
      %1486 = vmatprep.subr.mxu0 0.0
      %1487 = vmatpush1.msra.mxu0 0.0
      %1488 = vmatprep.subr.mxu0 0.0
      %1489 = vmatpush1.msra.mxu0 0.0
      %1490 = vmatprep.subr.mxu0 0.0
      %1491 = vmatpush1.msra.mxu0 0.0
      %1492 = vmatprep.subr.mxu0 0.0
      %1493 = vmatpush1.msra.mxu0 0.0
      %1494 = vmatprep.subr.mxu0 0.0
      %1495 = vmatpush1.msra.mxu0 0.0
      %1496 = vmatprep.subr.mxu0 0.0
      %1497 = vmatpush1.msra.mxu0 0.0
      %1498 = vmatprep.subr.mxu0 0.0
      %1499 = vmatpush1.msra.mxu0 0.0
      %1500 = vmatprep.subr.mxu0 0.0
      %1501 = vmatpush1.msra.mxu0 0.0
      %1502 = vmatprep.subr.mxu0 0.0
      %1503 = vmatpush1.msra.mxu0 0.0
      %1504 = vmatprep.subr.mxu0 0.0
      %1505 = vmatpush1.msra.mxu0 0.0
      %1506 = vmatprep.subr.mxu0 0.0
      %1507 = vmatpush1.msra.mxu0 0.0
      %1508 = vmatprep.subr.mxu0 0.0
      %1509 = vmatpush1.msra.mxu0 0.0
      %1510 = vmatprep.subr.mxu0 0.0
      %1511 = vmatpush1.msra.mxu0 0.0
      %1512 = vmatprep.subr.mxu0 0.0
      %1513 = vmatpush1.msra.mxu0 0.0
      %1514 = vmatprep.subr.mxu0 0.0
      %1515 = vmatpush1.msra.mxu0 0.0
      %1516 = vmatprep.subr.mxu0 0.0
      %1517 = vmatpush1.msra.mxu0 0.0
      %1518 = vmatprep.subr.mxu0 0.0
      %1519 = vmatpush1.msra.mxu0 0.0
      %1520 = vmatprep.mubr.f32.mxu0 0.0
      %1521 = vmatmul.mubr.f32.gmra.mrb[0].mxu0 %v1454
      %v1522 = vpop.f32.mrb[0].mxu0
      %v1523 = vadd.f32 %v1451, %v1522
      %v1524 = vpop.f32.mrb[0].mxu0
      %1525 = vdwg.mxu0
      %s1526 = scalar_lea.vmem %s6, 32
      %v1527 = vld [vmem:[%s1526] sm:$0xff]
      %v1528 = vld [vmem:[%s1526 + $0x8] sm:$0xff]
      %v1529 = vld [vmem:[%s1526 + $0x10] sm:$0xff]
      %v1530 = vld [vmem:[%s1526 + $0x18] sm:$0xff]
      %s1531 = scalar_lea.vmem %s7, 1
      %v1532 = vld [vmem:[%s1531] sm:$0x1]
      %1534 = vrot.lane.b32.xlu0 %v1523, 96
      %v1535 = vpop.permute.xlu0 %1534
      %v1536 = vsel %vm716, %v1523, 0
      %v1538 = vsel %vm716, %v1535, 0
      %1540 = vmatprep.subr.mxu0 0.0
      %1541 = vmatpush1.xpose.msra.mxu0 %v1538
      %1542 = vmatprep.subr.mxu0 0.0
      %1543 = vmatpush1.xpose.msra.mxu0 0.0
      %1544 = vmatprep.subr.mxu0 0.0
      %1545 = vmatpush1.xpose.msra.mxu0 0.0
      %1546 = vmatprep.subr.mxu0 0.0
      %1547 = vmatpush1.xpose.msra.mxu0 0.0
      %1548 = vmatprep.subr.mxu0 0.0
      %1549 = vmatpush1.xpose.msra.mxu0 0.0
      %1550 = vmatprep.subr.mxu0 0.0
      %1551 = vmatpush1.xpose.msra.mxu0 0.0
      %1552 = vmatprep.subr.mxu0 0.0
      %1553 = vmatpush1.xpose.msra.mxu0 0.0
      %1554 = vmatprep.subr.mxu0 0.0
      %1555 = vmatpush1.xpose.msra.mxu0 0.0
      %1556 = vmatprep.subr.mxu0 0.0
      %1557 = vmatpush1.xpose.msra.mxu0 0.0
      %1558 = vmatprep.subr.mxu0 0.0
      %1559 = vmatpush1.xpose.msra.mxu0 0.0
      %1560 = vmatprep.subr.mxu0 0.0
      %1561 = vmatpush1.xpose.msra.mxu0 0.0
      %1562 = vmatprep.subr.mxu0 0.0
      %1563 = vmatpush1.xpose.msra.mxu0 0.0
      %1564 = vmatprep.subr.mxu0 0.0
      %1565 = vmatpush1.xpose.msra.mxu0 0.0
      %1566 = vmatprep.subr.mxu0 0.0
      %1567 = vmatpush1.xpose.msra.mxu0 0.0
      %1568 = vmatprep.subr.mxu0 0.0
      %1569 = vmatpush1.xpose.msra.mxu0 0.0
      %1570 = vmatprep.subr.mxu0 0.0
      %1571 = vmatpush1.xpose.msra.mxu0 0.0
      %1572 = vmatprep.subr.mxu0 0.0
      %1573 = vmatpush1.xpose.msra.mxu0 0.0
      %1574 = vmatprep.subr.mxu0 0.0
      %1575 = vmatpush1.xpose.msra.mxu0 0.0
      %1576 = vmatprep.subr.mxu0 0.0
      %1577 = vmatpush1.xpose.msra.mxu0 0.0
      %1578 = vmatprep.subr.mxu0 0.0
      %1579 = vmatpush1.xpose.msra.mxu0 0.0
      %1580 = vmatprep.subr.mxu0 0.0
      %1581 = vmatpush1.xpose.msra.mxu0 0.0
      %1582 = vmatprep.subr.mxu0 0.0
      %1583 = vmatpush1.xpose.msra.mxu0 0.0
      %1584 = vmatprep.subr.mxu0 0.0
      %1585 = vmatpush1.xpose.msra.mxu0 0.0
      %1586 = vmatprep.subr.mxu0 0.0
      %1587 = vmatpush1.xpose.msra.mxu0 0.0
      %1588 = vmatprep.subr.mxu0 0.0
      %1589 = vmatpush1.xpose.msra.mxu0 0.0
      %1590 = vmatprep.subr.mxu0 0.0
      %1591 = vmatpush1.xpose.msra.mxu0 0.0
      %1592 = vmatprep.subr.mxu0 0.0
      %1593 = vmatpush1.xpose.msra.mxu0 0.0
      %1594 = vmatprep.subr.mxu0 0.0
      %1595 = vmatpush1.xpose.msra.mxu0 0.0
      %1596 = vmatprep.subr.mxu0 0.0
      %1597 = vmatpush1.xpose.msra.mxu0 0.0
      %1598 = vmatprep.subr.mxu0 0.0
      %1599 = vmatpush1.xpose.msra.mxu0 0.0
      %1600 = vmatprep.subr.mxu0 0.0
      %1601 = vmatpush1.xpose.msra.mxu0 0.0
      %1602 = vmatprep.subr.mxu0 0.0
      %1603 = vmatpush1.xpose.msra.mxu0 0.0
      %1604 = vmatprep.mubr.f32.mxu0 0.0
      %1605 = vmatmul.mubr.f32.gmra.mrb[0].mxu0 %v1536
      %v1606 = vpop.f32.mrb[0].mxu0
      %v1607 = vadd.f32 %v711, %v1606
      %v1608 = vpop.f32.mrb[0].mxu0
      %1609 = vdwg.mxu0
      %v1610 = vsel %vm791, %v1607, -inf
      %1611 = vmax.xlane.f32.xlu0 %v1610
      %v1612 = vpop.xlane.xlu0 %1611
      %v1613 = vsub.f32 %v1607, %v1612
      %v1614 = vmul.f32 %v1613, 1.442695
      %v1615 = vpow.pop %v1614
      %v1616 = vsel %vm791, %v1615, 0.0
      %1617 = vadd.xlane.f32.xlu0 %v1616
      %v1618 = vpop.xlane.xlu0 %1617
      %v1619 = vrcp.pop %v1618
      %v1620 = vmul.f32 %v1615, %v1619
      %1621 = vrot.lane.b32.xlu0 %v1523, 64
      %v1622 = vpop.permute.xlu0 %1621
      %v1625 = vsel %vm791, %v1620, 0
      %1627 = vmatprep.subr.mxu0 0.0
      %1628 = vmatpush1.msra.mxu0 %v1622
      %1629 = vmatprep.subr.mxu0 0.0
      %1630 = vmatpush1.msra.mxu0 0.0
      %1631 = vmatprep.subr.mxu0 0.0
      %1632 = vmatpush1.msra.mxu0 0.0
      %1633 = vmatprep.subr.mxu0 0.0
      %1634 = vmatpush1.msra.mxu0 0.0
      %1635 = vmatprep.subr.mxu0 0.0
      %1636 = vmatpush1.msra.mxu0 0.0
      %1637 = vmatprep.subr.mxu0 0.0
      %1638 = vmatpush1.msra.mxu0 0.0
      %1639 = vmatprep.subr.mxu0 0.0
      %1640 = vmatpush1.msra.mxu0 0.0
      %1641 = vmatprep.subr.mxu0 0.0
      %1642 = vmatpush1.msra.mxu0 0.0
      %1643 = vmatprep.subr.mxu0 0.0
      %1644 = vmatpush1.msra.mxu0 0.0
      %1645 = vmatprep.subr.mxu0 0.0
      %1646 = vmatpush1.msra.mxu0 0.0
      %1647 = vmatprep.subr.mxu0 0.0
      %1648 = vmatpush1.msra.mxu0 0.0
      %1649 = vmatprep.subr.mxu0 0.0
      %1650 = vmatpush1.msra.mxu0 0.0
      %1651 = vmatprep.subr.mxu0 0.0
      %1652 = vmatpush1.msra.mxu0 0.0
      %1653 = vmatprep.subr.mxu0 0.0
      %1654 = vmatpush1.msra.mxu0 0.0
      %1655 = vmatprep.subr.mxu0 0.0
      %1656 = vmatpush1.msra.mxu0 0.0
      %1657 = vmatprep.subr.mxu0 0.0
      %1658 = vmatpush1.msra.mxu0 0.0
      %1659 = vmatprep.subr.mxu0 0.0
      %1660 = vmatpush1.msra.mxu0 0.0
      %1661 = vmatprep.subr.mxu0 0.0
      %1662 = vmatpush1.msra.mxu0 0.0
      %1663 = vmatprep.subr.mxu0 0.0
      %1664 = vmatpush1.msra.mxu0 0.0
      %1665 = vmatprep.subr.mxu0 0.0
      %1666 = vmatpush1.msra.mxu0 0.0
      %1667 = vmatprep.subr.mxu0 0.0
      %1668 = vmatpush1.msra.mxu0 0.0
      %1669 = vmatprep.subr.mxu0 0.0
      %1670 = vmatpush1.msra.mxu0 0.0
      %1671 = vmatprep.subr.mxu0 0.0
      %1672 = vmatpush1.msra.mxu0 0.0
      %1673 = vmatprep.subr.mxu0 0.0
      %1674 = vmatpush1.msra.mxu0 0.0
      %1675 = vmatprep.subr.mxu0 0.0
      %1676 = vmatpush1.msra.mxu0 0.0
      %1677 = vmatprep.subr.mxu0 0.0
      %1678 = vmatpush1.msra.mxu0 0.0
      %1679 = vmatprep.subr.mxu0 0.0
      %1680 = vmatpush1.msra.mxu0 0.0
      %1681 = vmatprep.subr.mxu0 0.0
      %1682 = vmatpush1.msra.mxu0 0.0
      %1683 = vmatprep.subr.mxu0 0.0
      %1684 = vmatpush1.msra.mxu0 0.0
      %1685 = vmatprep.subr.mxu0 0.0
      %1686 = vmatpush1.msra.mxu0 0.0
      %1687 = vmatprep.subr.mxu0 0.0
      %1688 = vmatpush1.msra.mxu0 0.0
      %1689 = vmatprep.subr.mxu0 0.0
      %1690 = vmatpush1.msra.mxu0 0.0
      %1691 = vmatprep.mubr.f32.mxu0 0.0
      %1692 = vmatmul.mubr.f32.gmra.mrb[0].mxu0 %v1625
      %v1693 = vpop.f32.mrb[0].mxu0
      %v1694 = vadd.f32 0.0, %v1693
      %v1695 = vpop.f32.mrb[0].mxu0
      %1696 = vdwg.mxu0
      %v1698 = vsel %vm716, %v1694, 0
      %1700 = vmatprep.subr.mxu0 0.0
      %1701 = vmatpush1.msra.mxu0 %v1527
      %1702 = vmatprep.subr.mxu0 0.0
      %1703 = vmatpush1.msra.mxu0 %v1528
      %1704 = vmatprep.subr.mxu0 0.0
      %1705 = vmatpush1.msra.mxu0 0.0
      %1706 = vmatprep.subr.mxu0 0.0
      %1707 = vmatpush1.msra.mxu0 0.0
      %1708 = vmatprep.subr.mxu0 0.0
      %1709 = vmatpush1.msra.mxu0 0.0
      %1710 = vmatprep.subr.mxu0 0.0
      %1711 = vmatpush1.msra.mxu0 0.0
      %1712 = vmatprep.subr.mxu0 0.0
      %1713 = vmatpush1.msra.mxu0 0.0
      %1714 = vmatprep.subr.mxu0 0.0
      %1715 = vmatpush1.msra.mxu0 0.0
      %1716 = vmatprep.subr.mxu0 0.0
      %1717 = vmatpush1.msra.mxu0 0.0
      %1718 = vmatprep.subr.mxu0 0.0
      %1719 = vmatpush1.msra.mxu0 0.0
      %1720 = vmatprep.subr.mxu0 0.0
      %1721 = vmatpush1.msra.mxu0 0.0
      %1722 = vmatprep.subr.mxu0 0.0
      %1723 = vmatpush1.msra.mxu0 0.0
      %1724 = vmatprep.subr.mxu0 0.0
      %1725 = vmatpush1.msra.mxu0 0.0
      %1726 = vmatprep.subr.mxu0 0.0
      %1727 = vmatpush1.msra.mxu0 0.0
      %1728 = vmatprep.subr.mxu0 0.0
      %1729 = vmatpush1.msra.mxu0 0.0
      %1730 = vmatprep.subr.mxu0 0.0
      %1731 = vmatpush1.msra.mxu0 0.0
      %1732 = vmatprep.subr.mxu0 0.0
      %1733 = vmatpush1.msra.mxu0 0.0
      %1734 = vmatprep.subr.mxu0 0.0
      %1735 = vmatpush1.msra.mxu0 0.0
      %1736 = vmatprep.subr.mxu0 0.0
      %1737 = vmatpush1.msra.mxu0 0.0
      %1738 = vmatprep.subr.mxu0 0.0
      %1739 = vmatpush1.msra.mxu0 0.0
      %1740 = vmatprep.subr.mxu0 0.0
      %1741 = vmatpush1.msra.mxu0 0.0
      %1742 = vmatprep.subr.mxu0 0.0
      %1743 = vmatpush1.msra.mxu0 0.0
      %1744 = vmatprep.subr.mxu0 0.0
      %1745 = vmatpush1.msra.mxu0 0.0
      %1746 = vmatprep.subr.mxu0 0.0
      %1747 = vmatpush1.msra.mxu0 0.0
      %1748 = vmatprep.subr.mxu0 0.0
      %1749 = vmatpush1.msra.mxu0 0.0
      %1750 = vmatprep.subr.mxu0 0.0
      %1751 = vmatpush1.msra.mxu0 0.0
      %1752 = vmatprep.subr.mxu0 0.0
      %1753 = vmatpush1.msra.mxu0 0.0
      %1754 = vmatprep.subr.mxu0 0.0
      %1755 = vmatpush1.msra.mxu0 0.0
      %1756 = vmatprep.subr.mxu0 0.0
      %1757 = vmatpush1.msra.mxu0 0.0
      %1758 = vmatprep.subr.mxu0 0.0
      %1759 = vmatpush1.msra.mxu0 0.0
      %1760 = vmatprep.subr.mxu0 0.0
      %1761 = vmatpush1.msra.mxu0 0.0
      %1762 = vmatprep.subr.mxu0 0.0
      %1763 = vmatpush1.msra.mxu0 0.0
      %1764 = vmatprep.mubr.f32.mxu0 0.0
      %1765 = vmatmul.mubr.f32.gmra.mrb[0].mxu0 %v1698
      %v1766 = vpop.f32.mrb[0].mxu0
      %v1767 = vadd.f32 0.0, %v1766
      %v1768 = vpop.f32.mrb[0].mxu0
      %1769 = vdwg.mxu0
      %v1771 = vlaneseq
      %v1772 = vshrl.u32 %v1771, 7
      %v1773 = vsub.s32 0, %v1772
      %v1774 = vrot.slane %v1532, %v1773
      %v1776 = vadd.f32 %v1774, %v1767
      %1777 = vrot.lane.b32.xlu0 %v1523, 112
      %v1778 = vpop.permute.xlu0 %1777
      %1779 = vrot.lane.b32.xlu0 %v1523, 80
      %v1780 = vpop.permute.xlu0 %1779
      %v1781 = vsel %vm716, %v1778, 0
      %v1783 = vsel %vm716, %v1780, 0
      %1785 = vmatprep.subr.mxu0 0.0
      %1786 = vmatpush1.xpose.msra.mxu0 %v1783
      %1787 = vmatprep.subr.mxu0 0.0
      %1788 = vmatpush1.xpose.msra.mxu0 0.0
      %1789 = vmatprep.subr.mxu0 0.0
      %1790 = vmatpush1.xpose.msra.mxu0 0.0
      %1791 = vmatprep.subr.mxu0 0.0
      %1792 = vmatpush1.xpose.msra.mxu0 0.0
      %1793 = vmatprep.subr.mxu0 0.0
      %1794 = vmatpush1.xpose.msra.mxu0 0.0
      %1795 = vmatprep.subr.mxu0 0.0
      %1796 = vmatpush1.xpose.msra.mxu0 0.0
      %1797 = vmatprep.subr.mxu0 0.0
      %1798 = vmatpush1.xpose.msra.mxu0 0.0
      %1799 = vmatprep.subr.mxu0 0.0
      %1800 = vmatpush1.xpose.msra.mxu0 0.0
      %1801 = vmatprep.subr.mxu0 0.0
      %1802 = vmatpush1.xpose.msra.mxu0 0.0
      %1803 = vmatprep.subr.mxu0 0.0
      %1804 = vmatpush1.xpose.msra.mxu0 0.0
      %1805 = vmatprep.subr.mxu0 0.0
      %1806 = vmatpush1.xpose.msra.mxu0 0.0
      %1807 = vmatprep.subr.mxu0 0.0
      %1808 = vmatpush1.xpose.msra.mxu0 0.0
      %1809 = vmatprep.subr.mxu0 0.0
      %1810 = vmatpush1.xpose.msra.mxu0 0.0
      %1811 = vmatprep.subr.mxu0 0.0
      %1812 = vmatpush1.xpose.msra.mxu0 0.0
      %1813 = vmatprep.subr.mxu0 0.0
      %1814 = vmatpush1.xpose.msra.mxu0 0.0
      %1815 = vmatprep.subr.mxu0 0.0
      %1816 = vmatpush1.xpose.msra.mxu0 0.0
      %1817 = vmatprep.subr.mxu0 0.0
      %1818 = vmatpush1.xpose.msra.mxu0 0.0
      %1819 = vmatprep.subr.mxu0 0.0
      %1820 = vmatpush1.xpose.msra.mxu0 0.0
      %1821 = vmatprep.subr.mxu0 0.0
      %1822 = vmatpush1.xpose.msra.mxu0 0.0
      %1823 = vmatprep.subr.mxu0 0.0
      %1824 = vmatpush1.xpose.msra.mxu0 0.0
      %1825 = vmatprep.subr.mxu0 0.0
      %1826 = vmatpush1.xpose.msra.mxu0 0.0
      %1827 = vmatprep.subr.mxu0 0.0
      %1828 = vmatpush1.xpose.msra.mxu0 0.0
      %1829 = vmatprep.subr.mxu0 0.0
      %1830 = vmatpush1.xpose.msra.mxu0 0.0
      %1831 = vmatprep.subr.mxu0 0.0
      %1832 = vmatpush1.xpose.msra.mxu0 0.0
      %1833 = vmatprep.subr.mxu0 0.0
      %1834 = vmatpush1.xpose.msra.mxu0 0.0
      %1835 = vmatprep.subr.mxu0 0.0
      %1836 = vmatpush1.xpose.msra.mxu0 0.0
      %1837 = vmatprep.subr.mxu0 0.0
      %1838 = vmatpush1.xpose.msra.mxu0 0.0
      %1839 = vmatprep.subr.mxu0 0.0
      %1840 = vmatpush1.xpose.msra.mxu0 0.0
      %1841 = vmatprep.subr.mxu0 0.0
      %1842 = vmatpush1.xpose.msra.mxu0 0.0
      %1843 = vmatprep.subr.mxu0 0.0
      %1844 = vmatpush1.xpose.msra.mxu0 0.0
      %1845 = vmatprep.subr.mxu0 0.0
      %1846 = vmatpush1.xpose.msra.mxu0 0.0
      %1847 = vmatprep.subr.mxu0 0.0
      %1848 = vmatpush1.xpose.msra.mxu0 0.0
      %1849 = vmatprep.mubr.f32.mxu0 0.0
      %1850 = vmatmul.mubr.f32.gmra.mrb[0].mxu0 %v1781
      %v1851 = vpop.f32.mrb[0].mxu0
      %v1852 = vadd.f32 %v711, %v1851
      %v1853 = vpop.f32.mrb[0].mxu0
      %1854 = vdwg.mxu0
      %v1855 = vsel %vm791, %v1852, -inf
      %1856 = vmax.xlane.f32.xlu0 %v1855
      %v1857 = vpop.xlane.xlu0 %1856
      %v1858 = vsub.f32 %v1852, %v1857
      %v1859 = vmul.f32 %v1858, 1.442695
      %v1860 = vpow.pop %v1859
      %v1861 = vsel %vm791, %v1860, 0.0
      %1862 = vadd.xlane.f32.xlu0 %v1861
      %v1863 = vpop.xlane.xlu0 %1862
      %v1864 = vrcp.pop %v1863
      %v1865 = vmul.f32 %v1860, %v1864
      %1866 = vrot.lane.b32.xlu0 %v1523, 48
      %v1867 = vpop.permute.xlu0 %1866
      %v1870 = vsel %vm791, %v1865, 0
      %1872 = vmatprep.subr.mxu0 0.0
      %1873 = vmatpush1.msra.mxu0 %v1867
      %1874 = vmatprep.subr.mxu0 0.0
      %1875 = vmatpush1.msra.mxu0 0.0
      %1876 = vmatprep.subr.mxu0 0.0
      %1877 = vmatpush1.msra.mxu0 0.0
      %1878 = vmatprep.subr.mxu0 0.0
      %1879 = vmatpush1.msra.mxu0 0.0
      %1880 = vmatprep.subr.mxu0 0.0
      %1881 = vmatpush1.msra.mxu0 0.0
      %1882 = vmatprep.subr.mxu0 0.0
      %1883 = vmatpush1.msra.mxu0 0.0
      %1884 = vmatprep.subr.mxu0 0.0
      %1885 = vmatpush1.msra.mxu0 0.0
      %1886 = vmatprep.subr.mxu0 0.0
      %1887 = vmatpush1.msra.mxu0 0.0
      %1888 = vmatprep.subr.mxu0 0.0
      %1889 = vmatpush1.msra.mxu0 0.0
      %1890 = vmatprep.subr.mxu0 0.0
      %1891 = vmatpush1.msra.mxu0 0.0
      %1892 = vmatprep.subr.mxu0 0.0
      %1893 = vmatpush1.msra.mxu0 0.0
      %1894 = vmatprep.subr.mxu0 0.0
      %1895 = vmatpush1.msra.mxu0 0.0
      %1896 = vmatprep.subr.mxu0 0.0
      %1897 = vmatpush1.msra.mxu0 0.0
      %1898 = vmatprep.subr.mxu0 0.0
      %1899 = vmatpush1.msra.mxu0 0.0
      %1900 = vmatprep.subr.mxu0 0.0
      %1901 = vmatpush1.msra.mxu0 0.0
      %1902 = vmatprep.subr.mxu0 0.0
      %1903 = vmatpush1.msra.mxu0 0.0
      %1904 = vmatprep.subr.mxu0 0.0
      %1905 = vmatpush1.msra.mxu0 0.0
      %1906 = vmatprep.subr.mxu0 0.0
      %1907 = vmatpush1.msra.mxu0 0.0
      %1908 = vmatprep.subr.mxu0 0.0
      %1909 = vmatpush1.msra.mxu0 0.0
      %1910 = vmatprep.subr.mxu0 0.0
      %1911 = vmatpush1.msra.mxu0 0.0
      %1912 = vmatprep.subr.mxu0 0.0
      %1913 = vmatpush1.msra.mxu0 0.0
      %1914 = vmatprep.subr.mxu0 0.0
      %1915 = vmatpush1.msra.mxu0 0.0
      %1916 = vmatprep.subr.mxu0 0.0
      %1917 = vmatpush1.msra.mxu0 0.0
      %1918 = vmatprep.subr.mxu0 0.0
      %1919 = vmatpush1.msra.mxu0 0.0
      %1920 = vmatprep.subr.mxu0 0.0
      %1921 = vmatpush1.msra.mxu0 0.0
      %1922 = vmatprep.subr.mxu0 0.0
      %1923 = vmatpush1.msra.mxu0 0.0
      %1924 = vmatprep.subr.mxu0 0.0
      %1925 = vmatpush1.msra.mxu0 0.0
      %1926 = vmatprep.subr.mxu0 0.0
      %1927 = vmatpush1.msra.mxu0 0.0
      %1928 = vmatprep.subr.mxu0 0.0
      %1929 = vmatpush1.msra.mxu0 0.0
      %1930 = vmatprep.subr.mxu0 0.0
      %1931 = vmatpush1.msra.mxu0 0.0
      %1932 = vmatprep.subr.mxu0 0.0
      %1933 = vmatpush1.msra.mxu0 0.0
      %1934 = vmatprep.subr.mxu0 0.0
      %1935 = vmatpush1.msra.mxu0 0.0
      %1936 = vmatprep.mubr.f32.mxu0 0.0
      %1937 = vmatmul.mubr.f32.gmra.mrb[0].mxu0 %v1870
      %v1938 = vpop.f32.mrb[0].mxu0
      %v1939 = vadd.f32 0.0, %v1938
      %v1940 = vpop.f32.mrb[0].mxu0
      %1941 = vdwg.mxu0
      %v1943 = vsel %vm716, %v1939, 0
      %1945 = vmatprep.subr.mxu0 0.0
      %1946 = vmatpush1.msra.mxu0 %v1529
      %1947 = vmatprep.subr.mxu0 0.0
      %1948 = vmatpush1.msra.mxu0 %v1530
      %1949 = vmatprep.subr.mxu0 0.0
      %1950 = vmatpush1.msra.mxu0 0.0
      %1951 = vmatprep.subr.mxu0 0.0
      %1952 = vmatpush1.msra.mxu0 0.0
      %1953 = vmatprep.subr.mxu0 0.0
      %1954 = vmatpush1.msra.mxu0 0.0
      %1955 = vmatprep.subr.mxu0 0.0
      %1956 = vmatpush1.msra.mxu0 0.0
      %1957 = vmatprep.subr.mxu0 0.0
      %1958 = vmatpush1.msra.mxu0 0.0
      %1959 = vmatprep.subr.mxu0 0.0
      %1960 = vmatpush1.msra.mxu0 0.0
      %1961 = vmatprep.subr.mxu0 0.0
      %1962 = vmatpush1.msra.mxu0 0.0
      %1963 = vmatprep.subr.mxu0 0.0
      %1964 = vmatpush1.msra.mxu0 0.0
      %1965 = vmatprep.subr.mxu0 0.0
      %1966 = vmatpush1.msra.mxu0 0.0
      %1967 = vmatprep.subr.mxu0 0.0
      %1968 = vmatpush1.msra.mxu0 0.0
      %1969 = vmatprep.subr.mxu0 0.0
      %1970 = vmatpush1.msra.mxu0 0.0
      %1971 = vmatprep.subr.mxu0 0.0
      %1972 = vmatpush1.msra.mxu0 0.0
      %1973 = vmatprep.subr.mxu0 0.0
      %1974 = vmatpush1.msra.mxu0 0.0
      %1975 = vmatprep.subr.mxu0 0.0
      %1976 = vmatpush1.msra.mxu0 0.0
      %1977 = vmatprep.subr.mxu0 0.0
      %1978 = vmatpush1.msra.mxu0 0.0
      %1979 = vmatprep.subr.mxu0 0.0
      %1980 = vmatpush1.msra.mxu0 0.0
      %1981 = vmatprep.subr.mxu0 0.0
      %1982 = vmatpush1.msra.mxu0 0.0
      %1983 = vmatprep.subr.mxu0 0.0
      %1984 = vmatpush1.msra.mxu0 0.0
      %1985 = vmatprep.subr.mxu0 0.0
      %1986 = vmatpush1.msra.mxu0 0.0
      %1987 = vmatprep.subr.mxu0 0.0
      %1988 = vmatpush1.msra.mxu0 0.0
      %1989 = vmatprep.subr.mxu0 0.0
      %1990 = vmatpush1.msra.mxu0 0.0
      %1991 = vmatprep.subr.mxu0 0.0
      %1992 = vmatpush1.msra.mxu0 0.0
      %1993 = vmatprep.subr.mxu0 0.0
      %1994 = vmatpush1.msra.mxu0 0.0
      %1995 = vmatprep.subr.mxu0 0.0
      %1996 = vmatpush1.msra.mxu0 0.0
      %1997 = vmatprep.subr.mxu0 0.0
      %1998 = vmatpush1.msra.mxu0 0.0
      %1999 = vmatprep.subr.mxu0 0.0
      %2000 = vmatpush1.msra.mxu0 0.0
      %2001 = vmatprep.subr.mxu0 0.0
      %2002 = vmatpush1.msra.mxu0 0.0
      %2003 = vmatprep.subr.mxu0 0.0
      %2004 = vmatpush1.msra.mxu0 0.0
      %2005 = vmatprep.subr.mxu0 0.0
      %2006 = vmatpush1.msra.mxu0 0.0
      %2007 = vmatprep.subr.mxu0 0.0
      %2008 = vmatpush1.msra.mxu0 0.0
      %2009 = vmatprep.mubr.f32.mxu0 0.0
      %2010 = vmatmul.mubr.f32.gmra.mrb[0].mxu0 %v1943
      %v2011 = vpop.f32.mrb[0].mxu0
      %v2012 = vadd.f32 0.0, %v2011
      %v2013 = vpop.f32.mrb[0].mxu0
      %2014 = vdwg.mxu0
      %v2015 = vadd.f32 %v1776, %v2012
      %v2016 = vadd.f32 %v1439, %v2015
      %s2017 = scalar_lea.vmem %s8, 1
      %v2018 = vld [vmem:[%s2017] sm:$0x1]
      %s2019 = scalar_lea.vmem %s9, 1
      %v2020 = vld [vmem:[%s2019] sm:$0x1]
      %v2021 = vsel %vm589, %v2016, 0.0
      %2022 = vadd.xlane.f32.xlu0 %v2021
      %v2023 = vpop.xlane.xlu0 %2022
      %v2024 = vmul.f32 %v2023, %v593
      %v2025 = vsub.f32 %v2016, %v2024
      %v2026 = vmul.f32 %v2025, %v2025
      %v2027 = vsel %vm589, %v2026, 0.0
      %2028 = vadd.xlane.f32.xlu0 %v2027
      %v2029 = vpop.xlane.xlu0 %2028
      %v2030 = vmul.f32 %v2029, %v593
      %v2031 = vadd.f32 %v2030, 1e-12
      %v2032 = vrsqrt.pop %v2031
      %v2033 = vmul.f32 %v2025, %v2032
      %v2035 = vlaneseq
      %v2036 = vshrl.u32 %v2035, 7
      %v2037 = vsub.s32 0, %v2036
      %v2038 = vrot.slane %v2018, %v2037
      %v2040 = vmul.f32 %v2033, %v2038
      %v2042 = vlaneseq
      %v2043 = vshrl.u32 %v2042, 7
      %v2044 = vsub.s32 0, %v2043
      %v2045 = vrot.slane %v2020, %v2044
      %v2047 = vadd.f32 %v2040, %v2045
      %s2048 = scalar_lea.vmem %s10, 32
      %v2049 = vld [vmem:[%s2048] sm:$0xff]
      %v2050 = vld [vmem:[%s2048 + $0x8] sm:$0xff]
      %v2051 = vld [vmem:[%s2048 + $0x10] sm:$0xff]
      %v2052 = vld [vmem:[%s2048 + $0x18] sm:$0xff]
      %s2053 = scalar_lea.vmem %s11, 1
      %v2054 = vld [vmem:[%s2053] sm:$0x1]
      %v2056 = vlaneseq
      %v2057 = vshrl.u32 %v2056, 7
      %v2058 = vsub.s32 0, %v2057
      %v2059 = vrot.slane %v2054, %v2058
      %v2062 = vsel %vm589, %v2047, 0
      %2064 = vmatprep.subr.mxu0 0.0
      %2065 = vmatpush1.msra.mxu0 %v2049
      %2066 = vmatprep.subr.mxu0 0.0
      %2067 = vmatpush1.msra.mxu0 %v2050
      %2068 = vmatprep.subr.mxu0 0.0
      %2069 = vmatpush1.msra.mxu0 %v2051
      %2070 = vmatprep.subr.mxu0 0.0
      %2071 = vmatpush1.msra.mxu0 %v2052
      %2072 = vmatprep.subr.mxu0 0.0
      %2073 = vmatpush1.msra.mxu0 0.0
      %2074 = vmatprep.subr.mxu0 0.0
      %2075 = vmatpush1.msra.mxu0 0.0
      %2076 = vmatprep.subr.mxu0 0.0
      %2077 = vmatpush1.msra.mxu0 0.0
      %2078 = vmatprep.subr.mxu0 0.0
      %2079 = vmatpush1.msra.mxu0 0.0
      %2080 = vmatprep.subr.mxu0 0.0
      %2081 = vmatpush1.msra.mxu0 0.0
      %2082 = vmatprep.subr.mxu0 0.0
      %2083 = vmatpush1.msra.mxu0 0.0
      %2084 = vmatprep.subr.mxu0 0.0
      %2085 = vmatpush1.msra.mxu0 0.0
      %2086 = vmatprep.subr.mxu0 0.0
      %2087 = vmatpush1.msra.mxu0 0.0
      %2088 = vmatprep.subr.mxu0 0.0
      %2089 = vmatpush1.msra.mxu0 0.0
      %2090 = vmatprep.subr.mxu0 0.0
      %2091 = vmatpush1.msra.mxu0 0.0
      %2092 = vmatprep.subr.mxu0 0.0
      %2093 = vmatpush1.msra.mxu0 0.0
      %2094 = vmatprep.subr.mxu0 0.0
      %2095 = vmatpush1.msra.mxu0 0.0
      %2096 = vmatprep.subr.mxu0 0.0
      %2097 = vmatpush1.msra.mxu0 0.0
      %2098 = vmatprep.subr.mxu0 0.0
      %2099 = vmatpush1.msra.mxu0 0.0
      %2100 = vmatprep.subr.mxu0 0.0
      %2101 = vmatpush1.msra.mxu0 0.0
      %2102 = vmatprep.subr.mxu0 0.0
      %2103 = vmatpush1.msra.mxu0 0.0
      %2104 = vmatprep.subr.mxu0 0.0
      %2105 = vmatpush1.msra.mxu0 0.0
      %2106 = vmatprep.subr.mxu0 0.0
      %2107 = vmatpush1.msra.mxu0 0.0
      %2108 = vmatprep.subr.mxu0 0.0
      %2109 = vmatpush1.msra.mxu0 0.0
      %2110 = vmatprep.subr.mxu0 0.0
      %2111 = vmatpush1.msra.mxu0 0.0
      %2112 = vmatprep.subr.mxu0 0.0
      %2113 = vmatpush1.msra.mxu0 0.0
      %2114 = vmatprep.subr.mxu0 0.0
      %2115 = vmatpush1.msra.mxu0 0.0
      %2116 = vmatprep.subr.mxu0 0.0
      %2117 = vmatpush1.msra.mxu0 0.0
      %2118 = vmatprep.subr.mxu0 0.0
      %2119 = vmatpush1.msra.mxu0 0.0
      %2120 = vmatprep.subr.mxu0 0.0
      %2121 = vmatpush1.msra.mxu0 0.0
      %2122 = vmatprep.subr.mxu0 0.0
      %2123 = vmatpush1.msra.mxu0 0.0
      %2124 = vmatprep.subr.mxu0 0.0
      %2125 = vmatpush1.msra.mxu0 0.0
      %2126 = vmatprep.subr.mxu0 0.0
      %2127 = vmatpush1.msra.mxu0 0.0
      %2128 = vmatprep.mubr.f32.mxu0 0.0
      %2129 = vmatmul.mubr.f32.gmra.mrb[0].mxu0 %v2062
      %v2130 = vpop.f32.mrb[0].mxu0
      %v2131 = vadd.f32 %v2059, %v2130
      %v2132 = vpop.f32.mrb[0].mxu0
      %2133 = vdwg.mxu0
      %v2134 = vmul.f32 %v2131, %v2131
      %v2135 = vmul.f32 %v2131, %v2134
      %v2136 = vmul.f32 %v2135, 0.044715
      %v2137 = vadd.f32 %v2131, %v2136
      %v2138 = vmul.f32 %v2137, 0.7978846
      %v2139 = vtanh.pop %v2138
      %v2140 = vadd.f32 %v2139, 1.0
      %v2141 = vmul.f32 %v2140, 0.5
      %v2142 = vmul.f32 %v2131, %v2141
      %s2143 = scalar_lea.vmem %s12, 64
      %v2144 = vld [vmem:[%s2143] sm:$0xff]
      %v2145 = vld [vmem:[%s2143 + $0x8] sm:$0xff]
      %v2146 = vld [vmem:[%s2143 + $0x10] sm:$0xff]
      %v2147 = vld [vmem:[%s2143 + $0x18] sm:$0xff]
      %v2148 = vld [vmem:[%s2143 + $0x20] sm:$0xff]
      %v2149 = vld [vmem:[%s2143 + $0x28] sm:$0xff]
      %v2150 = vld [vmem:[%s2143 + $0x30] sm:$0xff]
      %v2151 = vld [vmem:[%s2143 + $0x38] sm:$0xff]
      %s2152 = scalar_lea.vmem %s13, 1
      %v2153 = vld [vmem:[%s2152] sm:$0x1]
      %v2155 = vlaneseq
      %v2156 = vshrl.u32 %v2155, 7
      %v2157 = vsub.s32 0, %v2156
      %v2158 = vrot.slane %v2153, %v2157
      %v2161 = vsel %vm1336, %v2142, 0
      %2163 = vmatprep.subr.mxu0 0.0
      %2164 = vmatpush1.msra.mxu0 %v2144
      %2165 = vmatprep.subr.mxu0 0.0
      %2166 = vmatpush1.msra.mxu0 %v2145
      %2167 = vmatprep.subr.mxu0 0.0
      %2168 = vmatpush1.msra.mxu0 %v2146
      %2169 = vmatprep.subr.mxu0 0.0
      %2170 = vmatpush1.msra.mxu0 %v2147
      %2171 = vmatprep.subr.mxu0 0.0
      %2172 = vmatpush1.msra.mxu0 %v2148
      %2173 = vmatprep.subr.mxu0 0.0
      %2174 = vmatpush1.msra.mxu0 %v2149
      %2175 = vmatprep.subr.mxu0 0.0
      %2176 = vmatpush1.msra.mxu0 %v2150
      %2177 = vmatprep.subr.mxu0 0.0
      %2178 = vmatpush1.msra.mxu0 %v2151
      %2179 = vmatprep.subr.mxu0 0.0
      %2180 = vmatpush1.msra.mxu0 0.0
      %2181 = vmatprep.subr.mxu0 0.0
      %2182 = vmatpush1.msra.mxu0 0.0
      %2183 = vmatprep.subr.mxu0 0.0
      %2184 = vmatpush1.msra.mxu0 0.0
      %2185 = vmatprep.subr.mxu0 0.0
      %2186 = vmatpush1.msra.mxu0 0.0
      %2187 = vmatprep.subr.mxu0 0.0
      %2188 = vmatpush1.msra.mxu0 0.0
      %2189 = vmatprep.subr.mxu0 0.0
      %2190 = vmatpush1.msra.mxu0 0.0
      %2191 = vmatprep.subr.mxu0 0.0
      %2192 = vmatpush1.msra.mxu0 0.0
      %2193 = vmatprep.subr.mxu0 0.0
      %2194 = vmatpush1.msra.mxu0 0.0
      %2195 = vmatprep.subr.mxu0 0.0
      %2196 = vmatpush1.msra.mxu0 0.0
      %2197 = vmatprep.subr.mxu0 0.0
      %2198 = vmatpush1.msra.mxu0 0.0
      %2199 = vmatprep.subr.mxu0 0.0
      %2200 = vmatpush1.msra.mxu0 0.0
      %2201 = vmatprep.subr.mxu0 0.0
      %2202 = vmatpush1.msra.mxu0 0.0
      %2203 = vmatprep.subr.mxu0 0.0
      %2204 = vmatpush1.msra.mxu0 0.0
      %2205 = vmatprep.subr.mxu0 0.0
      %2206 = vmatpush1.msra.mxu0 0.0
      %2207 = vmatprep.subr.mxu0 0.0
      %2208 = vmatpush1.msra.mxu0 0.0
      %2209 = vmatprep.subr.mxu0 0.0
      %2210 = vmatpush1.msra.mxu0 0.0
      %2211 = vmatprep.subr.mxu0 0.0
      %2212 = vmatpush1.msra.mxu0 0.0
      %2213 = vmatprep.subr.mxu0 0.0
      %2214 = vmatpush1.msra.mxu0 0.0
      %2215 = vmatprep.subr.mxu0 0.0
      %2216 = vmatpush1.msra.mxu0 0.0
      %2217 = vmatprep.subr.mxu0 0.0
      %2218 = vmatpush1.msra.mxu0 0.0
      %2219 = vmatprep.subr.mxu0 0.0
      %2220 = vmatpush1.msra.mxu0 0.0
      %2221 = vmatprep.subr.mxu0 0.0
      %2222 = vmatpush1.msra.mxu0 0.0
      %2223 = vmatprep.subr.mxu0 0.0
      %2224 = vmatpush1.msra.mxu0 0.0
      %2225 = vmatprep.subr.mxu0 0.0
      %2226 = vmatpush1.msra.mxu0 0.0
      %2227 = vmatprep.mubr.f32.mxu0 0.0
      %2228 = vmatmul.mubr.f32.gmra.mrb[0].mxu0 %v2161
      %v2229 = vpop.f32.mrb[0].mxu0
      %v2230 = vadd.f32 %v2158, %v2229
      %v2231 = vpop.f32.mrb[0].mxu0
      %2232 = vdwg.mxu0
      %v2233 = vadd.f32 %v2047, %v2230
      %s2234 = scalar_lea.vmem %s14, 1
      %v2235 = vld [vmem:[%s2234] sm:$0x1]
      %s2236 = scalar_lea.vmem %s15, 1
      %v2237 = vld [vmem:[%s2236] sm:$0x1]
      %v2238 = vsel %vm589, %v2233, 0.0
      %2239 = vadd.xlane.f32.xlu0 %v2238
      %v2240 = vpop.xlane.xlu0 %2239
      %v2241 = vmul.f32 %v2240, %v593
      %v2242 = vsub.f32 %v2233, %v2241
      %v2243 = vmul.f32 %v2242, %v2242
      %v2244 = vsel %vm589, %v2243, 0.0
      %2245 = vadd.xlane.f32.xlu0 %v2244
      %v2246 = vpop.xlane.xlu0 %2245
      %v2247 = vmul.f32 %v2246, %v593
      %v2248 = vadd.f32 %v2247, 1e-12
      %v2249 = vrsqrt.pop %v2248
      %v2250 = vmul.f32 %v2242, %v2249
      %v2252 = vlaneseq
      %v2253 = vshrl.u32 %v2252, 7
      %v2254 = vsub.s32 0, %v2253
      %v2255 = vrot.slane %v2235, %v2254
      %v2257 = vmul.f32 %v2250, %v2255
      %v2259 = vlaneseq
      %v2260 = vshrl.u32 %v2259, 7
      %v2261 = vsub.s32 0, %v2260
      %v2262 = vrot.slane %v2237, %v2261
      %v2264 = vadd.f32 %v2257, %v2262
      %v2265 = vld [vmem:[%s16] sm:$0xff]
      %v2266 = vld [vmem:[%s16 + $0x8] sm:$0xff]
      %v2267 = vld [vmem:[%s16 + $0x10] sm:$0xff]
      %v2268 = vld [vmem:[%s16 + $0x18] sm:$0xff]
      %v2269 = vld [vmem:[%s17] sm:$0x1]
      %v2271 = vsel %vm589, %v2264, 0
      %2273 = vmatprep.subr.mxu0 0.0
      %2274 = vmatpush1.msra.mxu0 %v2265
      %2275 = vmatprep.subr.mxu0 0.0
      %2276 = vmatpush1.msra.mxu0 %v2266
      %2277 = vmatprep.subr.mxu0 0.0
      %2278 = vmatpush1.msra.mxu0 %v2267
      %2279 = vmatprep.subr.mxu0 0.0
      %2280 = vmatpush1.msra.mxu0 %v2268
      %2281 = vmatprep.subr.mxu0 0.0
      %2282 = vmatpush1.msra.mxu0 0.0
      %2283 = vmatprep.subr.mxu0 0.0
      %2284 = vmatpush1.msra.mxu0 0.0
      %2285 = vmatprep.subr.mxu0 0.0
      %2286 = vmatpush1.msra.mxu0 0.0
      %2287 = vmatprep.subr.mxu0 0.0
      %2288 = vmatpush1.msra.mxu0 0.0
      %2289 = vmatprep.subr.mxu0 0.0
      %2290 = vmatpush1.msra.mxu0 0.0
      %2291 = vmatprep.subr.mxu0 0.0
      %2292 = vmatpush1.msra.mxu0 0.0
      %2293 = vmatprep.subr.mxu0 0.0
      %2294 = vmatpush1.msra.mxu0 0.0
      %2295 = vmatprep.subr.mxu0 0.0
      %2296 = vmatpush1.msra.mxu0 0.0
      %2297 = vmatprep.subr.mxu0 0.0
      %2298 = vmatpush1.msra.mxu0 0.0
      %2299 = vmatprep.subr.mxu0 0.0
      %2300 = vmatpush1.msra.mxu0 0.0
      %2301 = vmatprep.subr.mxu0 0.0
      %2302 = vmatpush1.msra.mxu0 0.0
      %2303 = vmatprep.subr.mxu0 0.0
      %2304 = vmatpush1.msra.mxu0 0.0
      %2305 = vmatprep.subr.mxu0 0.0
      %2306 = vmatpush1.msra.mxu0 0.0
      %2307 = vmatprep.subr.mxu0 0.0
      %2308 = vmatpush1.msra.mxu0 0.0
      %2309 = vmatprep.subr.mxu0 0.0
      %2310 = vmatpush1.msra.mxu0 0.0
      %2311 = vmatprep.subr.mxu0 0.0
      %2312 = vmatpush1.msra.mxu0 0.0
      %2313 = vmatprep.subr.mxu0 0.0
      %2314 = vmatpush1.msra.mxu0 0.0
      %2315 = vmatprep.subr.mxu0 0.0
      %2316 = vmatpush1.msra.mxu0 0.0
      %2317 = vmatprep.subr.mxu0 0.0
      %2318 = vmatpush1.msra.mxu0 0.0
      %2319 = vmatprep.subr.mxu0 0.0
      %2320 = vmatpush1.msra.mxu0 0.0
      %2321 = vmatprep.subr.mxu0 0.0
      %2322 = vmatpush1.msra.mxu0 0.0
      %2323 = vmatprep.subr.mxu0 0.0
      %2324 = vmatpush1.msra.mxu0 0.0
      %2325 = vmatprep.subr.mxu0 0.0
      %2326 = vmatpush1.msra.mxu0 0.0
      %2327 = vmatprep.subr.mxu0 0.0
      %2328 = vmatpush1.msra.mxu0 0.0
      %2329 = vmatprep.subr.mxu0 0.0
      %2330 = vmatpush1.msra.mxu0 0.0
      %2331 = vmatprep.subr.mxu0 0.0
      %2332 = vmatpush1.msra.mxu0 0.0
      %2333 = vmatprep.subr.mxu0 0.0
      %2334 = vmatpush1.msra.mxu0 0.0
      %2335 = vmatprep.subr.mxu0 0.0
      %2336 = vmatpush1.msra.mxu0 0.0
      %2337 = vmatprep.mubr.f32.mxu0 0.0
      %2338 = vmatmul.mubr.f32.gmra.mrb[0].mxu0 %v2271
      %v2339 = vpop.f32.mrb[0].mxu0
      %v2340 = vadd.f32 %v2269, %v2339
      %v2341 = vpop.f32.mrb[0].mxu0
      %2342 = vdwg.mxu0
      %v2343 = vlaneseq
      %v2344 = vshrl.u32 %v2343, 7
      %v2345 = vsub.s32 0, %v2344
      %v2346 = vrot.slane %v2340, %v2345
      %2347 = vst [vmem:[%s584] sm:$0xff] %v2346
      %p2348 = scmp.lt.s32.totalorder %s29, 1
      %s2349 = scalar_select %p2348, %s29, 1
      %s2350 = smul.addr %s2349, 8
      %s2351 = scalar_lea.vmem %s18, %s2350
      // Predicated region
      $region93: #{bert_classifier_forward.1} parent=91 // pred_check
        %p2352 = pneg %p435
      $region94: #{bert_classifier_forward.1} parent=91 // pred_check_branch
        %2354 = sbr.rel (%p2352) target = $region96
      $region95: #{bert_classifier_forward.1} parent=91 // pred_region
        _
      $region96: #{bert_classifier_forward.1} parent=91 // pred_fallthru
        _
    $region92: #{bert_classifier_forward.1} parent=5 // pred_fallthru
      _
    %p2355 = scmp.le.s32.totalorder 2, %s24
    // Predicated region
    $region97: #{bert_classifier_forward.1} parent=5 // pred_check
      %p2356 = pneg %p2355
    $region98: #{bert_classifier_forward.1} parent=5 // pred_check_branch
      %2358 = sbr.rel (%p2356) target = $region100
    $region99: #{bert_classifier_forward.1} parent=5 // pred_region
      %s2359 = ssub.s32 %s24, 2
      // Predicated region
      $region101: #{bert_classifier_forward.1} parent=99 // pred_check
        %p2360 = pneg %p441
      $region102: #{bert_classifier_forward.1} parent=99 // pred_check_branch
        %2362 = sbr.rel (%p2360) target = $region104
      $region103: #{bert_classifier_forward.1} parent=99 // pred_region
        %p2363 = scmp.lt.s32.totalorder %s30, 1
        %s2364 = scalar_select %p2363, %s30, 1
        %s2365 = smul.addr %s2364, 8
        %s2366 = scalar_lea.vmem %s18, %s2365
      $region104: #{bert_classifier_forward.1} parent=99 // pred_fallthru
        _
    $region100: #{bert_classifier_forward.1} parent=5 // pred_fallthru
      _
  $region6: #{bert_classifier_forward.1} parent=0 // loop_footer
    %s28 = sadd.s32 1, %s24
  $region7: #{bert_classifier_forward.1} parent=0 // loop_footer_branch
    %23 = sbr.rel target = $region3
  $region8: #{bert_classifier_forward.1} parent=0 // loop_exit
    _

</llo_original>
